<compile_context>
chip_gen: v7x
topology: tpu7x:2x2x1
jax: 0.10.0
libtpu: 0.0.40
codegen_flags: <defaults>
</compile_context>

<pallas_src>
import jax
import jax.numpy as jnp
from jax import lax
from jax.experimental import pallas as pl
from jax.experimental.pallas import tpu as pltpu  # noqa: F401  (kept for TPU-specific tuning hooks)

# ---- model config (small but vreg/lane friendly: HEAD_DIM = 128) ------------
HIDDEN = 256           # config.hidden_size
NUM_HEADS = 2          # config.num_attention_heads (tp world size = 1)
HEAD_DIM = HIDDEN // NUM_HEADS          # 128 -> lane-dense
MULTI_QUERY = True                      # config.multi_query
NUM_KV_HEADS = 1 if MULTI_QUERY else NUM_HEADS
KV_DIM = HEAD_DIM * NUM_KV_HEADS        # 128
QKV_DIM = HIDDEN + 2 * KV_DIM           # 512
SEQ = 256
SCALE = HEAD_DIM ** (-0.5)


def fused_attn_kernel(x_ref, wq_ref, bq_ref, wk_ref, bk_ref, wv_ref, bv_ref,
                      wp_ref, bp_ref, o_ref):
    """c_attn (Q,K,V) -> causal MQA -> c_proj, fully fused in VMEM."""
    s_tok = x_ref.shape[0]
    x = x_ref[...]                                              # [S, H] bf16

    # --- KV projection (single shared MQA head), f32 accumulation ------------
    k = (jnp.dot(x, wk_ref[...], preferred_element_type=jnp.float32)
         + bk_ref[...]).astype(jnp.bfloat16)                    # [S, HD]
    v = (jnp.dot(x, wv_ref[...], preferred_element_type=jnp.float32)
         + bv_ref[...]).astype(jnp.bfloat16)                    # [S, HD]

    # Causal mask built ONCE, reused for every head (no per-head duplication).
    qi = lax.broadcasted_iota(jnp.int32, (s_tok, s_tok), 0)
    kj = lax.broadcasted_iota(jnp.int32, (s_tok, s_tok), 1)
    causal = qi >= kj                                           # [S, S] bool

    # Per-head attention, unrolled (NUM_HEADS = 2).  Output projection is
    # accumulated per head via the matching row-block of Wproj, so the context
    # never has to be concatenated back onto the lane axis.
    out = None
    for h in range(NUM_HEADS):
        lo, hi = h * HEAD_DIM, (h + 1) * HEAD_DIM

        # Q projection for this head; fold softmax scale in before bf16 cast.
        q = jnp.dot(x, wq_ref[:, lo:hi], preferred_element_type=jnp.float32)
        q = ((q + bq_ref[:, lo:hi]) * SCALE).astype(jnp.bfloat16)   # [S, HD]

        # QK^T: contract trailing dims (no k.T materialized).
        s = lax.dot_general(q, k, (((1,), (1,)), ((), ())),
                            preferred_element_type=jnp.float32)     # [S, S]
        s = jnp.where(causal, s, -1e30)   # finite -> NaN-safe exp below

        # Softmax (EUP approx reciprocal for the denominator).
        m = jnp.max(s, axis=-1, keepdims=True)
        p = jnp.exp(s - m)
        denom = jnp.sum(p, axis=-1, keepdims=True)
        p = p * pl.reciprocal(denom, approx=True)

        # P@V, then this head's row-block of c_proj, accumulated in f32.
        ctx = jnp.dot(p.astype(jnp.bfloat16), v,
                      preferred_element_type=jnp.float32)           # [S, HD]
        contrib = jnp.dot(ctx.astype(jnp.bfloat16), wp_ref[lo:hi, :],
                          preferred_element_type=jnp.float32)       # [S, H]
        out = contrib if out is None else out + contrib

    o_ref[...] = (out + bp_ref[...]).astype(o_ref.dtype)


def gpt_bigcode_attention(hidden_states, w_qkv, b_qkv, w_proj, b_proj):
    seq, hidden = hidden_states.shape
    assert hidden == HIDDEN

    x_bf = hidden_states.astype(jnp.bfloat16)

    # Host-side split of the fused c_attn parameters (mirrors qkv.split) so
    # every kernel operand is lane-aligned at offset 0; bf16 for the MXU.
    wq = w_qkv[:, :HIDDEN].astype(jnp.bfloat16)
    wk = w_qkv[:, HIDDEN:HIDDEN + KV_DIM].astype(jnp.bfloat16)
    wv = w_qkv[:, HIDDEN + KV_DIM:].astype(jnp.bfloat16)
    bq = b_qkv[:, :HIDDEN]
    bk = b_qkv[:, HIDDEN:HIDDEN + KV_DIM]
    bv = b_qkv[:, HIDDEN + KV_DIM:]
    wp = w_proj.astype(jnp.bfloat16)

    # Single fused launch: everything (x, weights, K/V, scores) lives in VMEM.
    out = pl.pallas_call(
        fused_attn_kernel,
        out_shape=jax.ShapeDtypeStruct((seq, HIDDEN), jnp.float32),
        grid=(1,),
        in_specs=[
            pl.BlockSpec((seq, HIDDEN), lambda i: (0, 0)),      # x
            pl.BlockSpec((HIDDEN, HIDDEN), lambda i: (0, 0)),   # Wq
            pl.BlockSpec((1, HIDDEN), lambda i: (0, 0)),        # bq
            pl.BlockSpec((HIDDEN, KV_DIM), lambda i: (0, 0)),   # Wk
            pl.BlockSpec((1, KV_DIM), lambda i: (0, 0)),        # bk
            pl.BlockSpec((HIDDEN, KV_DIM), lambda i: (0, 0)),   # Wv
            pl.BlockSpec((1, KV_DIM), lambda i: (0, 0)),        # bv
            pl.BlockSpec((HIDDEN, HIDDEN), lambda i: (0, 0)),   # Wproj
            pl.BlockSpec((1, HIDDEN), lambda i: (0, 0)),        # bproj
        ],
        out_specs=pl.BlockSpec((seq, HIDDEN), lambda i: (0, 0)),
    )(x_bf, wq, bq, wk, bk, wv, bv, wp, b_proj)
    return out


def reference(x, w_qkv, b_qkv, w_proj, b_proj):
    qkv = x @ w_qkv + b_qkv
    q = qkv[:, :HIDDEN].reshape(SEQ, NUM_HEADS, HEAD_DIM)
    k = qkv[:, HIDDEN:HIDDEN + KV_DIM]
    v = qkv[:, HIDDEN + KV_DIM:]
    s = jnp.einsum("qhd,kd->hqk", q, k) * SCALE
    mask = jnp.tril(jnp.ones((SEQ, SEQ), bool))
    s = jnp.where(mask[None], s, -jnp.inf)
    p = jax.nn.softmax(s, axis=-1)
    ctx = jnp.einsum("hqk,kd->qhd", p, v).reshape(SEQ, HIDDEN)
    return ctx @ w_proj + b_proj


if __name__ == "__main__":
    key = jax.random.PRNGKey(0)
    kx, k1, k2, k3, k4 = jax.random.split(key, 5)
    x = jax.random.normal(kx, (SEQ, HIDDEN), jnp.float32)
    # Deterministic synthetic parameters (shapes from QKVParallelLinear /
    # RowParallelLinear with bias=True).
    w_qkv = jax.random.normal(k1, (HIDDEN, QKV_DIM), jnp.float32) * 0.05
    b_qkv = jax.random.normal(k2, (1, QKV_DIM), jnp.float32) * 0.05
    w_proj = jax.random.normal(k3, (HIDDEN, HIDDEN), jnp.float32) * 0.05
    b_proj = jax.random.normal(k4, (1, HIDDEN), jnp.float32) * 0.05

    out = gpt_bigcode_attention(x, w_qkv, b_qkv, w_proj, b_proj)
    jax.block_until_ready(out)

    ref = reference(x, w_qkv, b_qkv, w_proj, b_proj)
    # bf16 MXU path + approx reciprocal -> relaxed tolerance vs f32 reference.
    assert jnp.allclose(out, ref, atol=5e-2, rtol=5e-2), "mismatch vs reference"
    print("KERNEL_OK")
</pallas_src>

<mosaic_0001>
module attributes {stable_mosaic.version = 11 : i64} {
  func.func @fused_attn_kernel(%arg0: i32, %arg1: memref<256x256xbf16, #tpu.memory_space<vmem>>, %arg2: memref<256x256xbf16, #tpu.memory_space<vmem>>, %arg3: memref<1x256xf32, #tpu.memory_space<vmem>>, %arg4: memref<256x128xbf16, #tpu.memory_space<vmem>>, %arg5: memref<1x128xf32, #tpu.memory_space<vmem>>, %arg6: memref<256x128xbf16, #tpu.memory_space<vmem>>, %arg7: memref<1x128xf32, #tpu.memory_space<vmem>>, %arg8: memref<256x256xbf16, #tpu.memory_space<vmem>>, %arg9: memref<1x256xf32, #tpu.memory_space<vmem>>, %arg10: memref<256x256xf32, #tpu.memory_space<vmem>>) attributes {dimension_semantics = [#tpu.dimension_semantics<arbitrary>], iteration_bounds = array<i64: 1>, scalar_prefetch = 0 : i64, scratch_operands = 0 : i64, tpu.core_type = #tpu.core_type<tc>, window_params = [{pipeline_mode = #tpu.pipeline_mode<synchronous>, transform_indices = @transform_0, window_bounds = array<i64: 256, 256>}, {pipeline_mode = #tpu.pipeline_mode<synchronous>, transform_indices = @transform_1, window_bounds = array<i64: 256, 256>}, {pipeline_mode = #tpu.pipeline_mode<synchronous>, transform_indices = @transform_2, window_bounds = array<i64: 1, 256>}, {pipeline_mode = #tpu.pipeline_mode<synchronous>, transform_indices = @transform_3, window_bounds = array<i64: 256, 128>}, {pipeline_mode = #tpu.pipeline_mode<synchronous>, transform_indices = @transform_4, window_bounds = array<i64: 1, 128>}, {pipeline_mode = #tpu.pipeline_mode<synchronous>, transform_indices = @transform_5, window_bounds = array<i64: 256, 128>}, {pipeline_mode = #tpu.pipeline_mode<synchronous>, transform_indices = @transform_6, window_bounds = array<i64: 1, 128>}, {pipeline_mode = #tpu.pipeline_mode<synchronous>, transform_indices = @transform_7, window_bounds = array<i64: 256, 256>}, {pipeline_mode = #tpu.pipeline_mode<synchronous>, transform_indices = @transform_8, window_bounds = array<i64: 1, 256>}, {pipeline_mode = #tpu.pipeline_mode<synchronous>, transform_indices = @transform_9, window_bounds = array<i64: 256, 256>}]} {
    %c0 = arith.constant 0 : index
    %c0_0 = arith.constant 0 : index
    %0 = vector.load %arg1[%c0, %c0_0] : memref<256x256xbf16, #tpu.memory_space<vmem>>, vector<256x256xbf16>
    %c0_1 = arith.constant 0 : index
    %c0_2 = arith.constant 0 : index
    %1 = vector.load %arg4[%c0_1, %c0_2] : memref<256x128xbf16, #tpu.memory_space<vmem>>, vector<256x128xbf16>
    %cst = arith.constant dense<0.000000e+00> : vector<256x128xf32>
    %2 = tpu.matmul %0, %1, %cst {dimension_numbers = #tpu.dot_dimension_numbers<[1], [0], [0], [1], [0, 0, 1, 1], [], []>} : vector<256x256xbf16>, vector<256x128xbf16>, vector<256x128xf32> -> vector<256x128xf32>
    %c0_3 = arith.constant 0 : index
    %c0_4 = arith.constant 0 : index
    %3 = vector.load %arg5[%c0_3, %c0_4] : memref<1x128xf32, #tpu.memory_space<vmem>>, vector<1x128xf32>
    %4 = vector.broadcast %3 : vector<1x128xf32> to vector<256x128xf32>
    %5 = arith.addf %2, %4 : vector<256x128xf32>
    %6 = arith.truncf %5 : vector<256x128xf32> to vector<256x128xbf16>
    %c0_5 = arith.constant 0 : index
    %c0_6 = arith.constant 0 : index
    %7 = vector.load %arg6[%c0_5, %c0_6] : memref<256x128xbf16, #tpu.memory_space<vmem>>, vector<256x128xbf16>
    %cst_7 = arith.constant dense<0.000000e+00> : vector<256x128xf32>
    %8 = tpu.matmul %0, %7, %cst_7 {dimension_numbers = #tpu.dot_dimension_numbers<[1], [0], [0], [1], [0, 0, 1, 1], [], []>} : vector<256x256xbf16>, vector<256x128xbf16>, vector<256x128xf32> -> vector<256x128xf32>
    %c0_8 = arith.constant 0 : index
    %c0_9 = arith.constant 0 : index
    %9 = vector.load %arg7[%c0_8, %c0_9] : memref<1x128xf32, #tpu.memory_space<vmem>>, vector<1x128xf32>
    %10 = vector.broadcast %9 : vector<1x128xf32> to vector<256x128xf32>
    %11 = arith.addf %8, %10 : vector<256x128xf32>
    %12 = arith.truncf %11 : vector<256x128xf32> to vector<256x128xbf16>
    %13 = tpu.iota {dimensions = array<i32: 0>} : vector<256x256xi32>
    %14 = tpu.iota {dimensions = array<i32: 1>} : vector<256x256xi32>
    %15 = arith.cmpi sge, %13, %14 : vector<256x256xi32>
    %c0_10 = arith.constant 0 : index
    %c0_11 = arith.constant 0 : index
    %16 = vector.load %arg2[%c0_10, %c0_11] : memref<256x256xbf16, #tpu.memory_space<vmem>>, vector<256x128xbf16>
    %cst_12 = arith.constant dense<0.000000e+00> : vector<256x128xf32>
    %17 = tpu.matmul %0, %16, %cst_12 {dimension_numbers = #tpu.dot_dimension_numbers<[1], [0], [0], [1], [0, 0, 1, 1], [], []>} : vector<256x256xbf16>, vector<256x128xbf16>, vector<256x128xf32> -> vector<256x128xf32>
    %c0_13 = arith.constant 0 : index
    %c0_14 = arith.constant 0 : index
    %18 = vector.load %arg3[%c0_13, %c0_14] : memref<1x256xf32, #tpu.memory_space<vmem>>, vector<1x128xf32>
    %19 = vector.broadcast %18 : vector<1x128xf32> to vector<256x128xf32>
    %20 = arith.addf %17, %19 : vector<256x128xf32>
    %cst_15 = arith.constant 0.0883883461 : f32
    %21 = vector.broadcast %cst_15 : f32 to vector<256x128xf32>
    %22 = arith.mulf %20, %21 : vector<256x128xf32>
    %23 = arith.truncf %22 : vector<256x128xf32> to vector<256x128xbf16>
    %cst_16 = arith.constant dense<0.000000e+00> : vector<256x256xf32>
    %24 = tpu.matmul %23, %6, %cst_16 {dimension_numbers = #tpu.dot_dimension_numbers<[1], [1], [0], [0], [0, 0, 1, 0], [], []>} : vector<256x128xbf16>, vector<256x128xbf16>, vector<256x256xf32> -> vector<256x256xf32>
    %cst_17 = arith.constant -1.000000e+30 : f32
    %25 = vector.broadcast %cst_17 : f32 to vector<256x256xf32>
    %26 = arith.select %15, %24, %25 : vector<256x256xi1>, vector<256x256xf32>
    %cst_18 = arith.constant dense<0xFF800000> : vector<256xf32>
    %27 = vector.multi_reduction <maximumf>, %26, %cst_18 [1] : vector<256x256xf32> to vector<256xf32>
    %28 = vector.shape_cast %27 : vector<256xf32> to vector<256x1xf32>
    %29 = vector.broadcast %28 : vector<256x1xf32> to vector<256x256xf32>
    %30 = arith.subf %26, %29 : vector<256x256xf32>
    %31 = math.exp %30 : vector<256x256xf32>
    %cst_19 = arith.constant dense<0.000000e+00> : vector<256xf32>
    %32 = vector.multi_reduction <add>, %31, %cst_19 [1] : vector<256x256xf32> to vector<256xf32>
    %33 = vector.shape_cast %32 : vector<256xf32> to vector<256x1xf32>
    %34 = tpu.reciprocal %33 {approx = true} : vector<256x1xf32> -> vector<256x1xf32>
    %35 = vector.broadcast %34 : vector<256x1xf32> to vector<256x256xf32>
    %36 = arith.mulf %31, %35 : vector<256x256xf32>
    %37 = arith.truncf %36 : vector<256x256xf32> to vector<256x256xbf16>
    %cst_20 = arith.constant dense<0.000000e+00> : vector<256x128xf32>
    %38 = tpu.matmul %37, %12, %cst_20 {dimension_numbers = #tpu.dot_dimension_numbers<[1], [0], [0], [1], [0, 0, 1, 1], [], []>} : vector<256x256xbf16>, vector<256x128xbf16>, vector<256x128xf32> -> vector<256x128xf32>
    %39 = arith.truncf %38 : vector<256x128xf32> to vector<256x128xbf16>
    %c0_21 = arith.constant 0 : index
    %c0_22 = arith.constant 0 : index
    %40 = vector.load %arg8[%c0_21, %c0_22] : memref<256x256xbf16, #tpu.memory_space<vmem>>, vector<128x256xbf16>
    %cst_23 = arith.constant dense<0.000000e+00> : vector<256x256xf32>
    %41 = tpu.matmul %39, %40, %cst_23 {dimension_numbers = #tpu.dot_dimension_numbers<[1], [0], [0], [1], [0, 0, 1, 1], [], []>} : vector<256x128xbf16>, vector<128x256xbf16>, vector<256x256xf32> -> vector<256x256xf32>
    %c0_24 = arith.constant 0 : index
    %c128 = arith.constant 128 : index
    %42 = vector.load %arg2[%c0_24, %c128] : memref<256x256xbf16, #tpu.memory_space<vmem>>, vector<256x128xbf16>
    %cst_25 = arith.constant dense<0.000000e+00> : vector<256x128xf32>
    %43 = tpu.matmul %0, %42, %cst_25 {dimension_numbers = #tpu.dot_dimension_numbers<[1], [0], [0], [1], [0, 0, 1, 1], [], []>} : vector<256x256xbf16>, vector<256x128xbf16>, vector<256x128xf32> -> vector<256x128xf32>
    %c0_26 = arith.constant 0 : index
    %c128_27 = arith.constant 128 : index
    %44 = vector.load %arg3[%c0_26, %c128_27] : memref<1x256xf32, #tpu.memory_space<vmem>>, vector<1x128xf32>
    %45 = vector.broadcast %44 : vector<1x128xf32> to vector<256x128xf32>
    %46 = arith.addf %43, %45 : vector<256x128xf32>
    %cst_28 = arith.constant 0.0883883461 : f32
    %47 = vector.broadcast %cst_28 : f32 to vector<256x128xf32>
    %48 = arith.mulf %46, %47 : vector<256x128xf32>
    %49 = arith.truncf %48 : vector<256x128xf32> to vector<256x128xbf16>
    %cst_29 = arith.constant dense<0.000000e+00> : vector<256x256xf32>
    %50 = tpu.matmul %49, %6, %cst_29 {dimension_numbers = #tpu.dot_dimension_numbers<[1], [1], [0], [0], [0, 0, 1, 0], [], []>} : vector<256x128xbf16>, vector<256x128xbf16>, vector<256x256xf32> -> vector<256x256xf32>
    %cst_30 = arith.constant -1.000000e+30 : f32
    %51 = vector.broadcast %cst_30 : f32 to vector<256x256xf32>
    %52 = arith.select %15, %50, %51 : vector<256x256xi1>, vector<256x256xf32>
    %cst_31 = arith.constant dense<0xFF800000> : vector<256xf32>
    %53 = vector.multi_reduction <maximumf>, %52, %cst_31 [1] : vector<256x256xf32> to vector<256xf32>
    %54 = vector.shape_cast %53 : vector<256xf32> to vector<256x1xf32>
    %55 = vector.broadcast %54 : vector<256x1xf32> to vector<256x256xf32>
    %56 = arith.subf %52, %55 : vector<256x256xf32>
    %57 = math.exp %56 : vector<256x256xf32>
    %cst_32 = arith.constant dense<0.000000e+00> : vector<256xf32>
    %58 = vector.multi_reduction <add>, %57, %cst_32 [1] : vector<256x256xf32> to vector<256xf32>
    %59 = vector.shape_cast %58 : vector<256xf32> to vector<256x1xf32>
    %60 = tpu.reciprocal %59 {approx = true} : vector<256x1xf32> -> vector<256x1xf32>
    %61 = vector.broadcast %60 : vector<256x1xf32> to vector<256x256xf32>
    %62 = arith.mulf %57, %61 : vector<256x256xf32>
    %63 = arith.truncf %62 : vector<256x256xf32> to vector<256x256xbf16>
    %cst_33 = arith.constant dense<0.000000e+00> : vector<256x128xf32>
    %64 = tpu.matmul %63, %12, %cst_33 {dimension_numbers = #tpu.dot_dimension_numbers<[1], [0], [0], [1], [0, 0, 1, 1], [], []>} : vector<256x256xbf16>, vector<256x128xbf16>, vector<256x128xf32> -> vector<256x128xf32>
    %65 = arith.truncf %64 : vector<256x128xf32> to vector<256x128xbf16>
    %c128_34 = arith.constant 128 : index
    %c0_35 = arith.constant 0 : index
    %66 = vector.load %arg8[%c128_34, %c0_35] : memref<256x256xbf16, #tpu.memory_space<vmem>>, vector<128x256xbf16>
    %cst_36 = arith.constant dense<0.000000e+00> : vector<256x256xf32>
    %67 = tpu.matmul %65, %66, %cst_36 {dimension_numbers = #tpu.dot_dimension_numbers<[1], [0], [0], [1], [0, 0, 1, 1], [], []>} : vector<256x128xbf16>, vector<128x256xbf16>, vector<256x256xf32> -> vector<256x256xf32>
    %68 = arith.addf %41, %67 : vector<256x256xf32>
    %c0_37 = arith.constant 0 : index
    %c0_38 = arith.constant 0 : index
    %69 = vector.load %arg9[%c0_37, %c0_38] : memref<1x256xf32, #tpu.memory_space<vmem>>, vector<1x256xf32>
    %70 = vector.broadcast %69 : vector<1x256xf32> to vector<256x256xf32>
    %71 = arith.addf %68, %70 : vector<256x256xf32>
    %c0_39 = arith.constant 0 : index
    %c0_40 = arith.constant 0 : index
    %72 = vector.load %arg10[%c0_39, %c0_40] : memref<256x256xf32, #tpu.memory_space<vmem>>, vector<256x256xf32>
    tpu.vector_store %arg10[%c0_39, %c0_40], %71 {strides = array<i32>} : memref<256x256xf32, #tpu.memory_space<vmem>>, vector<256x256xf32>,
    return
  }
  func.func @transform_0(%arg0: i32) -> (i32, i32) {
    %c0_i32 = arith.constant 0 : i32
    %c0_i32_0 = arith.constant 0 : i32
    %c0_i32_1 = arith.constant 0 : i32
    return %c0_i32, %c0_i32_0 : i32, i32
  }
  func.func @transform_1(%arg0: i32) -> (i32, i32) {
    %c0_i32 = arith.constant 0 : i32
    %c0_i32_0 = arith.constant 0 : i32
    %c0_i32_1 = arith.constant 0 : i32
    return %c0_i32, %c0_i32_0 : i32, i32
  }
  func.func @transform_2(%arg0: i32) -> (i32, i32) {
    %c0_i32 = arith.constant 0 : i32
    %c0_i32_0 = arith.constant 0 : i32
    %c0_i32_1 = arith.constant 0 : i32
    return %c0_i32, %c0_i32_0 : i32, i32
  }
  func.func @transform_3(%arg0: i32) -> (i32, i32) {
    %c0_i32 = arith.constant 0 : i32
    %c0_i32_0 = arith.constant 0 : i32
    %c0_i32_1 = arith.constant 0 : i32
    return %c0_i32, %c0_i32_0 : i32, i32
  }
  func.func @transform_4(%arg0: i32) -> (i32, i32) {
    %c0_i32 = arith.constant 0 : i32
    %c0_i32_0 = arith.constant 0 : i32
    %c0_i32_1 = arith.constant 0 : i32
    return %c0_i32, %c0_i32_0 : i32, i32
  }
  func.func @transform_5(%arg0: i32) -> (i32, i32) {
    %c0_i32 = arith.constant 0 : i32
    %c0_i32_0 = arith.constant 0 : i32
    %c0_i32_1 = arith.constant 0 : i32
    return %c0_i32, %c0_i32_0 : i32, i32
  }
  func.func @transform_6(%arg0: i32) -> (i32, i32) {
    %c0_i32 = arith.constant 0 : i32
    %c0_i32_0 = arith.constant 0 : i32
    %c0_i32_1 = arith.constant 0 : i32
    return %c0_i32, %c0_i32_0 : i32, i32
  }
  func.func @transform_7(%arg0: i32) -> (i32, i32) {
    %c0_i32 = arith.constant 0 : i32
    %c0_i32_0 = arith.constant 0 : i32
    %c0_i32_1 = arith.constant 0 : i32
    return %c0_i32, %c0_i32_0 : i32, i32
  }
  func.func @transform_8(%arg0: i32) -> (i32, i32) {
    %c0_i32 = arith.constant 0 : i32
    %c0_i32_0 = arith.constant 0 : i32
    %c0_i32_1 = arith.constant 0 : i32
    return %c0_i32, %c0_i32_0 : i32, i32
  }
  func.func @transform_9(%arg0: i32) -> (i32, i32) {
    %c0_i32 = arith.constant 0 : i32
    %c0_i32_0 = arith.constant 0 : i32
    %c0_i32_1 = arith.constant 0 : i32
    return %c0_i32, %c0_i32_0 : i32, i32
  }
}

</mosaic_0001>

<llo_original>
// kernel: tpu_custom_call.1
$region0: #{tpu_custom_call.1}
  #allocation0 [shape = 'u32[]', space=smem, size = 0x4, offset = 0x4, fixed_abs, tag = 'smem constant byte address 0x4 - core index']
  #allocation1 [shape = 'u32[144,128]{1,0:T(1,128)}', space=vmem, size = 0x12000, scoped, tag = 'internal scratch']
  %s0 = inlined_call_operand.hbm [shape: bf16[256,256], index: 0, kind: input, shape index: {}]
  %s1 = inlined_call_operand.hbm [shape: bf16[256,256], index: 1, kind: input, shape index: {}]
  %s2 = inlined_call_operand.vmem [shape: f32[1,256], index: 2, kind: input, shape index: {}]
  %s3 = inlined_call_operand.hbm [shape: bf16[256,128], index: 3, kind: input, shape index: {}]
  %s4 = inlined_call_operand.vmem [shape: f32[1,128], index: 4, kind: input, shape index: {}]
  %s5 = inlined_call_operand.hbm [shape: bf16[256,128], index: 5, kind: input, shape index: {}]
  %s6 = inlined_call_operand.vmem [shape: f32[1,128], index: 6, kind: input, shape index: {}]
  %s7 = inlined_call_operand.hbm [shape: bf16[256,256], index: 7, kind: input, shape index: {}]
  %s8 = inlined_call_operand.vmem [shape: f32[1,256], index: 8, kind: input, shape index: {}]
  %s9 = inlined_call_operand.hbm [shape: f32[256,256], index: 9, kind: output, shape index: {}]
  %s10 = sld [smem:[#allocation0]]
  $region66: #{tpu_custom_call.1} parent=0
    _
  %s12 = ssub.s32 1, %s10
  %s13 = scalar_select 0, %s12, %s10
  $region1: #{tpu_custom_call.1} parent=0
    #allocation2 [shape = 'u8[131072]{0}', space=vmem, size = 0x20000, scoped, tag = 'input window, operand 0, single buffered']
    #allocation3 [shape = 's32[1]{0}', space=sflag, size = 0x4, scoped, tag = 'scoped memory for tpu_custom_call.1']
    #allocation4 [shape = 's32[1]{0}', space=sflag, size = 0x4, scoped, tag = 'scoped memory for tpu_custom_call.1']
    #allocation5 [shape = 'u8[131072]{0}', space=vmem, size = 0x20000, scoped, tag = 'input window, operand 1, single buffered']
    #allocation6 [shape = 's32[1]{0}', space=sflag, size = 0x4, scoped, tag = 'scoped memory for tpu_custom_call.1']
    #allocation7 [shape = 'u8[65536]{0}', space=vmem, size = 0x10000, scoped, tag = 'input window, operand 3, single buffered']
    #allocation8 [shape = 'u8[65536]{0}', space=vmem, size = 0x10000, scoped, tag = 'input window, operand 5, single buffered']
    #allocation9 [shape = 's32[1]{0}', space=sflag, size = 0x4, scoped, tag = 'scoped memory for tpu_custom_call.1']
    #allocation10 [shape = 'u8[131072]{0}', space=vmem, size = 0x20000, scoped, tag = 'input window, operand 7, single buffered']
    #allocation11 [shape = 'u8[262144]{0}', space=vmem, size = 0x40000, scoped, tag = 'output window, operand 0, single buffered']
    %14 = vsyncpa [#allocation3], 0
    %15 = vsyncpa [#allocation6], 0
    %16 = vsyncpa [#allocation9], 0
    %17 = vsyncpa [#allocation4], 0
    // Predicated region
    $region2: #{tpu_custom_call.1} parent=1 // pred_check
      _
    $region3: #{tpu_custom_call.1} parent=1 // pred_check_branch
      %19 = sbr.rel (0) target = $region5
    $region4: #{tpu_custom_call.1} parent=1 // pred_region
      %s21 = ssub.s32 4096, 4096
      %22 = vsyncadd [#allocation3], %s21
      %s23 = sshll.u32 [#allocation2], 4
      %s24 = int_to_ptr.vmem [resolvable:$true] %s23
      %29 = dma.hbm_to_vmem [thread:$0]  %s0, 4096, %s24, [#allocation3], 128, 128, 8
    $region5: #{tpu_custom_call.1} parent=1 // pred_fallthru
      _
    // Predicated region
    $region6: #{tpu_custom_call.1} parent=1 // pred_check
      _
    $region7: #{tpu_custom_call.1} parent=1 // pred_check_branch
      %31 = sbr.rel (0) target = $region9
    $region8: #{tpu_custom_call.1} parent=1 // pred_region
      %s33 = ssub.s32 4096, 4096
      %34 = vsyncadd [#allocation6], %s33
      %s35 = sshll.u32 [#allocation5], 4
      %s36 = int_to_ptr.vmem [resolvable:$true] %s35
      %41 = dma.hbm_to_vmem [thread:$0]  %s1, 4096, %s36, [#allocation6], 128, 128, 8
    $region9: #{tpu_custom_call.1} parent=1 // pred_fallthru
      _
    // Predicated region
    $region10: #{tpu_custom_call.1} parent=1 // pred_check
      _
    $region11: #{tpu_custom_call.1} parent=1 // pred_check_branch
      %43 = sbr.rel (0) target = $region13
    $region12: #{tpu_custom_call.1} parent=1 // pred_region
      _
    $region13: #{tpu_custom_call.1} parent=1 // pred_fallthru
      _
    // Predicated region
    $region14: #{tpu_custom_call.1} parent=1 // pred_check
      _
    $region15: #{tpu_custom_call.1} parent=1 // pred_check_branch
      %45 = sbr.rel (0) target = $region17
    $region16: #{tpu_custom_call.1} parent=1 // pred_region
      %s47 = ssub.s32 2048, 2048
      %48 = vsyncadd [#allocation6], %s47
      %s49 = sshll.u32 [#allocation7], 4
      %s50 = int_to_ptr.vmem [resolvable:$true] %s49
      %55 = dma.hbm_to_vmem [thread:$0]  %s3, 2048, %s50, [#allocation6], 64, 64, 4
    $region17: #{tpu_custom_call.1} parent=1 // pred_fallthru
      _
    // Predicated region
    $region18: #{tpu_custom_call.1} parent=1 // pred_check
      _
    $region19: #{tpu_custom_call.1} parent=1 // pred_check_branch
      %57 = sbr.rel (0) target = $region21
    $region20: #{tpu_custom_call.1} parent=1 // pred_region
      _
    $region21: #{tpu_custom_call.1} parent=1 // pred_fallthru
      _
    // Predicated region
    $region22: #{tpu_custom_call.1} parent=1 // pred_check
      _
    $region23: #{tpu_custom_call.1} parent=1 // pred_check_branch
      %59 = sbr.rel (0) target = $region25
    $region24: #{tpu_custom_call.1} parent=1 // pred_region
      %s61 = ssub.s32 2048, 2048
      %62 = vsyncadd [#allocation9], %s61
      %s63 = sshll.u32 [#allocation8], 4
      %s64 = int_to_ptr.vmem [resolvable:$true] %s63
      %69 = dma.hbm_to_vmem [thread:$0]  %s5, 2048, %s64, [#allocation9], 64, 64, 4
    $region25: #{tpu_custom_call.1} parent=1 // pred_fallthru
      _
    // Predicated region
    $region26: #{tpu_custom_call.1} parent=1 // pred_check
      _
    $region27: #{tpu_custom_call.1} parent=1 // pred_check_branch
      %71 = sbr.rel (0) target = $region29
    $region28: #{tpu_custom_call.1} parent=1 // pred_region
      _
    $region29: #{tpu_custom_call.1} parent=1 // pred_fallthru
      _
    // Predicated region
    $region30: #{tpu_custom_call.1} parent=1 // pred_check
      _
    $region31: #{tpu_custom_call.1} parent=1 // pred_check_branch
      %73 = sbr.rel (0) target = $region33
    $region32: #{tpu_custom_call.1} parent=1 // pred_region
      %s75 = ssub.s32 4096, 4096
      %76 = vsyncadd [#allocation9], %s75
      %s77 = sshll.u32 [#allocation10], 4
      %s78 = int_to_ptr.vmem [resolvable:$true] %s77
      %83 = dma.hbm_to_vmem [thread:$0]  %s7, 4096, %s78, [#allocation9], 128, 128, 8
    $region33: #{tpu_custom_call.1} parent=1 // pred_fallthru
      _
    // Predicated region
    $region34: #{tpu_custom_call.1} parent=1 // pred_check
      _
    $region35: #{tpu_custom_call.1} parent=1 // pred_check_branch
      %85 = sbr.rel (0) target = $region37
    $region36: #{tpu_custom_call.1} parent=1 // pred_region
      _
    $region37: #{tpu_custom_call.1} parent=1 // pred_fallthru
      _
    // Predicated region
    $region38: #{tpu_custom_call.1} parent=1 // pred_check
      _
    $region39: #{tpu_custom_call.1} parent=1 // pred_check_branch
      %87 = sbr.rel (0) target = $region41
    $region40: #{tpu_custom_call.1} parent=1 // pred_region
      %88 = dma.done [#allocation3], 4096
    $region41: #{tpu_custom_call.1} parent=1 // pred_fallthru
      _
    // Predicated region
    $region42: #{tpu_custom_call.1} parent=1 // pred_check
      _
    $region43: #{tpu_custom_call.1} parent=1 // pred_check_branch
      %90 = sbr.rel (0) target = $region45
    $region44: #{tpu_custom_call.1} parent=1 // pred_region
      %91 = dma.done [#allocation6], 4096
    $region45: #{tpu_custom_call.1} parent=1 // pred_fallthru
      _
    // Predicated region
    $region46: #{tpu_custom_call.1} parent=1 // pred_check
      _
    $region47: #{tpu_custom_call.1} parent=1 // pred_check_branch
      %93 = sbr.rel (0) target = $region49
    $region48: #{tpu_custom_call.1} parent=1 // pred_region
      %94 = dma.done [#allocation6], 2048
    $region49: #{tpu_custom_call.1} parent=1 // pred_fallthru
      _
    // Predicated region
    $region50: #{tpu_custom_call.1} parent=1 // pred_check
      _
    $region51: #{tpu_custom_call.1} parent=1 // pred_check_branch
      %96 = sbr.rel (0) target = $region53
    $region52: #{tpu_custom_call.1} parent=1 // pred_region
      %97 = dma.done [#allocation9], 2048
    $region53: #{tpu_custom_call.1} parent=1 // pred_fallthru
      _
    // Predicated region
    $region54: #{tpu_custom_call.1} parent=1 // pred_check
      _
    $region55: #{tpu_custom_call.1} parent=1 // pred_check_branch
      %99 = sbr.rel (0) target = $region57
    $region56: #{tpu_custom_call.1} parent=1 // pred_region
      %100 = dma.done [#allocation9], 4096
    $region57: #{tpu_custom_call.1} parent=1 // pred_fallthru
      _
    %v102 = vld [vmem:[#allocation2] sm:$0xff]
    %v103 = vld [vmem:[#allocation2 + $0x8] sm:$0xff]
    %v104 = vld [vmem:[#allocation2 + $0x10] sm:$0xff]
    %v105 = vld [vmem:[#allocation2 + $0x18] sm:$0xff]
    %v106 = vld [vmem:[#allocation2 + $0x20] sm:$0xff]
    %v107 = vld [vmem:[#allocation2 + $0x28] sm:$0xff]
    %v108 = vld [vmem:[#allocation2 + $0x30] sm:$0xff]
    %v109 = vld [vmem:[#allocation2 + $0x38] sm:$0xff]
    %v110 = vld [vmem:[#allocation2 + $0x40] sm:$0xff]
    %v111 = vld [vmem:[#allocation2 + $0x48] sm:$0xff]
    %v112 = vld [vmem:[#allocation2 + $0x50] sm:$0xff]
    %v113 = vld [vmem:[#allocation2 + $0x58] sm:$0xff]
    %v114 = vld [vmem:[#allocation2 + $0x60] sm:$0xff]
    %v115 = vld [vmem:[#allocation2 + $0x68] sm:$0xff]
    %v116 = vld [vmem:[#allocation2 + $0x70] sm:$0xff]
    %v117 = vld [vmem:[#allocation2 + $0x78] sm:$0xff]
    %v118 = vld [vmem:[#allocation2 + $0x80] sm:$0xff]
    %v119 = vld [vmem:[#allocation2 + $0x88] sm:$0xff]
    %v120 = vld [vmem:[#allocation2 + $0x90] sm:$0xff]
    %v121 = vld [vmem:[#allocation2 + $0x98] sm:$0xff]
    %v122 = vld [vmem:[#allocation2 + $0xa0] sm:$0xff]
    %v123 = vld [vmem:[#allocation2 + $0xa8] sm:$0xff]
    %v124 = vld [vmem:[#allocation2 + $0xb0] sm:$0xff]
    %v125 = vld [vmem:[#allocation2 + $0xb8] sm:$0xff]
    %v126 = vld [vmem:[#allocation2 + $0xc0] sm:$0xff]
    %v127 = vld [vmem:[#allocation2 + $0xc8] sm:$0xff]
    %v128 = vld [vmem:[#allocation2 + $0xd0] sm:$0xff]
    %v129 = vld [vmem:[#allocation2 + $0xd8] sm:$0xff]
    %v130 = vld [vmem:[#allocation2 + $0xe0] sm:$0xff]
    %v131 = vld [vmem:[#allocation2 + $0xe8] sm:$0xff]
    %v132 = vld [vmem:[#allocation2 + $0xf0] sm:$0xff]
    %v133 = vld [vmem:[#allocation2 + $0xf8] sm:$0xff]
    %v134 = vld [vmem:[#allocation7] sm:$0xf]
    %v135 = vld [vmem:[#allocation7 + $0x4] sm:$0xf]
    %v136 = vld [vmem:[#allocation7 + $0x8] sm:$0xf]
    %v137 = vld [vmem:[#allocation7 + $0xc] sm:$0xf]
    %v138 = vld [vmem:[#allocation7 + $0x10] sm:$0xf]
    %v139 = vld [vmem:[#allocation7 + $0x14] sm:$0xf]
    %v140 = vld [vmem:[#allocation7 + $0x18] sm:$0xf]
    %v141 = vld [vmem:[#allocation7 + $0x1c] sm:$0xf]
    %v142 = vld [vmem:[#allocation7 + $0x20] sm:$0xf]
    %v143 = vld [vmem:[#allocation7 + $0x24] sm:$0xf]
    %v144 = vld [vmem:[#allocation7 + $0x28] sm:$0xf]
    %v145 = vld [vmem:[#allocation7 + $0x2c] sm:$0xf]
    %v146 = vld [vmem:[#allocation7 + $0x30] sm:$0xf]
    %v147 = vld [vmem:[#allocation7 + $0x34] sm:$0xf]
    %v148 = vld [vmem:[#allocation7 + $0x38] sm:$0xf]
    %v149 = vld [vmem:[#allocation7 + $0x3c] sm:$0xf]
    %v150 = vld [vmem:[#allocation7 + $0x40] sm:$0xf]
    %v151 = vld [vmem:[#allocation7 + $0x44] sm:$0xf]
    %v152 = vld [vmem:[#allocation7 + $0x48] sm:$0xf]
    %v153 = vld [vmem:[#allocation7 + $0x4c] sm:$0xf]
    %v154 = vld [vmem:[#allocation7 + $0x50] sm:$0xf]
    %v155 = vld [vmem:[#allocation7 + $0x54] sm:$0xf]
    %v156 = vld [vmem:[#allocation7 + $0x58] sm:$0xf]
    %v157 = vld [vmem:[#allocation7 + $0x5c] sm:$0xf]
    %v158 = vld [vmem:[#allocation7 + $0x60] sm:$0xf]
    %v159 = vld [vmem:[#allocation7 + $0x64] sm:$0xf]
    %v160 = vld [vmem:[#allocation7 + $0x68] sm:$0xf]
    %v161 = vld [vmem:[#allocation7 + $0x6c] sm:$0xf]
    %v162 = vld [vmem:[#allocation7 + $0x70] sm:$0xf]
    %v163 = vld [vmem:[#allocation7 + $0x74] sm:$0xf]
    %v164 = vld [vmem:[#allocation7 + $0x78] sm:$0xf]
    %v165 = vld [vmem:[#allocation7 + $0x7c] sm:$0xf]
    %v166 = vld [vmem:[%s4] sm:$0x1]
    %v168 = vlaneseq
    %v169 = vshrl.u32 %v168, 7
    %v170 = vsub.s32 0, %v169
    %v171 = vrot.slane %v166, %v170
    %v205 = vunpack.c.l.b16 %v102
    %v206 = vunpack.c.h.b16 %v102
    %v207 = vunpack.c.l.b16 %v103
    %v208 = vunpack.c.h.b16 %v103
    %v209 = vunpack.c.l.b16 %v104
    %v210 = vunpack.c.h.b16 %v104
    %v211 = vunpack.c.l.b16 %v105
    %v212 = vunpack.c.h.b16 %v105
    %v213 = vunpack.c.l.b16 %v106
    %v214 = vunpack.c.h.b16 %v106
    %v215 = vunpack.c.l.b16 %v107
    %v216 = vunpack.c.h.b16 %v107
    %v217 = vunpack.c.l.b16 %v108
    %v218 = vunpack.c.h.b16 %v108
    %v219 = vunpack.c.l.b16 %v109
    %v220 = vunpack.c.h.b16 %v109
    %v221 = vunpack.c.l.b16 %v110
    %v222 = vunpack.c.h.b16 %v110
    %v223 = vunpack.c.l.b16 %v111
    %v224 = vunpack.c.h.b16 %v111
    %v225 = vunpack.c.l.b16 %v112
    %v226 = vunpack.c.h.b16 %v112
    %v227 = vunpack.c.l.b16 %v113
    %v228 = vunpack.c.h.b16 %v113
    %v229 = vunpack.c.l.b16 %v114
    %v230 = vunpack.c.h.b16 %v114
    %v231 = vunpack.c.l.b16 %v115
    %v232 = vunpack.c.h.b16 %v115
    %v233 = vunpack.c.l.b16 %v116
    %v234 = vunpack.c.h.b16 %v116
    %v235 = vunpack.c.l.b16 %v117
    %v236 = vunpack.c.h.b16 %v117
    %v237 = vunpack.c.l.b16 %v118
    %v238 = vunpack.c.h.b16 %v118
    %v239 = vunpack.c.l.b16 %v119
    %v240 = vunpack.c.h.b16 %v119
    %v241 = vunpack.c.l.b16 %v120
    %v242 = vunpack.c.h.b16 %v120
    %v243 = vunpack.c.l.b16 %v121
    %v244 = vunpack.c.h.b16 %v121
    %v245 = vunpack.c.l.b16 %v122
    %v246 = vunpack.c.h.b16 %v122
    %v247 = vunpack.c.l.b16 %v123
    %v248 = vunpack.c.h.b16 %v123
    %v249 = vunpack.c.l.b16 %v124
    %v250 = vunpack.c.h.b16 %v124
    %v251 = vunpack.c.l.b16 %v125
    %v252 = vunpack.c.h.b16 %v125
    %v253 = vunpack.c.l.b16 %v126
    %v254 = vunpack.c.h.b16 %v126
    %v255 = vunpack.c.l.b16 %v127
    %v256 = vunpack.c.h.b16 %v127
    %v257 = vunpack.c.l.b16 %v128
    %v258 = vunpack.c.h.b16 %v128
    %v259 = vunpack.c.l.b16 %v129
    %v260 = vunpack.c.h.b16 %v129
    %v261 = vunpack.c.l.b16 %v130
    %v262 = vunpack.c.h.b16 %v130
    %v263 = vunpack.c.l.b16 %v131
    %v264 = vunpack.c.h.b16 %v131
    %v265 = vunpack.c.l.b16 %v132
    %v266 = vunpack.c.h.b16 %v132
    %v267 = vunpack.c.l.b16 %v133
    %v268 = vunpack.c.h.b16 %v133
    %v269 = vpack.c.b16 %v207, %v205
    %v270 = vpack.c.b16 %v208, %v206
    %v271 = vpack.c.b16 %v211, %v209
    %v272 = vpack.c.b16 %v212, %v210
    %v273 = vpack.c.b16 %v215, %v213
    %v274 = vpack.c.b16 %v216, %v214
    %v275 = vpack.c.b16 %v219, %v217
    %v276 = vpack.c.b16 %v220, %v218
    %v277 = vpack.c.b16 %v223, %v221
    %v278 = vpack.c.b16 %v224, %v222
    %v279 = vpack.c.b16 %v227, %v225
    %v280 = vpack.c.b16 %v228, %v226
    %v281 = vpack.c.b16 %v231, %v229
    %v282 = vpack.c.b16 %v232, %v230
    %v283 = vpack.c.b16 %v235, %v233
    %v284 = vpack.c.b16 %v236, %v234
    %v285 = vpack.c.b16 %v239, %v237
    %v286 = vpack.c.b16 %v240, %v238
    %v287 = vpack.c.b16 %v243, %v241
    %v288 = vpack.c.b16 %v244, %v242
    %v289 = vpack.c.b16 %v247, %v245
    %v290 = vpack.c.b16 %v248, %v246
    %v291 = vpack.c.b16 %v251, %v249
    %v292 = vpack.c.b16 %v252, %v250
    %v293 = vpack.c.b16 %v255, %v253
    %v294 = vpack.c.b16 %v256, %v254
    %v295 = vpack.c.b16 %v259, %v257
    %v296 = vpack.c.b16 %v260, %v258
    %v297 = vpack.c.b16 %v263, %v261
    %v298 = vpack.c.b16 %v264, %v262
    %v299 = vpack.c.b16 %v267, %v265
    %v300 = vpack.c.b16 %v268, %v266
    %v365 = vunpack.c.l.b16 %v134
    %v366 = vunpack.c.l.b16 %v135
    %v367 = vunpack.c.l.b16 %v136
    %v368 = vunpack.c.l.b16 %v137
    %v369 = vunpack.c.l.b16 %v138
    %v370 = vunpack.c.l.b16 %v139
    %v371 = vunpack.c.l.b16 %v140
    %v372 = vunpack.c.l.b16 %v141
    %v373 = vunpack.c.l.b16 %v142
    %v374 = vunpack.c.l.b16 %v143
    %v375 = vunpack.c.l.b16 %v144
    %v376 = vunpack.c.l.b16 %v145
    %v377 = vunpack.c.l.b16 %v146
    %v378 = vunpack.c.l.b16 %v147
    %v379 = vunpack.c.l.b16 %v148
    %v380 = vunpack.c.l.b16 %v149
    %v381 = vunpack.c.l.b16 %v150
    %v382 = vunpack.c.l.b16 %v151
    %v383 = vunpack.c.l.b16 %v152
    %v384 = vunpack.c.l.b16 %v153
    %v385 = vunpack.c.l.b16 %v154
    %v386 = vunpack.c.l.b16 %v155
    %v387 = vunpack.c.l.b16 %v156
    %v388 = vunpack.c.l.b16 %v157
    %v389 = vunpack.c.l.b16 %v158
    %v390 = vunpack.c.l.b16 %v159
    %v391 = vunpack.c.l.b16 %v160
    %v392 = vunpack.c.l.b16 %v161
    %v393 = vunpack.c.l.b16 %v162
    %v394 = vunpack.c.l.b16 %v163
    %v395 = vunpack.c.l.b16 %v164
    %v396 = vunpack.c.l.b16 %v165
    %v397 = vpack.c.b16 %v366, %v365
    %v398 = vpack.c.b16 %v368, %v367
    %v399 = vpack.c.b16 %v370, %v369
    %v400 = vpack.c.b16 %v372, %v371
    %v401 = vpack.c.b16 %v374, %v373
    %v402 = vpack.c.b16 %v376, %v375
    %v403 = vpack.c.b16 %v378, %v377
    %v404 = vpack.c.b16 %v380, %v379
    %v405 = vpack.c.b16 %v382, %v381
    %v406 = vpack.c.b16 %v384, %v383
    %v407 = vpack.c.b16 %v386, %v385
    %v408 = vpack.c.b16 %v388, %v387
    %v409 = vpack.c.b16 %v390, %v389
    %v410 = vpack.c.b16 %v392, %v391
    %v411 = vpack.c.b16 %v394, %v393
    %v412 = vpack.c.b16 %v396, %v395
    %429 = vmatprep.subr.bf16.mxu0 0
    %430 = vmatpush1.bf16.msra.mxu0 %v397
    %431 = vmatprep.subr.bf16.mxu0 0
    %432 = vmatpush1.bf16.msra.mxu0 %v398
    %433 = vmatprep.subr.bf16.mxu0 0
    %434 = vmatpush1.bf16.msra.mxu0 %v399
    %435 = vmatprep.subr.bf16.mxu0 0
    %436 = vmatpush1.bf16.msra.mxu0 %v400
    %437 = vmatprep.subr.bf16.mxu0 0
    %438 = vmatpush1.bf16.msra.mxu0 %v401
    %439 = vmatprep.subr.bf16.mxu0 0
    %440 = vmatpush1.bf16.msra.mxu0 %v402
    %441 = vmatprep.subr.bf16.mxu0 0
    %442 = vmatpush1.bf16.msra.mxu0 %v403
    %443 = vmatprep.subr.bf16.mxu0 0
    %444 = vmatpush1.bf16.msra.mxu0 %v404
    %445 = vmatprep.subr.bf16.mxu0 0
    %446 = vmatpush1.bf16.msra.mxu0 %v405
    %447 = vmatprep.subr.bf16.mxu0 0
    %448 = vmatpush1.bf16.msra.mxu0 %v406
    %449 = vmatprep.subr.bf16.mxu0 0
    %450 = vmatpush1.bf16.msra.mxu0 %v407
    %451 = vmatprep.subr.bf16.mxu0 0
    %452 = vmatpush1.bf16.msra.mxu0 %v408
    %453 = vmatprep.subr.bf16.mxu0 0
    %454 = vmatpush1.bf16.msra.mxu0 %v409
    %455 = vmatprep.subr.bf16.mxu0 0
    %456 = vmatpush1.bf16.msra.mxu0 %v410
    %457 = vmatprep.subr.bf16.mxu0 0
    %458 = vmatpush1.bf16.msra.mxu0 %v411
    %459 = vmatprep.subr.bf16.mxu0 0
    %460 = vmatpush1.bf16.msra.mxu0 %v412
    %461 = vmatprep.mubr.bf16.mxu0 %v270
    %462 = vmatmul.mubr.bf16.gmra.mrb[0].mxu0 %v269
    %v463 = vpop.f32.mrb[0].mxu0
    %v464 = vadd.f32 %v171, %v463
    %v465 = vpop.f32.mrb[0].mxu0
    %v466 = vpop.f32.mrb[0].mxu0
    %v467 = vadd.f32 %v171, %v466
    %v468 = vpop.f32.mrb[0].mxu0
    %469 = vmatprep.mubr.bf16.mxu0 %v272
    %470 = vmatmul.mubr.bf16.gmra.mrb[0].mxu0 %v271
    %v471 = vpop.f32.mrb[0].mxu0
    %v472 = vadd.f32 %v171, %v471
    %v473 = vpop.f32.mrb[0].mxu0
    %v474 = vpop.f32.mrb[0].mxu0
    %v475 = vadd.f32 %v171, %v474
    %v476 = vpop.f32.mrb[0].mxu0
    %477 = vmatprep.mubr.bf16.mxu0 %v274
    %478 = vmatmul.mubr.bf16.gmra.mrb[0].mxu0 %v273
    %v479 = vpop.f32.mrb[0].mxu0
    %v480 = vadd.f32 %v171, %v479
    %v481 = vpop.f32.mrb[0].mxu0
    %v482 = vpop.f32.mrb[0].mxu0
    %v483 = vadd.f32 %v171, %v482
    %v484 = vpop.f32.mrb[0].mxu0
    %485 = vmatprep.mubr.bf16.mxu0 %v276
    %486 = vmatmul.mubr.bf16.gmra.mrb[0].mxu0 %v275
    %v487 = vpop.f32.mrb[0].mxu0
    %v488 = vadd.f32 %v171, %v487
    %v489 = vpop.f32.mrb[0].mxu0
    %v490 = vpop.f32.mrb[0].mxu0
    %v491 = vadd.f32 %v171, %v490
    %v492 = vpop.f32.mrb[0].mxu0
    %493 = vmatprep.mubr.bf16.mxu0 %v278
    %494 = vmatmul.mubr.bf16.gmra.mrb[0].mxu0 %v277
    %v495 = vpop.f32.mrb[0].mxu0
    %v496 = vadd.f32 %v171, %v495
    %v497 = vpop.f32.mrb[0].mxu0
    %v498 = vpop.f32.mrb[0].mxu0
    %v499 = vadd.f32 %v171, %v498
    %v500 = vpop.f32.mrb[0].mxu0
    %501 = vmatprep.mubr.bf16.mxu0 %v280
    %502 = vmatmul.mubr.bf16.gmra.mrb[0].mxu0 %v279
    %v503 = vpop.f32.mrb[0].mxu0
    %v504 = vadd.f32 %v171, %v503
    %v505 = vpop.f32.mrb[0].mxu0
    %v506 = vpop.f32.mrb[0].mxu0
    %v507 = vadd.f32 %v171, %v506
    %v508 = vpop.f32.mrb[0].mxu0
    %509 = vmatprep.mubr.bf16.mxu0 %v282
    %510 = vmatmul.mubr.bf16.gmra.mrb[0].mxu0 %v281
    %v511 = vpop.f32.mrb[0].mxu0
    %v512 = vadd.f32 %v171, %v511
    %v513 = vpop.f32.mrb[0].mxu0
    %v514 = vpop.f32.mrb[0].mxu0
    %v515 = vadd.f32 %v171, %v514
    %v516 = vpop.f32.mrb[0].mxu0
    %517 = vmatprep.mubr.bf16.mxu0 %v284
    %518 = vmatmul.mubr.bf16.gmra.mrb[0].mxu0 %v283
    %v519 = vpop.f32.mrb[0].mxu0
    %v520 = vadd.f32 %v171, %v519
    %v521 = vpop.f32.mrb[0].mxu0
    %v522 = vpop.f32.mrb[0].mxu0
    %v523 = vadd.f32 %v171, %v522
    %v524 = vpop.f32.mrb[0].mxu0
    %525 = vmatprep.mubr.bf16.mxu0 %v286
    %526 = vmatmul.mubr.bf16.gmra.mrb[0].mxu0 %v285
    %v527 = vpop.f32.mrb[0].mxu0
    %v528 = vadd.f32 %v171, %v527
    %v529 = vpop.f32.mrb[0].mxu0
    %v530 = vpop.f32.mrb[0].mxu0
    %v531 = vadd.f32 %v171, %v530
    %v532 = vpop.f32.mrb[0].mxu0
    %533 = vmatprep.mubr.bf16.mxu0 %v288
    %534 = vmatmul.mubr.bf16.gmra.mrb[0].mxu0 %v287
    %v535 = vpop.f32.mrb[0].mxu0
    %v536 = vadd.f32 %v171, %v535
    %v537 = vpop.f32.mrb[0].mxu0
    %v538 = vpop.f32.mrb[0].mxu0
    %v539 = vadd.f32 %v171, %v538
    %v540 = vpop.f32.mrb[0].mxu0
    %541 = vmatprep.mubr.bf16.mxu0 %v290
    %542 = vmatmul.mubr.bf16.gmra.mrb[0].mxu0 %v289
    %v543 = vpop.f32.mrb[0].mxu0
    %v544 = vadd.f32 %v171, %v543
    %v545 = vpop.f32.mrb[0].mxu0
    %v546 = vpop.f32.mrb[0].mxu0
    %v547 = vadd.f32 %v171, %v546
    %v548 = vpop.f32.mrb[0].mxu0
    %549 = vmatprep.mubr.bf16.mxu0 %v292
    %550 = vmatmul.mubr.bf16.gmra.mrb[0].mxu0 %v291
    %v551 = vpop.f32.mrb[0].mxu0
    %v552 = vadd.f32 %v171, %v551
    %v553 = vpop.f32.mrb[0].mxu0
    %v554 = vpop.f32.mrb[0].mxu0
    %v555 = vadd.f32 %v171, %v554
    %v556 = vpop.f32.mrb[0].mxu0
    %557 = vmatprep.mubr.bf16.mxu0 %v294
    %558 = vmatmul.mubr.bf16.gmra.mrb[0].mxu0 %v293
    %v559 = vpop.f32.mrb[0].mxu0
    %v560 = vadd.f32 %v171, %v559
    %v561 = vpop.f32.mrb[0].mxu0
    %v562 = vpop.f32.mrb[0].mxu0
    %v563 = vadd.f32 %v171, %v562
    %v564 = vpop.f32.mrb[0].mxu0
    %565 = vmatprep.mubr.bf16.mxu0 %v296
    %566 = vmatmul.mubr.bf16.gmra.mrb[0].mxu0 %v295
    %v567 = vpop.f32.mrb[0].mxu0
    %v568 = vadd.f32 %v171, %v567
    %v569 = vpop.f32.mrb[0].mxu0
    %v570 = vpop.f32.mrb[0].mxu0
    %v571 = vadd.f32 %v171, %v570
    %v572 = vpop.f32.mrb[0].mxu0
    %573 = vmatprep.mubr.bf16.mxu0 %v298
    %574 = vmatmul.mubr.bf16.gmra.mrb[0].mxu0 %v297
    %v575 = vpop.f32.mrb[0].mxu0
    %v576 = vadd.f32 %v171, %v575
    %v577 = vpop.f32.mrb[0].mxu0
    %v578 = vpop.f32.mrb[0].mxu0
    %v579 = vadd.f32 %v171, %v578
    %v580 = vpop.f32.mrb[0].mxu0
    %581 = vmatprep.mubr.bf16.mxu0 %v300
    %582 = vmatmul.mubr.bf16.gmra.mrb[0].mxu0 %v299
    %v583 = vpop.f32.mrb[0].mxu0
    %v584 = vadd.f32 %v171, %v583
    %v585 = vpop.f32.mrb[0].mxu0
    %v586 = vpop.f32.mrb[0].mxu0
    %v587 = vadd.f32 %v171, %v586
    %v588 = vpop.f32.mrb[0].mxu0
    %589 = vdwg.mxu0
    %v590 = vpack.c.bf16 %v467, %v464
    %v591 = vpack.c.bf16 %v475, %v472
    %v592 = vpack.c.bf16 %v483, %v480
    %v593 = vpack.c.bf16 %v491, %v488
    %v594 = vpack.c.bf16 %v499, %v496
    %v595 = vpack.c.bf16 %v507, %v504
    %v596 = vpack.c.bf16 %v515, %v512
    %v597 = vpack.c.bf16 %v523, %v520
    %v598 = vpack.c.bf16 %v531, %v528
    %v599 = vpack.c.bf16 %v539, %v536
    %v600 = vpack.c.bf16 %v547, %v544
    %v601 = vpack.c.bf16 %v555, %v552
    %v602 = vpack.c.bf16 %v563, %v560
    %v603 = vpack.c.bf16 %v571, %v568
    %v604 = vpack.c.bf16 %v579, %v576
    %v605 = vpack.c.bf16 %v587, %v584
    %v606 = vld [vmem:[#allocation8] sm:$0xf]
    %v607 = vld [vmem:[#allocation8 + $0x4] sm:$0xf]
    %v608 = vld [vmem:[#allocation8 + $0x8] sm:$0xf]
    %v609 = vld [vmem:[#allocation8 + $0xc] sm:$0xf]
    %v610 = vld [vmem:[#allocation8 + $0x10] sm:$0xf]
    %v611 = vld [vmem:[#allocation8 + $0x14] sm:$0xf]
    %v612 = vld [vmem:[#allocation8 + $0x18] sm:$0xf]
    %v613 = vld [vmem:[#allocation8 + $0x1c] sm:$0xf]
    %v614 = vld [vmem:[#allocation8 + $0x20] sm:$0xf]
    %v615 = vld [vmem:[#allocation8 + $0x24] sm:$0xf]
    %v616 = vld [vmem:[#allocation8 + $0x28] sm:$0xf]
    %v617 = vld [vmem:[#allocation8 + $0x2c] sm:$0xf]
    %v618 = vld [vmem:[#allocation8 + $0x30] sm:$0xf]
    %v619 = vld [vmem:[#allocation8 + $0x34] sm:$0xf]
    %v620 = vld [vmem:[#allocation8 + $0x38] sm:$0xf]
    %v621 = vld [vmem:[#allocation8 + $0x3c] sm:$0xf]
    %v622 = vld [vmem:[#allocation8 + $0x40] sm:$0xf]
    %v623 = vld [vmem:[#allocation8 + $0x44] sm:$0xf]
    %v624 = vld [vmem:[#allocation8 + $0x48] sm:$0xf]
    %v625 = vld [vmem:[#allocation8 + $0x4c] sm:$0xf]
    %v626 = vld [vmem:[#allocation8 + $0x50] sm:$0xf]
    %v627 = vld [vmem:[#allocation8 + $0x54] sm:$0xf]
    %v628 = vld [vmem:[#allocation8 + $0x58] sm:$0xf]
    %v629 = vld [vmem:[#allocation8 + $0x5c] sm:$0xf]
    %v630 = vld [vmem:[#allocation8 + $0x60] sm:$0xf]
    %v631 = vld [vmem:[#allocation8 + $0x64] sm:$0xf]
    %v632 = vld [vmem:[#allocation8 + $0x68] sm:$0xf]
    %v633 = vld [vmem:[#allocation8 + $0x6c] sm:$0xf]
    %v634 = vld [vmem:[#allocation8 + $0x70] sm:$0xf]
    %v635 = vld [vmem:[#allocation8 + $0x74] sm:$0xf]
    %v636 = vld [vmem:[#allocation8 + $0x78] sm:$0xf]
    %v637 = vld [vmem:[#allocation8 + $0x7c] sm:$0xf]
    %v638 = vld [vmem:[%s6] sm:$0x1]
    %v640 = vlaneseq
    %v641 = vshrl.u32 %v640, 7
    %v642 = vsub.s32 0, %v641
    %v643 = vrot.slane %v638, %v642
    %v677 = vunpack.c.l.b16 %v606
    %v678 = vunpack.c.l.b16 %v607
    %v679 = vunpack.c.l.b16 %v608
    %v680 = vunpack.c.l.b16 %v609
    %v681 = vunpack.c.l.b16 %v610
    %v682 = vunpack.c.l.b16 %v611
    %v683 = vunpack.c.l.b16 %v612
    %v684 = vunpack.c.l.b16 %v613
    %v685 = vunpack.c.l.b16 %v614
    %v686 = vunpack.c.l.b16 %v615
    %v687 = vunpack.c.l.b16 %v616
    %v688 = vunpack.c.l.b16 %v617
    %v689 = vunpack.c.l.b16 %v618
    %v690 = vunpack.c.l.b16 %v619
    %v691 = vunpack.c.l.b16 %v620
    %v692 = vunpack.c.l.b16 %v621
    %v693 = vunpack.c.l.b16 %v622
    %v694 = vunpack.c.l.b16 %v623
    %v695 = vunpack.c.l.b16 %v624
    %v696 = vunpack.c.l.b16 %v625
    %v697 = vunpack.c.l.b16 %v626
    %v698 = vunpack.c.l.b16 %v627
    %v699 = vunpack.c.l.b16 %v628
    %v700 = vunpack.c.l.b16 %v629
    %v701 = vunpack.c.l.b16 %v630
    %v702 = vunpack.c.l.b16 %v631
    %v703 = vunpack.c.l.b16 %v632
    %v704 = vunpack.c.l.b16 %v633
    %v705 = vunpack.c.l.b16 %v634
    %v706 = vunpack.c.l.b16 %v635
    %v707 = vunpack.c.l.b16 %v636
    %v708 = vunpack.c.l.b16 %v637
    %v709 = vpack.c.b16 %v678, %v677
    %v710 = vpack.c.b16 %v680, %v679
    %v711 = vpack.c.b16 %v682, %v681
    %v712 = vpack.c.b16 %v684, %v683
    %v713 = vpack.c.b16 %v686, %v685
    %v714 = vpack.c.b16 %v688, %v687
    %v715 = vpack.c.b16 %v690, %v689
    %v716 = vpack.c.b16 %v692, %v691
    %v717 = vpack.c.b16 %v694, %v693
    %v718 = vpack.c.b16 %v696, %v695
    %v719 = vpack.c.b16 %v698, %v697
    %v720 = vpack.c.b16 %v700, %v699
    %v721 = vpack.c.b16 %v702, %v701
    %v722 = vpack.c.b16 %v704, %v703
    %v723 = vpack.c.b16 %v706, %v705
    %v724 = vpack.c.b16 %v708, %v707
    %741 = vmatprep.subr.bf16.mxu0 0
    %742 = vmatpush1.bf16.msra.mxu0 %v709
    %743 = vmatprep.subr.bf16.mxu0 0
    %744 = vmatpush1.bf16.msra.mxu0 %v710
    %745 = vmatprep.subr.bf16.mxu0 0
    %746 = vmatpush1.bf16.msra.mxu0 %v711
    %747 = vmatprep.subr.bf16.mxu0 0
    %748 = vmatpush1.bf16.msra.mxu0 %v712
    %749 = vmatprep.subr.bf16.mxu0 0
    %750 = vmatpush1.bf16.msra.mxu0 %v713
    %751 = vmatprep.subr.bf16.mxu0 0
    %752 = vmatpush1.bf16.msra.mxu0 %v714
    %753 = vmatprep.subr.bf16.mxu0 0
    %754 = vmatpush1.bf16.msra.mxu0 %v715
    %755 = vmatprep.subr.bf16.mxu0 0
    %756 = vmatpush1.bf16.msra.mxu0 %v716
    %757 = vmatprep.subr.bf16.mxu0 0
    %758 = vmatpush1.bf16.msra.mxu0 %v717
    %759 = vmatprep.subr.bf16.mxu0 0
    %760 = vmatpush1.bf16.msra.mxu0 %v718
    %761 = vmatprep.subr.bf16.mxu0 0
    %762 = vmatpush1.bf16.msra.mxu0 %v719
    %763 = vmatprep.subr.bf16.mxu0 0
    %764 = vmatpush1.bf16.msra.mxu0 %v720
    %765 = vmatprep.subr.bf16.mxu0 0
    %766 = vmatpush1.bf16.msra.mxu0 %v721
    %767 = vmatprep.subr.bf16.mxu0 0
    %768 = vmatpush1.bf16.msra.mxu0 %v722
    %769 = vmatprep.subr.bf16.mxu0 0
    %770 = vmatpush1.bf16.msra.mxu0 %v723
    %771 = vmatprep.subr.bf16.mxu0 0
    %772 = vmatpush1.bf16.msra.mxu0 %v724
    %773 = vmatprep.mubr.bf16.mxu0 %v270
    %774 = vmatmul.mubr.bf16.gmra.mrb[0].mxu0 %v269
    %v775 = vpop.f32.mrb[0].mxu0
    %v776 = vadd.f32 %v643, %v775
    %v777 = vpop.f32.mrb[0].mxu0
    %v778 = vpop.f32.mrb[0].mxu0
    %v779 = vadd.f32 %v643, %v778
    %v780 = vpop.f32.mrb[0].mxu0
    %781 = vmatprep.mubr.bf16.mxu0 %v272
    %782 = vmatmul.mubr.bf16.gmra.mrb[0].mxu0 %v271
    %v783 = vpop.f32.mrb[0].mxu0
    %v784 = vadd.f32 %v643, %v783
    %v785 = vpop.f32.mrb[0].mxu0
    %v786 = vpop.f32.mrb[0].mxu0
    %v787 = vadd.f32 %v643, %v786
    %v788 = vpop.f32.mrb[0].mxu0
    %789 = vmatprep.mubr.bf16.mxu0 %v274
    %790 = vmatmul.mubr.bf16.gmra.mrb[0].mxu0 %v273
    %v791 = vpop.f32.mrb[0].mxu0
    %v792 = vadd.f32 %v643, %v791
    %v793 = vpop.f32.mrb[0].mxu0
    %v794 = vpop.f32.mrb[0].mxu0
    %v795 = vadd.f32 %v643, %v794
    %v796 = vpop.f32.mrb[0].mxu0
    %797 = vmatprep.mubr.bf16.mxu0 %v276
    %798 = vmatmul.mubr.bf16.gmra.mrb[0].mxu0 %v275
    %v799 = vpop.f32.mrb[0].mxu0
    %v800 = vadd.f32 %v643, %v799
    %v801 = vpop.f32.mrb[0].mxu0
    %v802 = vpop.f32.mrb[0].mxu0
    %v803 = vadd.f32 %v643, %v802
    %v804 = vpop.f32.mrb[0].mxu0
    %805 = vmatprep.mubr.bf16.mxu0 %v278
    %806 = vmatmul.mubr.bf16.gmra.mrb[0].mxu0 %v277
    %v807 = vpop.f32.mrb[0].mxu0
    %v808 = vadd.f32 %v643, %v807
    %v809 = vpop.f32.mrb[0].mxu0
    %v810 = vpop.f32.mrb[0].mxu0
    %v811 = vadd.f32 %v643, %v810
    %v812 = vpop.f32.mrb[0].mxu0
    %813 = vmatprep.mubr.bf16.mxu0 %v280
    %814 = vmatmul.mubr.bf16.gmra.mrb[0].mxu0 %v279
    %v815 = vpop.f32.mrb[0].mxu0
    %v816 = vadd.f32 %v643, %v815
    %v817 = vpop.f32.mrb[0].mxu0
    %v818 = vpop.f32.mrb[0].mxu0
    %v819 = vadd.f32 %v643, %v818
    %v820 = vpop.f32.mrb[0].mxu0
    %821 = vmatprep.mubr.bf16.mxu0 %v282
    %822 = vmatmul.mubr.bf16.gmra.mrb[0].mxu0 %v281
    %v823 = vpop.f32.mrb[0].mxu0
    %v824 = vadd.f32 %v643, %v823
    %v825 = vpop.f32.mrb[0].mxu0
    %v826 = vpop.f32.mrb[0].mxu0
    %v827 = vadd.f32 %v643, %v826
    %v828 = vpop.f32.mrb[0].mxu0
    %829 = vmatprep.mubr.bf16.mxu0 %v284
    %830 = vmatmul.mubr.bf16.gmra.mrb[0].mxu0 %v283
    %v831 = vpop.f32.mrb[0].mxu0
    %v832 = vadd.f32 %v643, %v831
    %v833 = vpop.f32.mrb[0].mxu0
    %v834 = vpop.f32.mrb[0].mxu0
    %v835 = vadd.f32 %v643, %v834
    %v836 = vpop.f32.mrb[0].mxu0
    %837 = vmatprep.mubr.bf16.mxu0 %v286
    %838 = vmatmul.mubr.bf16.gmra.mrb[0].mxu0 %v285
    %v839 = vpop.f32.mrb[0].mxu0
    %v840 = vadd.f32 %v643, %v839
    %v841 = vpop.f32.mrb[0].mxu0
    %v842 = vpop.f32.mrb[0].mxu0
    %v843 = vadd.f32 %v643, %v842
    %v844 = vpop.f32.mrb[0].mxu0
    %845 = vmatprep.mubr.bf16.mxu0 %v288
    %846 = vmatmul.mubr.bf16.gmra.mrb[0].mxu0 %v287
    %v847 = vpop.f32.mrb[0].mxu0
    %v848 = vadd.f32 %v643, %v847
    %v849 = vpop.f32.mrb[0].mxu0
    %v850 = vpop.f32.mrb[0].mxu0
    %v851 = vadd.f32 %v643, %v850
    %v852 = vpop.f32.mrb[0].mxu0
    %853 = vmatprep.mubr.bf16.mxu0 %v290
    %854 = vmatmul.mubr.bf16.gmra.mrb[0].mxu0 %v289
    %v855 = vpop.f32.mrb[0].mxu0
    %v856 = vadd.f32 %v643, %v855
    %v857 = vpop.f32.mrb[0].mxu0
    %v858 = vpop.f32.mrb[0].mxu0
    %v859 = vadd.f32 %v643, %v858
    %v860 = vpop.f32.mrb[0].mxu0
    %861 = vmatprep.mubr.bf16.mxu0 %v292
    %862 = vmatmul.mubr.bf16.gmra.mrb[0].mxu0 %v291
    %v863 = vpop.f32.mrb[0].mxu0
    %v864 = vadd.f32 %v643, %v863
    %v865 = vpop.f32.mrb[0].mxu0
    %v866 = vpop.f32.mrb[0].mxu0
    %v867 = vadd.f32 %v643, %v866
    %v868 = vpop.f32.mrb[0].mxu0
    %869 = vmatprep.mubr.bf16.mxu0 %v294
    %870 = vmatmul.mubr.bf16.gmra.mrb[0].mxu0 %v293
    %v871 = vpop.f32.mrb[0].mxu0
    %v872 = vadd.f32 %v643, %v871
    %v873 = vpop.f32.mrb[0].mxu0
    %v874 = vpop.f32.mrb[0].mxu0
    %v875 = vadd.f32 %v643, %v874
    %v876 = vpop.f32.mrb[0].mxu0
    %877 = vmatprep.mubr.bf16.mxu0 %v296
    %878 = vmatmul.mubr.bf16.gmra.mrb[0].mxu0 %v295
    %v879 = vpop.f32.mrb[0].mxu0
    %v880 = vadd.f32 %v643, %v879
    %v881 = vpop.f32.mrb[0].mxu0
    %v882 = vpop.f32.mrb[0].mxu0
    %v883 = vadd.f32 %v643, %v882
    %v884 = vpop.f32.mrb[0].mxu0
    %885 = vmatprep.mubr.bf16.mxu0 %v298
    %886 = vmatmul.mubr.bf16.gmra.mrb[0].mxu0 %v297
    %v887 = vpop.f32.mrb[0].mxu0
    %v888 = vadd.f32 %v643, %v887
    %v889 = vpop.f32.mrb[0].mxu0
    %v890 = vpop.f32.mrb[0].mxu0
    %v891 = vadd.f32 %v643, %v890
    %v892 = vpop.f32.mrb[0].mxu0
    %893 = vmatprep.mubr.bf16.mxu0 %v300
    %894 = vmatmul.mubr.bf16.gmra.mrb[0].mxu0 %v299
    %v895 = vpop.f32.mrb[0].mxu0
    %v896 = vadd.f32 %v643, %v895
    %v897 = vpop.f32.mrb[0].mxu0
    %v898 = vpop.f32.mrb[0].mxu0
    %v899 = vadd.f32 %v643, %v898
    %v900 = vpop.f32.mrb[0].mxu0
    %901 = vdwg.mxu0
    %v902 = vpack.c.bf16 %v779, %v776
    %v903 = vpack.c.bf16 %v787, %v784
    %v904 = vpack.c.bf16 %v795, %v792
    %v905 = vpack.c.bf16 %v803, %v800
    %v906 = vpack.c.bf16 %v811, %v808
    %v907 = vpack.c.bf16 %v819, %v816
    %v908 = vpack.c.bf16 %v827, %v824
    %v909 = vpack.c.bf16 %v835, %v832
    %v910 = vpack.c.bf16 %v843, %v840
    %v911 = vpack.c.bf16 %v851, %v848
    %v912 = vpack.c.bf16 %v859, %v856
    %v913 = vpack.c.bf16 %v867, %v864
    %v914 = vpack.c.bf16 %v875, %v872
    %v915 = vpack.c.bf16 %v883, %v880
    %v916 = vpack.c.bf16 %v891, %v888
    %v917 = vpack.c.bf16 %v899, %v896
    %v918 = vlaneseq
    %v919 = vshrl.u32 %v918, 7
    %v920 = vadd.s32 %v919, 8
    %v921 = vadd.s32 %v919, 16
    %v922 = vadd.s32 %v919, 24
    %v923 = vadd.s32 %v919, 32
    %v924 = vadd.s32 %v919, 40
    %v925 = vadd.s32 %v919, 48
    %v926 = vadd.s32 %v919, 56
    %v927 = vadd.s32 %v919, 64
    %v928 = vadd.s32 %v919, 72
    %v929 = vadd.s32 %v919, 80
    %v930 = vadd.s32 %v919, 88
    %v931 = vadd.s32 %v919, 96
    %v932 = vadd.s32 %v919, 104
    %v933 = vadd.s32 %v919, 112
    %v934 = vadd.s32 %v919, 120
    %v935 = vadd.s32 %v919, 128
    %v936 = vadd.s32 %v919, 136
    %v937 = vadd.s32 %v919, 144
    %v938 = vadd.s32 %v919, 152
    %v939 = vadd.s32 %v919, 160
    %v940 = vadd.s32 %v919, 168
    %v941 = vadd.s32 %v919, 176
    %v942 = vadd.s32 %v919, 184
    %v943 = vadd.s32 %v919, 192
    %v944 = vadd.s32 %v919, 200
    %v945 = vadd.s32 %v919, 208
    %v946 = vadd.s32 %v919, 216
    %v947 = vadd.s32 %v919, 224
    %v948 = vadd.s32 %v919, 232
    %v949 = vadd.s32 %v919, 240
    %v950 = vadd.s32 %v919, 248
    %v951 = vlaneseq
    %v952 = vand.u32 %v951, 127
    %v953 = vadd.s32 %v952, 128
    %vm954 = vcmp.ge.s32.totalorder %v919, %v952
    %vm955 = vcmp.ge.s32.totalorder %v919, %v953
    %vm956 = vcmp.ge.s32.totalorder %v920, %v952
    %vm957 = vcmp.ge.s32.totalorder %v920, %v953
    %vm958 = vcmp.ge.s32.totalorder %v921, %v952
    %vm959 = vcmp.ge.s32.totalorder %v921, %v953
    %vm960 = vcmp.ge.s32.totalorder %v922, %v952
    %vm961 = vcmp.ge.s32.totalorder %v922, %v953
    %vm962 = vcmp.ge.s32.totalorder %v923, %v952
    %vm963 = vcmp.ge.s32.totalorder %v923, %v953
    %vm964 = vcmp.ge.s32.totalorder %v924, %v952
    %vm965 = vcmp.ge.s32.totalorder %v924, %v953
    %vm966 = vcmp.ge.s32.totalorder %v925, %v952
    %vm967 = vcmp.ge.s32.totalorder %v925, %v953
    %vm968 = vcmp.ge.s32.totalorder %v926, %v952
    %vm969 = vcmp.ge.s32.totalorder %v926, %v953
    %vm970 = vcmp.ge.s32.totalorder %v927, %v952
    %vm971 = vcmp.ge.s32.totalorder %v927, %v953
    %vm972 = vcmp.ge.s32.totalorder %v928, %v952
    %vm973 = vcmp.ge.s32.totalorder %v928, %v953
    %vm974 = vcmp.ge.s32.totalorder %v929, %v952
    %vm975 = vcmp.ge.s32.totalorder %v929, %v953
    %vm976 = vcmp.ge.s32.totalorder %v930, %v952
    %vm977 = vcmp.ge.s32.totalorder %v930, %v953
    %vm978 = vcmp.ge.s32.totalorder %v931, %v952
    %vm979 = vcmp.ge.s32.totalorder %v931, %v953
    %vm980 = vcmp.ge.s32.totalorder %v932, %v952
    %vm981 = vcmp.ge.s32.totalorder %v932, %v953
    %vm982 = vcmp.ge.s32.totalorder %v933, %v952
    %vm983 = vcmp.ge.s32.totalorder %v933, %v953
    %vm984 = vcmp.ge.s32.totalorder %v934, %v952
    %vm985 = vcmp.ge.s32.totalorder %v934, %v953
    %vm986 = vcmp.ge.s32.totalorder %v935, %v952
    %vm987 = vcmp.ge.s32.totalorder %v935, %v953
    %vm988 = vcmp.ge.s32.totalorder %v936, %v952
    %vm989 = vcmp.ge.s32.totalorder %v936, %v953
    %vm990 = vcmp.ge.s32.totalorder %v937, %v952
    %vm991 = vcmp.ge.s32.totalorder %v937, %v953
    %vm992 = vcmp.ge.s32.totalorder %v938, %v952
    %vm993 = vcmp.ge.s32.totalorder %v938, %v953
    %vm994 = vcmp.ge.s32.totalorder %v939, %v952
    %vm995 = vcmp.ge.s32.totalorder %v939, %v953
    %vm996 = vcmp.ge.s32.totalorder %v940, %v952
    %vm997 = vcmp.ge.s32.totalorder %v940, %v953
    %vm998 = vcmp.ge.s32.totalorder %v941, %v952
    %vm999 = vcmp.ge.s32.totalorder %v941, %v953
    %vm1000 = vcmp.ge.s32.totalorder %v942, %v952
    %vm1001 = vcmp.ge.s32.totalorder %v942, %v953
    %vm1002 = vcmp.ge.s32.totalorder %v943, %v952
    %vm1003 = vcmp.ge.s32.totalorder %v943, %v953
    %vm1004 = vcmp.ge.s32.totalorder %v944, %v952
    %vm1005 = vcmp.ge.s32.totalorder %v944, %v953
    %vm1006 = vcmp.ge.s32.totalorder %v945, %v952
    %vm1007 = vcmp.ge.s32.totalorder %v945, %v953
    %vm1008 = vcmp.ge.s32.totalorder %v946, %v952
    %vm1009 = vcmp.ge.s32.totalorder %v946, %v953
    %vm1010 = vcmp.ge.s32.totalorder %v947, %v952
    %vm1011 = vcmp.ge.s32.totalorder %v947, %v953
    %vm1012 = vcmp.ge.s32.totalorder %v948, %v952
    %vm1013 = vcmp.ge.s32.totalorder %v948, %v953
    %vm1014 = vcmp.ge.s32.totalorder %v949, %v952
    %vm1015 = vcmp.ge.s32.totalorder %v949, %v953
    %vm1016 = vcmp.ge.s32.totalorder %v950, %v952
    %vm1017 = vcmp.ge.s32.totalorder %v950, %v953
    %v1018 = vld [vmem:[#allocation5] sm:$0xf]
    %v1019 = vld [vmem:[#allocation5 + $0x8] sm:$0xf]
    %v1020 = vld [vmem:[#allocation5 + $0x10] sm:$0xf]
    %v1021 = vld [vmem:[#allocation5 + $0x18] sm:$0xf]
    %v1022 = vld [vmem:[#allocation5 + $0x20] sm:$0xf]
    %v1023 = vld [vmem:[#allocation5 + $0x28] sm:$0xf]
    %v1024 = vld [vmem:[#allocation5 + $0x30] sm:$0xf]
    %v1025 = vld [vmem:[#allocation5 + $0x38] sm:$0xf]
    %v1026 = vld [vmem:[#allocation5 + $0x40] sm:$0xf]
    %v1027 = vld [vmem:[#allocation5 + $0x48] sm:$0xf]
    %v1028 = vld [vmem:[#allocation5 + $0x50] sm:$0xf]
    %v1029 = vld [vmem:[#allocation5 + $0x58] sm:$0xf]
    %v1030 = vld [vmem:[#allocation5 + $0x60] sm:$0xf]
    %v1031 = vld [vmem:[#allocation5 + $0x68] sm:$0xf]
    %v1032 = vld [vmem:[#allocation5 + $0x70] sm:$0xf]
    %v1033 = vld [vmem:[#allocation5 + $0x78] sm:$0xf]
    %v1034 = vld [vmem:[#allocation5 + $0x80] sm:$0xf]
    %v1035 = vld [vmem:[#allocation5 + $0x88] sm:$0xf]
    %v1036 = vld [vmem:[#allocation5 + $0x90] sm:$0xf]
    %v1037 = vld [vmem:[#allocation5 + $0x98] sm:$0xf]
    %v1038 = vld [vmem:[#allocation5 + $0xa0] sm:$0xf]
    %v1039 = vld [vmem:[#allocation5 + $0xa8] sm:$0xf]
    %v1040 = vld [vmem:[#allocation5 + $0xb0] sm:$0xf]
    %v1041 = vld [vmem:[#allocation5 + $0xb8] sm:$0xf]
    %v1042 = vld [vmem:[#allocation5 + $0xc0] sm:$0xf]
    %v1043 = vld [vmem:[#allocation5 + $0xc8] sm:$0xf]
    %v1044 = vld [vmem:[#allocation5 + $0xd0] sm:$0xf]
    %v1045 = vld [vmem:[#allocation5 + $0xd8] sm:$0xf]
    %v1046 = vld [vmem:[#allocation5 + $0xe0] sm:$0xf]
    %v1047 = vld [vmem:[#allocation5 + $0xe8] sm:$0xf]
    %v1048 = vld [vmem:[#allocation5 + $0xf0] sm:$0xf]
    %v1049 = vld [vmem:[#allocation5 + $0xf8] sm:$0xf]
    %v1050 = vld [vmem:[%s2] sm:$0x1]
    %v1052 = vlaneseq
    %v1053 = vshrl.u32 %v1052, 7
    %v1054 = vsub.s32 0, %v1053
    %v1055 = vrot.slane %v1050, %v1054
    %v1089 = vunpack.c.l.b16 %v1018
    %v1090 = vunpack.c.l.b16 %v1019
    %v1091 = vunpack.c.l.b16 %v1020
    %v1092 = vunpack.c.l.b16 %v1021
    %v1093 = vunpack.c.l.b16 %v1022
    %v1094 = vunpack.c.l.b16 %v1023
    %v1095 = vunpack.c.l.b16 %v1024
    %v1096 = vunpack.c.l.b16 %v1025
    %v1097 = vunpack.c.l.b16 %v1026
    %v1098 = vunpack.c.l.b16 %v1027
    %v1099 = vunpack.c.l.b16 %v1028
    %v1100 = vunpack.c.l.b16 %v1029
    %v1101 = vunpack.c.l.b16 %v1030
    %v1102 = vunpack.c.l.b16 %v1031
    %v1103 = vunpack.c.l.b16 %v1032
    %v1104 = vunpack.c.l.b16 %v1033
    %v1105 = vunpack.c.l.b16 %v1034
    %v1106 = vunpack.c.l.b16 %v1035
    %v1107 = vunpack.c.l.b16 %v1036
    %v1108 = vunpack.c.l.b16 %v1037
    %v1109 = vunpack.c.l.b16 %v1038
    %v1110 = vunpack.c.l.b16 %v1039
    %v1111 = vunpack.c.l.b16 %v1040
    %v1112 = vunpack.c.l.b16 %v1041
    %v1113 = vunpack.c.l.b16 %v1042
    %v1114 = vunpack.c.l.b16 %v1043
    %v1115 = vunpack.c.l.b16 %v1044
    %v1116 = vunpack.c.l.b16 %v1045
    %v1117 = vunpack.c.l.b16 %v1046
    %v1118 = vunpack.c.l.b16 %v1047
    %v1119 = vunpack.c.l.b16 %v1048
    %v1120 = vunpack.c.l.b16 %v1049
    %v1121 = vpack.c.b16 %v1090, %v1089
    %v1122 = vpack.c.b16 %v1092, %v1091
    %v1123 = vpack.c.b16 %v1094, %v1093
    %v1124 = vpack.c.b16 %v1096, %v1095
    %v1125 = vpack.c.b16 %v1098, %v1097
    %v1126 = vpack.c.b16 %v1100, %v1099
    %v1127 = vpack.c.b16 %v1102, %v1101
    %v1128 = vpack.c.b16 %v1104, %v1103
    %v1129 = vpack.c.b16 %v1106, %v1105
    %v1130 = vpack.c.b16 %v1108, %v1107
    %v1131 = vpack.c.b16 %v1110, %v1109
    %v1132 = vpack.c.b16 %v1112, %v1111
    %v1133 = vpack.c.b16 %v1114, %v1113
    %v1134 = vpack.c.b16 %v1116, %v1115
    %v1135 = vpack.c.b16 %v1118, %v1117
    %v1136 = vpack.c.b16 %v1120, %v1119
    %1153 = vmatprep.subr.bf16.mxu0 0
    %1154 = vmatpush1.bf16.msra.mxu0 %v1121
    %1155 = vmatprep.subr.bf16.mxu0 0
    %1156 = vmatpush1.bf16.msra.mxu0 %v1122
    %1157 = vmatprep.subr.bf16.mxu0 0
    %1158 = vmatpush1.bf16.msra.mxu0 %v1123
    %1159 = vmatprep.subr.bf16.mxu0 0
    %1160 = vmatpush1.bf16.msra.mxu0 %v1124
    %1161 = vmatprep.subr.bf16.mxu0 0
    %1162 = vmatpush1.bf16.msra.mxu0 %v1125
    %1163 = vmatprep.subr.bf16.mxu0 0
    %1164 = vmatpush1.bf16.msra.mxu0 %v1126
    %1165 = vmatprep.subr.bf16.mxu0 0
    %1166 = vmatpush1.bf16.msra.mxu0 %v1127
    %1167 = vmatprep.subr.bf16.mxu0 0
    %1168 = vmatpush1.bf16.msra.mxu0 %v1128
    %1169 = vmatprep.subr.bf16.mxu0 0
    %1170 = vmatpush1.bf16.msra.mxu0 %v1129
    %1171 = vmatprep.subr.bf16.mxu0 0
    %1172 = vmatpush1.bf16.msra.mxu0 %v1130
    %1173 = vmatprep.subr.bf16.mxu0 0
    %1174 = vmatpush1.bf16.msra.mxu0 %v1131
    %1175 = vmatprep.subr.bf16.mxu0 0
    %1176 = vmatpush1.bf16.msra.mxu0 %v1132
    %1177 = vmatprep.subr.bf16.mxu0 0
    %1178 = vmatpush1.bf16.msra.mxu0 %v1133
    %1179 = vmatprep.subr.bf16.mxu0 0
    %1180 = vmatpush1.bf16.msra.mxu0 %v1134
    %1181 = vmatprep.subr.bf16.mxu0 0
    %1182 = vmatpush1.bf16.msra.mxu0 %v1135
    %1183 = vmatprep.subr.bf16.mxu0 0
    %1184 = vmatpush1.bf16.msra.mxu0 %v1136
    %1185 = vmatprep.mubr.bf16.mxu0 %v270
    %1186 = vmatmul.mubr.bf16.gmra.mrb[0].mxu0 %v269
    %v1187 = vpop.f32.mrb[0].mxu0
    %v1188 = vadd.f32 %v1055, %v1187
    %v1189 = vpop.f32.mrb[0].mxu0
    %v1190 = vpop.f32.mrb[0].mxu0
    %v1191 = vadd.f32 %v1055, %v1190
    %v1192 = vpop.f32.mrb[0].mxu0
    %1193 = vmatprep.mubr.bf16.mxu0 %v272
    %1194 = vmatmul.mubr.bf16.gmra.mrb[0].mxu0 %v271
    %v1195 = vpop.f32.mrb[0].mxu0
    %v1196 = vadd.f32 %v1055, %v1195
    %v1197 = vpop.f32.mrb[0].mxu0
    %v1198 = vpop.f32.mrb[0].mxu0
    %v1199 = vadd.f32 %v1055, %v1198
    %v1200 = vpop.f32.mrb[0].mxu0
    %1201 = vmatprep.mubr.bf16.mxu0 %v274
    %1202 = vmatmul.mubr.bf16.gmra.mrb[0].mxu0 %v273
    %v1203 = vpop.f32.mrb[0].mxu0
    %v1204 = vadd.f32 %v1055, %v1203
    %v1205 = vpop.f32.mrb[0].mxu0
    %v1206 = vpop.f32.mrb[0].mxu0
    %v1207 = vadd.f32 %v1055, %v1206
    %v1208 = vpop.f32.mrb[0].mxu0
    %1209 = vmatprep.mubr.bf16.mxu0 %v276
    %1210 = vmatmul.mubr.bf16.gmra.mrb[0].mxu0 %v275
    %v1211 = vpop.f32.mrb[0].mxu0
    %v1212 = vadd.f32 %v1055, %v1211
    %v1213 = vpop.f32.mrb[0].mxu0
    %v1214 = vpop.f32.mrb[0].mxu0
    %v1215 = vadd.f32 %v1055, %v1214
    %v1216 = vpop.f32.mrb[0].mxu0
    %1217 = vmatprep.mubr.bf16.mxu0 %v278
    %1218 = vmatmul.mubr.bf16.gmra.mrb[0].mxu0 %v277
    %v1219 = vpop.f32.mrb[0].mxu0
    %v1220 = vadd.f32 %v1055, %v1219
    %v1221 = vpop.f32.mrb[0].mxu0
    %v1222 = vpop.f32.mrb[0].mxu0
    %v1223 = vadd.f32 %v1055, %v1222
    %v1224 = vpop.f32.mrb[0].mxu0
    %1225 = vmatprep.mubr.bf16.mxu0 %v280
    %1226 = vmatmul.mubr.bf16.gmra.mrb[0].mxu0 %v279
    %v1227 = vpop.f32.mrb[0].mxu0
    %v1228 = vadd.f32 %v1055, %v1227
    %v1229 = vpop.f32.mrb[0].mxu0
    %v1230 = vpop.f32.mrb[0].mxu0
    %v1231 = vadd.f32 %v1055, %v1230
    %v1232 = vpop.f32.mrb[0].mxu0
    %1233 = vmatprep.mubr.bf16.mxu0 %v282
    %1234 = vmatmul.mubr.bf16.gmra.mrb[0].mxu0 %v281
    %v1235 = vpop.f32.mrb[0].mxu0
    %v1236 = vadd.f32 %v1055, %v1235
    %v1237 = vpop.f32.mrb[0].mxu0
    %v1238 = vpop.f32.mrb[0].mxu0
    %v1239 = vadd.f32 %v1055, %v1238
    %v1240 = vpop.f32.mrb[0].mxu0
    %1241 = vmatprep.mubr.bf16.mxu0 %v284
    %1242 = vmatmul.mubr.bf16.gmra.mrb[0].mxu0 %v283
    %v1243 = vpop.f32.mrb[0].mxu0
    %v1244 = vadd.f32 %v1055, %v1243
    %v1245 = vpop.f32.mrb[0].mxu0
    %v1246 = vpop.f32.mrb[0].mxu0
    %v1247 = vadd.f32 %v1055, %v1246
    %v1248 = vpop.f32.mrb[0].mxu0
    %1249 = vmatprep.mubr.bf16.mxu0 %v286
    %1250 = vmatmul.mubr.bf16.gmra.mrb[0].mxu0 %v285
    %v1251 = vpop.f32.mrb[0].mxu0
    %v1252 = vadd.f32 %v1055, %v1251
    %v1253 = vpop.f32.mrb[0].mxu0
    %v1254 = vpop.f32.mrb[0].mxu0
    %v1255 = vadd.f32 %v1055, %v1254
    %v1256 = vpop.f32.mrb[0].mxu0
    %1257 = vmatprep.mubr.bf16.mxu0 %v288
    %1258 = vmatmul.mubr.bf16.gmra.mrb[0].mxu0 %v287
    %v1259 = vpop.f32.mrb[0].mxu0
    %v1260 = vadd.f32 %v1055, %v1259
    %v1261 = vpop.f32.mrb[0].mxu0
    %v1262 = vpop.f32.mrb[0].mxu0
    %v1263 = vadd.f32 %v1055, %v1262
    %v1264 = vpop.f32.mrb[0].mxu0
    %1265 = vmatprep.mubr.bf16.mxu0 %v290
    %1266 = vmatmul.mubr.bf16.gmra.mrb[0].mxu0 %v289
    %v1267 = vpop.f32.mrb[0].mxu0
    %v1268 = vadd.f32 %v1055, %v1267
    %v1269 = vpop.f32.mrb[0].mxu0
    %v1270 = vpop.f32.mrb[0].mxu0
    %v1271 = vadd.f32 %v1055, %v1270
    %v1272 = vpop.f32.mrb[0].mxu0
    %1273 = vmatprep.mubr.bf16.mxu0 %v292
    %1274 = vmatmul.mubr.bf16.gmra.mrb[0].mxu0 %v291
    %v1275 = vpop.f32.mrb[0].mxu0
    %v1276 = vadd.f32 %v1055, %v1275
    %v1277 = vpop.f32.mrb[0].mxu0
    %v1278 = vpop.f32.mrb[0].mxu0
    %v1279 = vadd.f32 %v1055, %v1278
    %v1280 = vpop.f32.mrb[0].mxu0
    %1281 = vmatprep.mubr.bf16.mxu0 %v294
    %1282 = vmatmul.mubr.bf16.gmra.mrb[0].mxu0 %v293
    %v1283 = vpop.f32.mrb[0].mxu0
    %v1284 = vadd.f32 %v1055, %v1283
    %v1285 = vpop.f32.mrb[0].mxu0
    %v1286 = vpop.f32.mrb[0].mxu0
    %v1287 = vadd.f32 %v1055, %v1286
    %v1288 = vpop.f32.mrb[0].mxu0
    %1289 = vmatprep.mubr.bf16.mxu0 %v296
    %1290 = vmatmul.mubr.bf16.gmra.mrb[0].mxu0 %v295
    %v1291 = vpop.f32.mrb[0].mxu0
    %v1292 = vadd.f32 %v1055, %v1291
    %v1293 = vpop.f32.mrb[0].mxu0
    %v1294 = vpop.f32.mrb[0].mxu0
    %v1295 = vadd.f32 %v1055, %v1294
    %v1296 = vpop.f32.mrb[0].mxu0
    %1297 = vmatprep.mubr.bf16.mxu0 %v298
    %1298 = vmatmul.mubr.bf16.gmra.mrb[0].mxu0 %v297
    %v1299 = vpop.f32.mrb[0].mxu0
    %v1300 = vadd.f32 %v1055, %v1299
    %v1301 = vpop.f32.mrb[0].mxu0
    %v1302 = vpop.f32.mrb[0].mxu0
    %v1303 = vadd.f32 %v1055, %v1302
    %v1304 = vpop.f32.mrb[0].mxu0
    %1305 = vmatprep.mubr.bf16.mxu0 %v300
    %1306 = vmatmul.mubr.bf16.gmra.mrb[0].mxu0 %v299
    %v1307 = vpop.f32.mrb[0].mxu0
    %v1308 = vadd.f32 %v1055, %v1307
    %v1309 = vpop.f32.mrb[0].mxu0
    %v1310 = vpop.f32.mrb[0].mxu0
    %v1311 = vadd.f32 %v1055, %v1310
    %v1312 = vpop.f32.mrb[0].mxu0
    %1313 = vdwg.mxu0
    %v1314 = vmul.f32 %v1188, 0.088388346
    %v1315 = vmul.f32 %v1191, 0.088388346
    %v1316 = vmul.f32 %v1196, 0.088388346
    %v1317 = vmul.f32 %v1199, 0.088388346
    %v1318 = vmul.f32 %v1204, 0.088388346
    %v1319 = vmul.f32 %v1207, 0.088388346
    %v1320 = vmul.f32 %v1212, 0.088388346
    %v1321 = vmul.f32 %v1215, 0.088388346
    %v1322 = vmul.f32 %v1220, 0.088388346
    %v1323 = vmul.f32 %v1223, 0.088388346
    %v1324 = vmul.f32 %v1228, 0.088388346
    %v1325 = vmul.f32 %v1231, 0.088388346
    %v1326 = vmul.f32 %v1236, 0.088388346
    %v1327 = vmul.f32 %v1239, 0.088388346
    %v1328 = vmul.f32 %v1244, 0.088388346
    %v1329 = vmul.f32 %v1247, 0.088388346
    %v1330 = vmul.f32 %v1252, 0.088388346
    %v1331 = vmul.f32 %v1255, 0.088388346
    %v1332 = vmul.f32 %v1260, 0.088388346
    %v1333 = vmul.f32 %v1263, 0.088388346
    %v1334 = vmul.f32 %v1268, 0.088388346
    %v1335 = vmul.f32 %v1271, 0.088388346
    %v1336 = vmul.f32 %v1276, 0.088388346
    %v1337 = vmul.f32 %v1279, 0.088388346
    %v1338 = vmul.f32 %v1284, 0.088388346
    %v1339 = vmul.f32 %v1287, 0.088388346
    %v1340 = vmul.f32 %v1292, 0.088388346
    %v1341 = vmul.f32 %v1295, 0.088388346
    %v1342 = vmul.f32 %v1300, 0.088388346
    %v1343 = vmul.f32 %v1303, 0.088388346
    %v1344 = vmul.f32 %v1308, 0.088388346
    %v1345 = vmul.f32 %v1311, 0.088388346
    %v1346 = vpack.c.bf16 %v1315, %v1314
    %v1347 = vpack.c.bf16 %v1317, %v1316
    %v1348 = vpack.c.bf16 %v1319, %v1318
    %v1349 = vpack.c.bf16 %v1321, %v1320
    %v1350 = vpack.c.bf16 %v1323, %v1322
    %v1351 = vpack.c.bf16 %v1325, %v1324
    %v1352 = vpack.c.bf16 %v1327, %v1326
    %v1353 = vpack.c.bf16 %v1329, %v1328
    %v1354 = vpack.c.bf16 %v1331, %v1330
    %v1355 = vpack.c.bf16 %v1333, %v1332
    %v1356 = vpack.c.bf16 %v1335, %v1334
    %v1357 = vpack.c.bf16 %v1337, %v1336
    %v1358 = vpack.c.bf16 %v1339, %v1338
    %v1359 = vpack.c.bf16 %v1341, %v1340
    %v1360 = vpack.c.bf16 %v1343, %v1342
    %v1361 = vpack.c.bf16 %v1345, %v1344
    %1362 = vmatprep.subr.bf16.mxu0 0
    %1363 = vmatpush1.bf16.xpose.msra.mxu0 %v590
    %1364 = vmatprep.subr.bf16.mxu0 0
    %1365 = vmatpush1.bf16.xpose.msra.mxu0 %v591
    %1366 = vmatprep.subr.bf16.mxu0 0
    %1367 = vmatpush1.bf16.xpose.msra.mxu0 %v592
    %1368 = vmatprep.subr.bf16.mxu0 0
    %1369 = vmatpush1.bf16.xpose.msra.mxu0 %v593
    %1370 = vmatprep.subr.bf16.mxu0 0
    %1371 = vmatpush1.bf16.xpose.msra.mxu0 %v594
    %1372 = vmatprep.subr.bf16.mxu0 0
    %1373 = vmatpush1.bf16.xpose.msra.mxu0 %v595
    %1374 = vmatprep.subr.bf16.mxu0 0
    %1375 = vmatpush1.bf16.xpose.msra.mxu0 %v596
    %1376 = vmatprep.subr.bf16.mxu0 0
    %1377 = vmatpush1.bf16.xpose.msra.mxu0 %v597
    %1378 = vmatprep.subr.bf16.mxu0 0
    %1379 = vmatpush1.bf16.xpose.msra.mxu0 %v598
    %1380 = vmatprep.subr.bf16.mxu0 0
    %1381 = vmatpush1.bf16.xpose.msra.mxu0 %v599
    %1382 = vmatprep.subr.bf16.mxu0 0
    %1383 = vmatpush1.bf16.xpose.msra.mxu0 %v600
    %1384 = vmatprep.subr.bf16.mxu0 0
    %1385 = vmatpush1.bf16.xpose.msra.mxu0 %v601
    %1386 = vmatprep.subr.bf16.mxu0 0
    %1387 = vmatpush1.bf16.xpose.msra.mxu0 %v602
    %1388 = vmatprep.subr.bf16.mxu0 0
    %1389 = vmatpush1.bf16.xpose.msra.mxu0 %v603
    %1390 = vmatprep.subr.bf16.mxu0 0
    %1391 = vmatpush1.bf16.xpose.msra.mxu0 %v604
    %1392 = vmatprep.subr.bf16.mxu0 0
    %1393 = vmatpush1.bf16.xpose.msra.mxu0 %v605
    %1394 = vmatprep.mubr.bf16.mxu0 0
    %1395 = vmatmul.mubr.bf16.gmra.mrb[0].mxu0 %v1346
    %v1396 = vpop.f32.mrb[0].mxu0
    %v1397 = vadd.f32 0.0, %v1396
    %v1398 = vpop.f32.mrb[0].mxu0
    %v1399 = vadd.f32 0.0, %v1398
    %v1400 = vpop.f32.mrb[0].mxu0
    %v1401 = vadd.f32 0.0, %v1400
    %v1402 = vpop.f32.mrb[0].mxu0
    %v1403 = vadd.f32 0.0, %v1402
    %1404 = vmatprep.mubr.bf16.mxu0 0
    %1405 = vmatmul.mubr.bf16.gmra.mrb[0].mxu0 %v1347
    %v1406 = vpop.f32.mrb[0].mxu0
    %v1407 = vadd.f32 0.0, %v1406
    %v1408 = vpop.f32.mrb[0].mxu0
    %v1409 = vadd.f32 0.0, %v1408
    %v1410 = vpop.f32.mrb[0].mxu0
    %v1411 = vadd.f32 0.0, %v1410
    %v1412 = vpop.f32.mrb[0].mxu0
    %v1413 = vadd.f32 0.0, %v1412
    %1414 = vmatprep.mubr.bf16.mxu0 0
    %1415 = vmatmul.mubr.bf16.gmra.mrb[0].mxu0 %v1348
    %v1416 = vpop.f32.mrb[0].mxu0
    %v1417 = vadd.f32 0.0, %v1416
    %v1418 = vpop.f32.mrb[0].mxu0
    %v1419 = vadd.f32 0.0, %v1418
    %v1420 = vpop.f32.mrb[0].mxu0
    %v1421 = vadd.f32 0.0, %v1420
    %v1422 = vpop.f32.mrb[0].mxu0
    %v1423 = vadd.f32 0.0, %v1422
    %1424 = vmatprep.mubr.bf16.mxu0 0
    %1425 = vmatmul.mubr.bf16.gmra.mrb[0].mxu0 %v1349
    %v1426 = vpop.f32.mrb[0].mxu0
    %v1427 = vadd.f32 0.0, %v1426
    %v1428 = vpop.f32.mrb[0].mxu0
    %v1429 = vadd.f32 0.0, %v1428
    %v1430 = vpop.f32.mrb[0].mxu0
    %v1431 = vadd.f32 0.0, %v1430
    %v1432 = vpop.f32.mrb[0].mxu0
    %v1433 = vadd.f32 0.0, %v1432
    %1434 = vmatprep.mubr.bf16.mxu0 0
    %1435 = vmatmul.mubr.bf16.gmra.mrb[0].mxu0 %v1350
    %v1436 = vpop.f32.mrb[0].mxu0
    %v1437 = vadd.f32 0.0, %v1436
    %v1438 = vpop.f32.mrb[0].mxu0
    %v1439 = vadd.f32 0.0, %v1438
    %v1440 = vpop.f32.mrb[0].mxu0
    %v1441 = vadd.f32 0.0, %v1440
    %v1442 = vpop.f32.mrb[0].mxu0
    %v1443 = vadd.f32 0.0, %v1442
    %1444 = vmatprep.mubr.bf16.mxu0 0
    %1445 = vmatmul.mubr.bf16.gmra.mrb[0].mxu0 %v1351
    %v1446 = vpop.f32.mrb[0].mxu0
    %v1447 = vadd.f32 0.0, %v1446
    %v1448 = vpop.f32.mrb[0].mxu0
    %v1449 = vadd.f32 0.0, %v1448
    %v1450 = vpop.f32.mrb[0].mxu0
    %v1451 = vadd.f32 0.0, %v1450
    %v1452 = vpop.f32.mrb[0].mxu0
    %v1453 = vadd.f32 0.0, %v1452
    %1454 = vmatprep.mubr.bf16.mxu0 0
    %1455 = vmatmul.mubr.bf16.gmra.mrb[0].mxu0 %v1352
    %v1456 = vpop.f32.mrb[0].mxu0
    %v1457 = vadd.f32 0.0, %v1456
    %v1458 = vpop.f32.mrb[0].mxu0
    %v1459 = vadd.f32 0.0, %v1458
    %v1460 = vpop.f32.mrb[0].mxu0
    %v1461 = vadd.f32 0.0, %v1460
    %v1462 = vpop.f32.mrb[0].mxu0
    %v1463 = vadd.f32 0.0, %v1462
    %1464 = vmatprep.mubr.bf16.mxu0 0
    %1465 = vmatmul.mubr.bf16.gmra.mrb[0].mxu0 %v1353
    %v1466 = vpop.f32.mrb[0].mxu0
    %v1467 = vadd.f32 0.0, %v1466
    %v1468 = vpop.f32.mrb[0].mxu0
    %v1469 = vadd.f32 0.0, %v1468
    %v1470 = vpop.f32.mrb[0].mxu0
    %v1471 = vadd.f32 0.0, %v1470
    %v1472 = vpop.f32.mrb[0].mxu0
    %v1473 = vadd.f32 0.0, %v1472
    %1474 = vmatprep.mubr.bf16.mxu0 0
    %1475 = vmatmul.mubr.bf16.gmra.mrb[0].mxu0 %v1354
    %v1476 = vpop.f32.mrb[0].mxu0
    %v1477 = vadd.f32 0.0, %v1476
    %v1478 = vpop.f32.mrb[0].mxu0
    %v1479 = vadd.f32 0.0, %v1478
    %v1480 = vpop.f32.mrb[0].mxu0
    %v1481 = vadd.f32 0.0, %v1480
    %v1482 = vpop.f32.mrb[0].mxu0
    %v1483 = vadd.f32 0.0, %v1482
    %1484 = vmatprep.mubr.bf16.mxu0 0
    %1485 = vmatmul.mubr.bf16.gmra.mrb[0].mxu0 %v1355
    %v1486 = vpop.f32.mrb[0].mxu0
    %v1487 = vadd.f32 0.0, %v1486
    %v1488 = vpop.f32.mrb[0].mxu0
    %v1489 = vadd.f32 0.0, %v1488
    %v1490 = vpop.f32.mrb[0].mxu0
    %v1491 = vadd.f32 0.0, %v1490
    %v1492 = vpop.f32.mrb[0].mxu0
    %v1493 = vadd.f32 0.0, %v1492
    %1494 = vmatprep.mubr.bf16.mxu0 0
    %1495 = vmatmul.mubr.bf16.gmra.mrb[0].mxu0 %v1356
    %v1496 = vpop.f32.mrb[0].mxu0
    %v1497 = vadd.f32 0.0, %v1496
    %v1498 = vpop.f32.mrb[0].mxu0
    %v1499 = vadd.f32 0.0, %v1498
    %v1500 = vpop.f32.mrb[0].mxu0
    %v1501 = vadd.f32 0.0, %v1500
    %v1502 = vpop.f32.mrb[0].mxu0
    %v1503 = vadd.f32 0.0, %v1502
    %1504 = vmatprep.mubr.bf16.mxu0 0
    %1505 = vmatmul.mubr.bf16.gmra.mrb[0].mxu0 %v1357
    %v1506 = vpop.f32.mrb[0].mxu0
    %v1507 = vadd.f32 0.0, %v1506
    %v1508 = vpop.f32.mrb[0].mxu0
    %v1509 = vadd.f32 0.0, %v1508
    %v1510 = vpop.f32.mrb[0].mxu0
    %v1511 = vadd.f32 0.0, %v1510
    %v1512 = vpop.f32.mrb[0].mxu0
    %v1513 = vadd.f32 0.0, %v1512
    %1514 = vmatprep.mubr.bf16.mxu0 0
    %1515 = vmatmul.mubr.bf16.gmra.mrb[0].mxu0 %v1358
    %v1516 = vpop.f32.mrb[0].mxu0
    %v1517 = vadd.f32 0.0, %v1516
    %v1518 = vpop.f32.mrb[0].mxu0
    %v1519 = vadd.f32 0.0, %v1518
    %v1520 = vpop.f32.mrb[0].mxu0
    %v1521 = vadd.f32 0.0, %v1520
    %v1522 = vpop.f32.mrb[0].mxu0
    %v1523 = vadd.f32 0.0, %v1522
    %1524 = vmatprep.mubr.bf16.mxu0 0
    %1525 = vmatmul.mubr.bf16.gmra.mrb[0].mxu0 %v1359
    %v1526 = vpop.f32.mrb[0].mxu0
    %v1527 = vadd.f32 0.0, %v1526
    %v1528 = vpop.f32.mrb[0].mxu0
    %v1529 = vadd.f32 0.0, %v1528
    %v1530 = vpop.f32.mrb[0].mxu0
    %v1531 = vadd.f32 0.0, %v1530
    %v1532 = vpop.f32.mrb[0].mxu0
    %v1533 = vadd.f32 0.0, %v1532
    %1534 = vmatprep.mubr.bf16.mxu0 0
    %1535 = vmatmul.mubr.bf16.gmra.mrb[0].mxu0 %v1360
    %v1536 = vpop.f32.mrb[0].mxu0
    %v1537 = vadd.f32 0.0, %v1536
    %v1538 = vpop.f32.mrb[0].mxu0
    %v1539 = vadd.f32 0.0, %v1538
    %v1540 = vpop.f32.mrb[0].mxu0
    %v1541 = vadd.f32 0.0, %v1540
    %v1542 = vpop.f32.mrb[0].mxu0
    %v1543 = vadd.f32 0.0, %v1542
    %1544 = vmatprep.mubr.bf16.mxu0 0
    %1545 = vmatmul.mubr.bf16.gmra.mrb[0].mxu0 %v1361
    %v1546 = vpop.f32.mrb[0].mxu0
    %v1547 = vadd.f32 0.0, %v1546
    %v1548 = vpop.f32.mrb[0].mxu0
    %v1549 = vadd.f32 0.0, %v1548
    %v1550 = vpop.f32.mrb[0].mxu0
    %v1551 = vadd.f32 0.0, %v1550
    %v1552 = vpop.f32.mrb[0].mxu0
    %v1553 = vadd.f32 0.0, %v1552
    %1554 = vdwg.mxu0
    %v1555 = vsel %vm954, %v1397, -1e+30
    %v1556 = vsel %vm955, %v1399, -1e+30
    %v1557 = vsel %vm956, %v1401, -1e+30
    %v1558 = vsel %vm957, %v1403, -1e+30
    %v1559 = vsel %vm958, %v1407, -1e+30
    %v1560 = vsel %vm959, %v1409, -1e+30
    %v1561 = vsel %vm960, %v1411, -1e+30
    %v1562 = vsel %vm961, %v1413, -1e+30
    %v1563 = vsel %vm962, %v1417, -1e+30
    %v1564 = vsel %vm963, %v1419, -1e+30
    %v1565 = vsel %vm964, %v1421, -1e+30
    %v1566 = vsel %vm965, %v1423, -1e+30
    %v1567 = vsel %vm966, %v1427, -1e+30
    %v1568 = vsel %vm967, %v1429, -1e+30
    %v1569 = vsel %vm968, %v1431, -1e+30
    %v1570 = vsel %vm969, %v1433, -1e+30
    %v1571 = vsel %vm970, %v1437, -1e+30
    %v1572 = vsel %vm971, %v1439, -1e+30
    %v1573 = vsel %vm972, %v1441, -1e+30
    %v1574 = vsel %vm973, %v1443, -1e+30
    %v1575 = vsel %vm974, %v1447, -1e+30
    %v1576 = vsel %vm975, %v1449, -1e+30
    %v1577 = vsel %vm976, %v1451, -1e+30
    %v1578 = vsel %vm977, %v1453, -1e+30
    %v1579 = vsel %vm978, %v1457, -1e+30
    %v1580 = vsel %vm979, %v1459, -1e+30
    %v1581 = vsel %vm980, %v1461, -1e+30
    %v1582 = vsel %vm981, %v1463, -1e+30
    %v1583 = vsel %vm982, %v1467, -1e+30
    %v1584 = vsel %vm983, %v1469, -1e+30
    %v1585 = vsel %vm984, %v1471, -1e+30
    %v1586 = vsel %vm985, %v1473, -1e+30
    %v1587 = vsel %vm986, %v1477, -1e+30
    %v1588 = vsel %vm987, %v1479, -1e+30
    %v1589 = vsel %vm988, %v1481, -1e+30
    %v1590 = vsel %vm989, %v1483, -1e+30
    %v1591 = vsel %vm990, %v1487, -1e+30
    %v1592 = vsel %vm991, %v1489, -1e+30
    %v1593 = vsel %vm992, %v1491, -1e+30
    %v1594 = vsel %vm993, %v1493, -1e+30
    %v1595 = vsel %vm994, %v1497, -1e+30
    %v1596 = vsel %vm995, %v1499, -1e+30
    %v1597 = vsel %vm996, %v1501, -1e+30
    %v1598 = vsel %vm997, %v1503, -1e+30
    %v1599 = vsel %vm998, %v1507, -1e+30
    %v1600 = vsel %vm999, %v1509, -1e+30
    %v1601 = vsel %vm1000, %v1511, -1e+30
    %v1602 = vsel %vm1001, %v1513, -1e+30
    %v1603 = vsel %vm1002, %v1517, -1e+30
    %v1604 = vsel %vm1003, %v1519, -1e+30
    %v1605 = vsel %vm1004, %v1521, -1e+30
    %v1606 = vsel %vm1005, %v1523, -1e+30
    %v1607 = vsel %vm1006, %v1527, -1e+30
    %v1608 = vsel %vm1007, %v1529, -1e+30
    %v1609 = vsel %vm1008, %v1531, -1e+30
    %v1610 = vsel %vm1009, %v1533, -1e+30
    %v1611 = vsel %vm1010, %v1537, -1e+30
    %v1612 = vsel %vm1011, %v1539, -1e+30
    %v1613 = vsel %vm1012, %v1541, -1e+30
    %v1614 = vsel %vm1013, %v1543, -1e+30
    %v1615 = vsel %vm1014, %v1547, -1e+30
    %v1616 = vsel %vm1015, %v1549, -1e+30
    %v1617 = vsel %vm1016, %v1551, -1e+30
    %v1618 = vsel %vm1017, %v1553, -1e+30
    %v1619 = vmax.f32 %v1555, %v1556
    %1620 = vmax.xlane.f32.xlu0 %v1619
    %v1621 = vpop.xlane.xlu0 %1620
    %v1622 = vmax.f32 %v1557, %v1558
    %1623 = vmax.xlane.f32.xlu0 %v1622
    %v1624 = vpop.xlane.xlu0 %1623
    %v1625 = vmax.f32 %v1559, %v1560
    %1626 = vmax.xlane.f32.xlu0 %v1625
    %v1627 = vpop.xlane.xlu0 %1626
    %v1628 = vmax.f32 %v1561, %v1562
    %1629 = vmax.xlane.f32.xlu0 %v1628
    %v1630 = vpop.xlane.xlu0 %1629
    %v1631 = vmax.f32 %v1563, %v1564
    %1632 = vmax.xlane.f32.xlu0 %v1631
    %v1633 = vpop.xlane.xlu0 %1632
    %v1634 = vmax.f32 %v1565, %v1566
    %1635 = vmax.xlane.f32.xlu0 %v1634
    %v1636 = vpop.xlane.xlu0 %1635
    %v1637 = vmax.f32 %v1567, %v1568
    %1638 = vmax.xlane.f32.xlu0 %v1637
    %v1639 = vpop.xlane.xlu0 %1638
    %v1640 = vmax.f32 %v1569, %v1570
    %1641 = vmax.xlane.f32.xlu0 %v1640
    %v1642 = vpop.xlane.xlu0 %1641
    %v1643 = vmax.f32 %v1571, %v1572
    %1644 = vmax.xlane.f32.xlu0 %v1643
    %v1645 = vpop.xlane.xlu0 %1644
    %v1646 = vmax.f32 %v1573, %v1574
    %1647 = vmax.xlane.f32.xlu0 %v1646
    %v1648 = vpop.xlane.xlu0 %1647
    %v1649 = vmax.f32 %v1575, %v1576
    %1650 = vmax.xlane.f32.xlu0 %v1649
    %v1651 = vpop.xlane.xlu0 %1650
    %v1652 = vmax.f32 %v1577, %v1578
    %1653 = vmax.xlane.f32.xlu0 %v1652
    %v1654 = vpop.xlane.xlu0 %1653
    %v1655 = vmax.f32 %v1579, %v1580
    %1656 = vmax.xlane.f32.xlu0 %v1655
    %v1657 = vpop.xlane.xlu0 %1656
    %v1658 = vmax.f32 %v1581, %v1582
    %1659 = vmax.xlane.f32.xlu0 %v1658
    %v1660 = vpop.xlane.xlu0 %1659
    %v1661 = vmax.f32 %v1583, %v1584
    %1662 = vmax.xlane.f32.xlu0 %v1661
    %v1663 = vpop.xlane.xlu0 %1662
    %v1664 = vmax.f32 %v1585, %v1586
    %1665 = vmax.xlane.f32.xlu0 %v1664
    %v1666 = vpop.xlane.xlu0 %1665
    %v1667 = vmax.f32 %v1587, %v1588
    %1668 = vmax.xlane.f32.xlu0 %v1667
    %v1669 = vpop.xlane.xlu0 %1668
    %v1670 = vmax.f32 %v1589, %v1590
    %1671 = vmax.xlane.f32.xlu0 %v1670
    %v1672 = vpop.xlane.xlu0 %1671
    %v1673 = vmax.f32 %v1591, %v1592
    %1674 = vmax.xlane.f32.xlu0 %v1673
    %v1675 = vpop.xlane.xlu0 %1674
    %v1676 = vmax.f32 %v1593, %v1594
    %1677 = vmax.xlane.f32.xlu0 %v1676
    %v1678 = vpop.xlane.xlu0 %1677
    %v1679 = vmax.f32 %v1595, %v1596
    %1680 = vmax.xlane.f32.xlu0 %v1679
    %v1681 = vpop.xlane.xlu0 %1680
    %v1682 = vmax.f32 %v1597, %v1598
    %1683 = vmax.xlane.f32.xlu0 %v1682
    %v1684 = vpop.xlane.xlu0 %1683
    %v1685 = vmax.f32 %v1599, %v1600
    %1686 = vmax.xlane.f32.xlu0 %v1685
    %v1687 = vpop.xlane.xlu0 %1686
    %v1688 = vmax.f32 %v1601, %v1602
    %1689 = vmax.xlane.f32.xlu0 %v1688
    %v1690 = vpop.xlane.xlu0 %1689
    %v1691 = vmax.f32 %v1603, %v1604
    %1692 = vmax.xlane.f32.xlu0 %v1691
    %v1693 = vpop.xlane.xlu0 %1692
    %v1694 = vmax.f32 %v1605, %v1606
    %1695 = vmax.xlane.f32.xlu0 %v1694
    %v1696 = vpop.xlane.xlu0 %1695
    %v1697 = vmax.f32 %v1607, %v1608
    %1698 = vmax.xlane.f32.xlu0 %v1697
    %v1699 = vpop.xlane.xlu0 %1698
    %v1700 = vmax.f32 %v1609, %v1610
    %1701 = vmax.xlane.f32.xlu0 %v1700
    %v1702 = vpop.xlane.xlu0 %1701
    %v1703 = vmax.f32 %v1611, %v1612
    %1704 = vmax.xlane.f32.xlu0 %v1703
    %v1705 = vpop.xlane.xlu0 %1704
    %v1706 = vmax.f32 %v1613, %v1614
    %1707 = vmax.xlane.f32.xlu0 %v1706
    %v1708 = vpop.xlane.xlu0 %1707
    %v1709 = vmax.f32 %v1615, %v1616
    %1710 = vmax.xlane.f32.xlu0 %v1709
    %v1711 = vpop.xlane.xlu0 %1710
    %v1712 = vmax.f32 %v1617, %v1618
    %1713 = vmax.xlane.f32.xlu0 %v1712
    %v1714 = vpop.xlane.xlu0 %1713
    %v1715 = vsub.f32 %v1555, %v1621
    %v1716 = vsub.f32 %v1556, %v1621
    %v1717 = vsub.f32 %v1557, %v1624
    %v1718 = vsub.f32 %v1558, %v1624
    %v1719 = vsub.f32 %v1559, %v1627
    %v1720 = vsub.f32 %v1560, %v1627
    %v1721 = vsub.f32 %v1561, %v1630
    %v1722 = vsub.f32 %v1562, %v1630
    %v1723 = vsub.f32 %v1563, %v1633
    %v1724 = vsub.f32 %v1564, %v1633
    %v1725 = vsub.f32 %v1565, %v1636
    %v1726 = vsub.f32 %v1566, %v1636
    %v1727 = vsub.f32 %v1567, %v1639
    %v1728 = vsub.f32 %v1568, %v1639
    %v1729 = vsub.f32 %v1569, %v1642
    %v1730 = vsub.f32 %v1570, %v1642
    %v1731 = vsub.f32 %v1571, %v1645
    %v1732 = vsub.f32 %v1572, %v1645
    %v1733 = vsub.f32 %v1573, %v1648
    %v1734 = vsub.f32 %v1574, %v1648
    %v1735 = vsub.f32 %v1575, %v1651
    %v1736 = vsub.f32 %v1576, %v1651
    %v1737 = vsub.f32 %v1577, %v1654
    %v1738 = vsub.f32 %v1578, %v1654
    %v1739 = vsub.f32 %v1579, %v1657
    %v1740 = vsub.f32 %v1580, %v1657
    %v1741 = vsub.f32 %v1581, %v1660
    %v1742 = vsub.f32 %v1582, %v1660
    %v1743 = vsub.f32 %v1583, %v1663
    %v1744 = vsub.f32 %v1584, %v1663
    %v1745 = vsub.f32 %v1585, %v1666
    %v1746 = vsub.f32 %v1586, %v1666
    %v1747 = vsub.f32 %v1587, %v1669
    %v1748 = vsub.f32 %v1588, %v1669
    %v1749 = vsub.f32 %v1589, %v1672
    %v1750 = vsub.f32 %v1590, %v1672
    %v1751 = vsub.f32 %v1591, %v1675
    %v1752 = vsub.f32 %v1592, %v1675
    %v1753 = vsub.f32 %v1593, %v1678
    %v1754 = vsub.f32 %v1594, %v1678
    %v1755 = vsub.f32 %v1595, %v1681
    %v1756 = vsub.f32 %v1596, %v1681
    %v1757 = vsub.f32 %v1597, %v1684
    %v1758 = vsub.f32 %v1598, %v1684
    %v1759 = vsub.f32 %v1599, %v1687
    %v1760 = vsub.f32 %v1600, %v1687
    %v1761 = vsub.f32 %v1601, %v1690
    %v1762 = vsub.f32 %v1602, %v1690
    %v1763 = vsub.f32 %v1603, %v1693
    %v1764 = vsub.f32 %v1604, %v1693
    %v1765 = vsub.f32 %v1605, %v1696
    %v1766 = vsub.f32 %v1606, %v1696
    %v1767 = vsub.f32 %v1607, %v1699
    %v1768 = vsub.f32 %v1608, %v1699
    %v1769 = vsub.f32 %v1609, %v1702
    %v1770 = vsub.f32 %v1610, %v1702
    %v1771 = vsub.f32 %v1611, %v1705
    %v1772 = vsub.f32 %v1612, %v1705
    %v1773 = vsub.f32 %v1613, %v1708
    %v1774 = vsub.f32 %v1614, %v1708
    %v1775 = vsub.f32 %v1615, %v1711
    %v1776 = vsub.f32 %v1616, %v1711
    %v1777 = vsub.f32 %v1617, %v1714
    %v1778 = vsub.f32 %v1618, %v1714
    %v1779 = vmul.f32 %v1715, 1.442695
    %v1780 = vpow.pop %v1779
    %v1781 = vmul.f32 %v1716, 1.442695
    %v1782 = vpow.pop %v1781
    %v1783 = vmul.f32 %v1717, 1.442695
    %v1784 = vpow.pop %v1783
    %v1785 = vmul.f32 %v1718, 1.442695
    %v1786 = vpow.pop %v1785
    %v1787 = vmul.f32 %v1719, 1.442695
    %v1788 = vpow.pop %v1787
    %v1789 = vmul.f32 %v1720, 1.442695
    %v1790 = vpow.pop %v1789
    %v1791 = vmul.f32 %v1721, 1.442695
    %v1792 = vpow.pop %v1791
    %v1793 = vmul.f32 %v1722, 1.442695
    %v1794 = vpow.pop %v1793
    %v1795 = vmul.f32 %v1723, 1.442695
    %v1796 = vpow.pop %v1795
    %v1797 = vmul.f32 %v1724, 1.442695
    %v1798 = vpow.pop %v1797
    %v1799 = vmul.f32 %v1725, 1.442695
    %v1800 = vpow.pop %v1799
    %v1801 = vmul.f32 %v1726, 1.442695
    %v1802 = vpow.pop %v1801
    %v1803 = vmul.f32 %v1727, 1.442695
    %v1804 = vpow.pop %v1803
    %v1805 = vmul.f32 %v1728, 1.442695
    %v1806 = vpow.pop %v1805
    %v1807 = vmul.f32 %v1729, 1.442695
    %v1808 = vpow.pop %v1807
    %v1809 = vmul.f32 %v1730, 1.442695
    %v1810 = vpow.pop %v1809
    %v1811 = vmul.f32 %v1731, 1.442695
    %v1812 = vpow.pop %v1811
    %v1813 = vmul.f32 %v1732, 1.442695
    %v1814 = vpow.pop %v1813
    %v1815 = vmul.f32 %v1733, 1.442695
    %v1816 = vpow.pop %v1815
    %v1817 = vmul.f32 %v1734, 1.442695
    %v1818 = vpow.pop %v1817
    %v1819 = vmul.f32 %v1735, 1.442695
    %v1820 = vpow.pop %v1819
    %v1821 = vmul.f32 %v1736, 1.442695
    %v1822 = vpow.pop %v1821
    %v1823 = vmul.f32 %v1737, 1.442695
    %v1824 = vpow.pop %v1823
    %v1825 = vmul.f32 %v1738, 1.442695
    %v1826 = vpow.pop %v1825
    %v1827 = vmul.f32 %v1739, 1.442695
    %v1828 = vpow.pop %v1827
    %v1829 = vmul.f32 %v1740, 1.442695
    %v1830 = vpow.pop %v1829
    %v1831 = vmul.f32 %v1741, 1.442695
    %v1832 = vpow.pop %v1831
    %v1833 = vmul.f32 %v1742, 1.442695
    %v1834 = vpow.pop %v1833
    %v1835 = vmul.f32 %v1743, 1.442695
    %v1836 = vpow.pop %v1835
    %v1837 = vmul.f32 %v1744, 1.442695
    %v1838 = vpow.pop %v1837
    %v1839 = vmul.f32 %v1745, 1.442695
    %v1840 = vpow.pop %v1839
    %v1841 = vmul.f32 %v1746, 1.442695
    %v1842 = vpow.pop %v1841
    %v1843 = vmul.f32 %v1747, 1.442695
    %v1844 = vpow.pop %v1843
    %v1845 = vmul.f32 %v1748, 1.442695
    %v1846 = vpow.pop %v1845
    %v1847 = vmul.f32 %v1749, 1.442695
    %v1848 = vpow.pop %v1847
    %v1849 = vmul.f32 %v1750, 1.442695
    %v1850 = vpow.pop %v1849
    %v1851 = vmul.f32 %v1751, 1.442695
    %v1852 = vpow.pop %v1851
    %v1853 = vmul.f32 %v1752, 1.442695
    %v1854 = vpow.pop %v1853
    %v1855 = vmul.f32 %v1753, 1.442695
    %v1856 = vpow.pop %v1855
    %v1857 = vmul.f32 %v1754, 1.442695
    %v1858 = vpow.pop %v1857
    %v1859 = vmul.f32 %v1755, 1.442695
    %v1860 = vpow.pop %v1859
    %v1861 = vmul.f32 %v1756, 1.442695
    %v1862 = vpow.pop %v1861
    %v1863 = vmul.f32 %v1757, 1.442695
    %v1864 = vpow.pop %v1863
    %v1865 = vmul.f32 %v1758, 1.442695
    %v1866 = vpow.pop %v1865
    %v1867 = vmul.f32 %v1759, 1.442695
    %v1868 = vpow.pop %v1867
    %v1869 = vmul.f32 %v1760, 1.442695
    %v1870 = vpow.pop %v1869
    %v1871 = vmul.f32 %v1761, 1.442695
    %v1872 = vpow.pop %v1871
    %v1873 = vmul.f32 %v1762, 1.442695
    %v1874 = vpow.pop %v1873
    %v1875 = vmul.f32 %v1763, 1.442695
    %v1876 = vpow.pop %v1875
    %v1877 = vmul.f32 %v1764, 1.442695
    %v1878 = vpow.pop %v1877
    %v1879 = vmul.f32 %v1765, 1.442695
    %v1880 = vpow.pop %v1879
    %v1881 = vmul.f32 %v1766, 1.442695
    %v1882 = vpow.pop %v1881
    %v1883 = vmul.f32 %v1767, 1.442695
    %v1884 = vpow.pop %v1883
    %v1885 = vmul.f32 %v1768, 1.442695
    %v1886 = vpow.pop %v1885
    %v1887 = vmul.f32 %v1769, 1.442695
    %v1888 = vpow.pop %v1887
    %v1889 = vmul.f32 %v1770, 1.442695
    %v1890 = vpow.pop %v1889
    %v1891 = vmul.f32 %v1771, 1.442695
    %v1892 = vpow.pop %v1891
    %v1893 = vmul.f32 %v1772, 1.442695
    %v1894 = vpow.pop %v1893
    %v1895 = vmul.f32 %v1773, 1.442695
    %v1896 = vpow.pop %v1895
    %v1897 = vmul.f32 %v1774, 1.442695
    %v1898 = vpow.pop %v1897
    %v1899 = vmul.f32 %v1775, 1.442695
    %v1900 = vpow.pop %v1899
    %v1901 = vmul.f32 %v1776, 1.442695
    %v1902 = vpow.pop %v1901
    %v1903 = vmul.f32 %v1777, 1.442695
    %v1904 = vpow.pop %v1903
    %v1905 = vmul.f32 %v1778, 1.442695
    %v1906 = vpow.pop %v1905
    %v1907 = vadd.f32 %v1780, %v1782
    %1908 = vadd.xlane.f32.xlu0 %v1907
    %v1909 = vpop.xlane.xlu0 %1908
    %v1910 = vadd.f32 %v1784, %v1786
    %1911 = vadd.xlane.f32.xlu0 %v1910
    %v1912 = vpop.xlane.xlu0 %1911
    %v1913 = vadd.f32 %v1788, %v1790
    %1914 = vadd.xlane.f32.xlu0 %v1913
    %v1915 = vpop.xlane.xlu0 %1914
    %v1916 = vadd.f32 %v1792, %v1794
    %1917 = vadd.xlane.f32.xlu0 %v1916
    %v1918 = vpop.xlane.xlu0 %1917
    %v1919 = vadd.f32 %v1796, %v1798
    %1920 = vadd.xlane.f32.xlu0 %v1919
    %v1921 = vpop.xlane.xlu0 %1920
    %v1922 = vadd.f32 %v1800, %v1802
    %1923 = vadd.xlane.f32.xlu0 %v1922
    %v1924 = vpop.xlane.xlu0 %1923
    %v1925 = vadd.f32 %v1804, %v1806
    %1926 = vadd.xlane.f32.xlu0 %v1925
    %v1927 = vpop.xlane.xlu0 %1926
    %v1928 = vadd.f32 %v1808, %v1810
    %1929 = vadd.xlane.f32.xlu0 %v1928
    %v1930 = vpop.xlane.xlu0 %1929
    %v1931 = vadd.f32 %v1812, %v1814
    %1932 = vadd.xlane.f32.xlu0 %v1931
    %v1933 = vpop.xlane.xlu0 %1932
    %v1934 = vadd.f32 %v1816, %v1818
    %1935 = vadd.xlane.f32.xlu0 %v1934
    %v1936 = vpop.xlane.xlu0 %1935
    %v1937 = vadd.f32 %v1820, %v1822
    %1938 = vadd.xlane.f32.xlu0 %v1937
    %v1939 = vpop.xlane.xlu0 %1938
    %v1940 = vadd.f32 %v1824, %v1826
    %1941 = vadd.xlane.f32.xlu0 %v1940
    %v1942 = vpop.xlane.xlu0 %1941
    %v1943 = vadd.f32 %v1828, %v1830
    %1944 = vadd.xlane.f32.xlu0 %v1943
    %v1945 = vpop.xlane.xlu0 %1944
    %v1946 = vadd.f32 %v1832, %v1834
    %1947 = vadd.xlane.f32.xlu0 %v1946
    %v1948 = vpop.xlane.xlu0 %1947
    %v1949 = vadd.f32 %v1836, %v1838
    %1950 = vadd.xlane.f32.xlu0 %v1949
    %v1951 = vpop.xlane.xlu0 %1950
    %v1952 = vadd.f32 %v1840, %v1842
    %1953 = vadd.xlane.f32.xlu0 %v1952
    %v1954 = vpop.xlane.xlu0 %1953
    %v1955 = vadd.f32 %v1844, %v1846
    %1956 = vadd.xlane.f32.xlu0 %v1955
    %v1957 = vpop.xlane.xlu0 %1956
    %v1958 = vadd.f32 %v1848, %v1850
    %1959 = vadd.xlane.f32.xlu0 %v1958
    %v1960 = vpop.xlane.xlu0 %1959
    %v1961 = vadd.f32 %v1852, %v1854
    %1962 = vadd.xlane.f32.xlu0 %v1961
    %v1963 = vpop.xlane.xlu0 %1962
    %v1964 = vadd.f32 %v1856, %v1858
    %1965 = vadd.xlane.f32.xlu0 %v1964
    %v1966 = vpop.xlane.xlu0 %1965
    %v1967 = vadd.f32 %v1860, %v1862
    %1968 = vadd.xlane.f32.xlu0 %v1967
    %v1969 = vpop.xlane.xlu0 %1968
    %v1970 = vadd.f32 %v1864, %v1866
    %1971 = vadd.xlane.f32.xlu0 %v1970
    %v1972 = vpop.xlane.xlu0 %1971
    %v1973 = vadd.f32 %v1868, %v1870
    %1974 = vadd.xlane.f32.xlu0 %v1973
    %v1975 = vpop.xlane.xlu0 %1974
    %v1976 = vadd.f32 %v1872, %v1874
    %1977 = vadd.xlane.f32.xlu0 %v1976
    %v1978 = vpop.xlane.xlu0 %1977
    %v1979 = vadd.f32 %v1876, %v1878
    %1980 = vadd.xlane.f32.xlu0 %v1979
    %v1981 = vpop.xlane.xlu0 %1980
    %v1982 = vadd.f32 %v1880, %v1882
    %1983 = vadd.xlane.f32.xlu0 %v1982
    %v1984 = vpop.xlane.xlu0 %1983
    %v1985 = vadd.f32 %v1884, %v1886
    %1986 = vadd.xlane.f32.xlu0 %v1985
    %v1987 = vpop.xlane.xlu0 %1986
    %v1988 = vadd.f32 %v1888, %v1890
    %1989 = vadd.xlane.f32.xlu0 %v1988
    %v1990 = vpop.xlane.xlu0 %1989
    %v1991 = vadd.f32 %v1892, %v1894
    %1992 = vadd.xlane.f32.xlu0 %v1991
    %v1993 = vpop.xlane.xlu0 %1992
    %v1994 = vadd.f32 %v1896, %v1898
    %1995 = vadd.xlane.f32.xlu0 %v1994
    %v1996 = vpop.xlane.xlu0 %1995
    %v1997 = vadd.f32 %v1900, %v1902
    %1998 = vadd.xlane.f32.xlu0 %v1997
    %v1999 = vpop.xlane.xlu0 %1998
    %v2000 = vadd.f32 %v1904, %v1906
    %2001 = vadd.xlane.f32.xlu0 %v2000
    %v2002 = vpop.xlane.xlu0 %2001
    %v2003 = vrcp.pop %v1909
    %v2004 = vrcp.pop %v1912
    %v2005 = vrcp.pop %v1915
    %v2006 = vrcp.pop %v1918
    %v2007 = vrcp.pop %v1921
    %v2008 = vrcp.pop %v1924
    %v2009 = vrcp.pop %v1927
    %v2010 = vrcp.pop %v1930
    %v2011 = vrcp.pop %v1933
    %v2012 = vrcp.pop %v1936
    %v2013 = vrcp.pop %v1939
    %v2014 = vrcp.pop %v1942
    %v2015 = vrcp.pop %v1945
    %v2016 = vrcp.pop %v1948
    %v2017 = vrcp.pop %v1951
    %v2018 = vrcp.pop %v1954
    %v2019 = vrcp.pop %v1957
    %v2020 = vrcp.pop %v1960
    %v2021 = vrcp.pop %v1963
    %v2022 = vrcp.pop %v1966
    %v2023 = vrcp.pop %v1969
    %v2024 = vrcp.pop %v1972
    %v2025 = vrcp.pop %v1975
    %v2026 = vrcp.pop %v1978
    %v2027 = vrcp.pop %v1981
    %v2028 = vrcp.pop %v1984
    %v2029 = vrcp.pop %v1987
    %v2030 = vrcp.pop %v1990
    %v2031 = vrcp.pop %v1993
    %v2032 = vrcp.pop %v1996
    %v2033 = vrcp.pop %v1999
    %v2034 = vrcp.pop %v2002
    %v2035 = vmul.f32 %v1780, %v2003
    %v2036 = vmul.f32 %v1782, %v2003
    %v2037 = vmul.f32 %v1784, %v2004
    %v2038 = vmul.f32 %v1786, %v2004
    %v2039 = vmul.f32 %v1788, %v2005
    %v2040 = vmul.f32 %v1790, %v2005
    %v2041 = vmul.f32 %v1792, %v2006
    %v2042 = vmul.f32 %v1794, %v2006
    %v2043 = vmul.f32 %v1796, %v2007
    %v2044 = vmul.f32 %v1798, %v2007
    %v2045 = vmul.f32 %v1800, %v2008
    %v2046 = vmul.f32 %v1802, %v2008
    %v2047 = vmul.f32 %v1804, %v2009
    %v2048 = vmul.f32 %v1806, %v2009
    %v2049 = vmul.f32 %v1808, %v2010
    %v2050 = vmul.f32 %v1810, %v2010
    %v2051 = vmul.f32 %v1812, %v2011
    %v2052 = vmul.f32 %v1814, %v2011
    %v2053 = vmul.f32 %v1816, %v2012
    %v2054 = vmul.f32 %v1818, %v2012
    %v2055 = vmul.f32 %v1820, %v2013
    %v2056 = vmul.f32 %v1822, %v2013
    %v2057 = vmul.f32 %v1824, %v2014
    %v2058 = vmul.f32 %v1826, %v2014
    %v2059 = vmul.f32 %v1828, %v2015
    %v2060 = vmul.f32 %v1830, %v2015
    %v2061 = vmul.f32 %v1832, %v2016
    %v2062 = vmul.f32 %v1834, %v2016
    %v2063 = vmul.f32 %v1836, %v2017
    %v2064 = vmul.f32 %v1838, %v2017
    %v2065 = vmul.f32 %v1840, %v2018
    %v2066 = vmul.f32 %v1842, %v2018
    %v2067 = vmul.f32 %v1844, %v2019
    %v2068 = vmul.f32 %v1846, %v2019
    %v2069 = vmul.f32 %v1848, %v2020
    %v2070 = vmul.f32 %v1850, %v2020
    %v2071 = vmul.f32 %v1852, %v2021
    %v2072 = vmul.f32 %v1854, %v2021
    %v2073 = vmul.f32 %v1856, %v2022
    %v2074 = vmul.f32 %v1858, %v2022
    %v2075 = vmul.f32 %v1860, %v2023
    %v2076 = vmul.f32 %v1862, %v2023
    %v2077 = vmul.f32 %v1864, %v2024
    %v2078 = vmul.f32 %v1866, %v2024
    %v2079 = vmul.f32 %v1868, %v2025
    %v2080 = vmul.f32 %v1870, %v2025
    %v2081 = vmul.f32 %v1872, %v2026
    %v2082 = vmul.f32 %v1874, %v2026
    %v2083 = vmul.f32 %v1876, %v2027
    %v2084 = vmul.f32 %v1878, %v2027
    %v2085 = vmul.f32 %v1880, %v2028
    %v2086 = vmul.f32 %v1882, %v2028
    %v2087 = vmul.f32 %v1884, %v2029
    %v2088 = vmul.f32 %v1886, %v2029
    %v2089 = vmul.f32 %v1888, %v2030
    %v2090 = vmul.f32 %v1890, %v2030
    %v2091 = vmul.f32 %v1892, %v2031
    %v2092 = vmul.f32 %v1894, %v2031
    %v2093 = vmul.f32 %v1896, %v2032
    %v2094 = vmul.f32 %v1898, %v2032
    %v2095 = vmul.f32 %v1900, %v2033
    %v2096 = vmul.f32 %v1902, %v2033
    %v2097 = vmul.f32 %v1904, %v2034
    %v2098 = vmul.f32 %v1906, %v2034
    %v2099 = vpack.c.bf16 %v2037, %v2035
    %v2100 = vpack.c.bf16 %v2038, %v2036
    %v2101 = vpack.c.bf16 %v2041, %v2039
    %v2102 = vpack.c.bf16 %v2042, %v2040
    %v2103 = vpack.c.bf16 %v2045, %v2043
    %v2104 = vpack.c.bf16 %v2046, %v2044
    %v2105 = vpack.c.bf16 %v2049, %v2047
    %v2106 = vpack.c.bf16 %v2050, %v2048
    %v2107 = vpack.c.bf16 %v2053, %v2051
    %v2108 = vpack.c.bf16 %v2054, %v2052
    %v2109 = vpack.c.bf16 %v2057, %v2055
    %v2110 = vpack.c.bf16 %v2058, %v2056
    %v2111 = vpack.c.bf16 %v2061, %v2059
    %v2112 = vpack.c.bf16 %v2062, %v2060
    %v2113 = vpack.c.bf16 %v2065, %v2063
    %v2114 = vpack.c.bf16 %v2066, %v2064
    %v2115 = vpack.c.bf16 %v2069, %v2067
    %v2116 = vpack.c.bf16 %v2070, %v2068
    %v2117 = vpack.c.bf16 %v2073, %v2071
    %v2118 = vpack.c.bf16 %v2074, %v2072
    %v2119 = vpack.c.bf16 %v2077, %v2075
    %v2120 = vpack.c.bf16 %v2078, %v2076
    %v2121 = vpack.c.bf16 %v2081, %v2079
    %v2122 = vpack.c.bf16 %v2082, %v2080
    %v2123 = vpack.c.bf16 %v2085, %v2083
    %v2124 = vpack.c.bf16 %v2086, %v2084
    %v2125 = vpack.c.bf16 %v2089, %v2087
    %v2126 = vpack.c.bf16 %v2090, %v2088
    %v2127 = vpack.c.bf16 %v2093, %v2091
    %v2128 = vpack.c.bf16 %v2094, %v2092
    %v2129 = vpack.c.bf16 %v2097, %v2095
    %v2130 = vpack.c.bf16 %v2098, %v2096
    %2131 = vmatprep.subr.bf16.mxu0 0
    %2132 = vmatpush1.bf16.msra.mxu0 %v902
    %2133 = vmatprep.subr.bf16.mxu0 0
    %2134 = vmatpush1.bf16.msra.mxu0 %v903
    %2135 = vmatprep.subr.bf16.mxu0 0
    %2136 = vmatpush1.bf16.msra.mxu0 %v904
    %2137 = vmatprep.subr.bf16.mxu0 0
    %2138 = vmatpush1.bf16.msra.mxu0 %v905
    %2139 = vmatprep.subr.bf16.mxu0 0
    %2140 = vmatpush1.bf16.msra.mxu0 %v906
    %2141 = vmatprep.subr.bf16.mxu0 0
    %2142 = vmatpush1.bf16.msra.mxu0 %v907
    %2143 = vmatprep.subr.bf16.mxu0 0
    %2144 = vmatpush1.bf16.msra.mxu0 %v908
    %2145 = vmatprep.subr.bf16.mxu0 0
    %2146 = vmatpush1.bf16.msra.mxu0 %v909
    %2147 = vmatprep.subr.bf16.mxu0 0
    %2148 = vmatpush1.bf16.msra.mxu0 %v910
    %2149 = vmatprep.subr.bf16.mxu0 0
    %2150 = vmatpush1.bf16.msra.mxu0 %v911
    %2151 = vmatprep.subr.bf16.mxu0 0
    %2152 = vmatpush1.bf16.msra.mxu0 %v912
    %2153 = vmatprep.subr.bf16.mxu0 0
    %2154 = vmatpush1.bf16.msra.mxu0 %v913
    %2155 = vmatprep.subr.bf16.mxu0 0
    %2156 = vmatpush1.bf16.msra.mxu0 %v914
    %2157 = vmatprep.subr.bf16.mxu0 0
    %2158 = vmatpush1.bf16.msra.mxu0 %v915
    %2159 = vmatprep.subr.bf16.mxu0 0
    %2160 = vmatpush1.bf16.msra.mxu0 %v916
    %2161 = vmatprep.subr.bf16.mxu0 0
    %2162 = vmatpush1.bf16.msra.mxu0 %v917
    %2163 = vmatprep.mubr.bf16.mxu0 %v2100
    %2164 = vmatmul.mubr.bf16.gmra.mrb[0].mxu0 %v2099
    %v2165 = vpop.f32.mrb[0].mxu0
    %v2166 = vadd.f32 0.0, %v2165
    %v2167 = vpop.f32.mrb[0].mxu0
    %v2168 = vpop.f32.mrb[0].mxu0
    %v2169 = vadd.f32 0.0, %v2168
    %v2170 = vpop.f32.mrb[0].mxu0
    %2171 = vmatprep.mubr.bf16.mxu0 %v2102
    %2172 = vmatmul.mubr.bf16.gmra.mrb[0].mxu0 %v2101
    %v2173 = vpop.f32.mrb[0].mxu0
    %v2174 = vadd.f32 0.0, %v2173
    %v2175 = vpop.f32.mrb[0].mxu0
    %v2176 = vpop.f32.mrb[0].mxu0
    %v2177 = vadd.f32 0.0, %v2176
    %v2178 = vpop.f32.mrb[0].mxu0
    %2179 = vmatprep.mubr.bf16.mxu0 %v2104
    %2180 = vmatmul.mubr.bf16.gmra.mrb[0].mxu0 %v2103
    %v2181 = vpop.f32.mrb[0].mxu0
    %v2182 = vadd.f32 0.0, %v2181
    %v2183 = vpop.f32.mrb[0].mxu0
    %v2184 = vpop.f32.mrb[0].mxu0
    %v2185 = vadd.f32 0.0, %v2184
    %v2186 = vpop.f32.mrb[0].mxu0
    %2187 = vmatprep.mubr.bf16.mxu0 %v2106
    %2188 = vmatmul.mubr.bf16.gmra.mrb[0].mxu0 %v2105
    %v2189 = vpop.f32.mrb[0].mxu0
    %v2190 = vadd.f32 0.0, %v2189
    %v2191 = vpop.f32.mrb[0].mxu0
    %v2192 = vpop.f32.mrb[0].mxu0
    %v2193 = vadd.f32 0.0, %v2192
    %v2194 = vpop.f32.mrb[0].mxu0
    %2195 = vmatprep.mubr.bf16.mxu0 %v2108
    %2196 = vmatmul.mubr.bf16.gmra.mrb[0].mxu0 %v2107
    %v2197 = vpop.f32.mrb[0].mxu0
    %v2198 = vadd.f32 0.0, %v2197
    %v2199 = vpop.f32.mrb[0].mxu0
    %v2200 = vpop.f32.mrb[0].mxu0
    %v2201 = vadd.f32 0.0, %v2200
    %v2202 = vpop.f32.mrb[0].mxu0
    %2203 = vmatprep.mubr.bf16.mxu0 %v2110
    %2204 = vmatmul.mubr.bf16.gmra.mrb[0].mxu0 %v2109
    %v2205 = vpop.f32.mrb[0].mxu0
    %v2206 = vadd.f32 0.0, %v2205
    %v2207 = vpop.f32.mrb[0].mxu0
    %v2208 = vpop.f32.mrb[0].mxu0
    %v2209 = vadd.f32 0.0, %v2208
    %v2210 = vpop.f32.mrb[0].mxu0
    %2211 = vmatprep.mubr.bf16.mxu0 %v2112
    %2212 = vmatmul.mubr.bf16.gmra.mrb[0].mxu0 %v2111
    %v2213 = vpop.f32.mrb[0].mxu0
    %v2214 = vadd.f32 0.0, %v2213
    %v2215 = vpop.f32.mrb[0].mxu0
    %v2216 = vpop.f32.mrb[0].mxu0
    %v2217 = vadd.f32 0.0, %v2216
    %v2218 = vpop.f32.mrb[0].mxu0
    %2219 = vmatprep.mubr.bf16.mxu0 %v2114
    %2220 = vmatmul.mubr.bf16.gmra.mrb[0].mxu0 %v2113
    %v2221 = vpop.f32.mrb[0].mxu0
    %v2222 = vadd.f32 0.0, %v2221
    %v2223 = vpop.f32.mrb[0].mxu0
    %v2224 = vpop.f32.mrb[0].mxu0
    %v2225 = vadd.f32 0.0, %v2224
    %v2226 = vpop.f32.mrb[0].mxu0
    %2227 = vmatprep.mubr.bf16.mxu0 %v2116
    %2228 = vmatmul.mubr.bf16.gmra.mrb[0].mxu0 %v2115
    %v2229 = vpop.f32.mrb[0].mxu0
    %v2230 = vadd.f32 0.0, %v2229
    %v2231 = vpop.f32.mrb[0].mxu0
    %v2232 = vpop.f32.mrb[0].mxu0
    %v2233 = vadd.f32 0.0, %v2232
    %v2234 = vpop.f32.mrb[0].mxu0
    %2235 = vmatprep.mubr.bf16.mxu0 %v2118
    %2236 = vmatmul.mubr.bf16.gmra.mrb[0].mxu0 %v2117
    %v2237 = vpop.f32.mrb[0].mxu0
    %v2238 = vadd.f32 0.0, %v2237
    %v2239 = vpop.f32.mrb[0].mxu0
    %v2240 = vpop.f32.mrb[0].mxu0
    %v2241 = vadd.f32 0.0, %v2240
    %v2242 = vpop.f32.mrb[0].mxu0
    %2243 = vmatprep.mubr.bf16.mxu0 %v2120
    %2244 = vmatmul.mubr.bf16.gmra.mrb[0].mxu0 %v2119
    %v2245 = vpop.f32.mrb[0].mxu0
    %v2246 = vadd.f32 0.0, %v2245
    %v2247 = vpop.f32.mrb[0].mxu0
    %v2248 = vpop.f32.mrb[0].mxu0
    %v2249 = vadd.f32 0.0, %v2248
    %v2250 = vpop.f32.mrb[0].mxu0
    %2251 = vmatprep.mubr.bf16.mxu0 %v2122
    %2252 = vmatmul.mubr.bf16.gmra.mrb[0].mxu0 %v2121
    %v2253 = vpop.f32.mrb[0].mxu0
    %v2254 = vadd.f32 0.0, %v2253
    %v2255 = vpop.f32.mrb[0].mxu0
    %v2256 = vpop.f32.mrb[0].mxu0
    %v2257 = vadd.f32 0.0, %v2256
    %v2258 = vpop.f32.mrb[0].mxu0
    %2259 = vmatprep.mubr.bf16.mxu0 %v2124
    %2260 = vmatmul.mubr.bf16.gmra.mrb[0].mxu0 %v2123
    %v2261 = vpop.f32.mrb[0].mxu0
    %v2262 = vadd.f32 0.0, %v2261
    %v2263 = vpop.f32.mrb[0].mxu0
    %v2264 = vpop.f32.mrb[0].mxu0
    %v2265 = vadd.f32 0.0, %v2264
    %v2266 = vpop.f32.mrb[0].mxu0
    %2267 = vmatprep.mubr.bf16.mxu0 %v2126
    %2268 = vmatmul.mubr.bf16.gmra.mrb[0].mxu0 %v2125
    %v2269 = vpop.f32.mrb[0].mxu0
    %v2270 = vadd.f32 0.0, %v2269
    %v2271 = vpop.f32.mrb[0].mxu0
    %v2272 = vpop.f32.mrb[0].mxu0
    %v2273 = vadd.f32 0.0, %v2272
    %v2274 = vpop.f32.mrb[0].mxu0
    %2275 = vmatprep.mubr.bf16.mxu0 %v2128
    %2276 = vmatmul.mubr.bf16.gmra.mrb[0].mxu0 %v2127
    %v2277 = vpop.f32.mrb[0].mxu0
    %v2278 = vadd.f32 0.0, %v2277
    %v2279 = vpop.f32.mrb[0].mxu0
    %v2280 = vpop.f32.mrb[0].mxu0
    %v2281 = vadd.f32 0.0, %v2280
    %v2282 = vpop.f32.mrb[0].mxu0
    %2283 = vmatprep.mubr.bf16.mxu0 %v2130
    %2284 = vmatmul.mubr.bf16.gmra.mrb[0].mxu0 %v2129
    %v2285 = vpop.f32.mrb[0].mxu0
    %v2286 = vadd.f32 0.0, %v2285
    %v2287 = vpop.f32.mrb[0].mxu0
    %v2288 = vpop.f32.mrb[0].mxu0
    %v2289 = vadd.f32 0.0, %v2288
    %v2290 = vpop.f32.mrb[0].mxu0
    %2291 = vdwg.mxu0
    %v2292 = vpack.c.bf16 %v2169, %v2166
    %v2293 = vpack.c.bf16 %v2177, %v2174
    %v2294 = vpack.c.bf16 %v2185, %v2182
    %v2295 = vpack.c.bf16 %v2193, %v2190
    %v2296 = vpack.c.bf16 %v2201, %v2198
    %v2297 = vpack.c.bf16 %v2209, %v2206
    %v2298 = vpack.c.bf16 %v2217, %v2214
    %v2299 = vpack.c.bf16 %v2225, %v2222
    %v2300 = vpack.c.bf16 %v2233, %v2230
    %v2301 = vpack.c.bf16 %v2241, %v2238
    %v2302 = vpack.c.bf16 %v2249, %v2246
    %v2303 = vpack.c.bf16 %v2257, %v2254
    %v2304 = vpack.c.bf16 %v2265, %v2262
    %v2305 = vpack.c.bf16 %v2273, %v2270
    %v2306 = vpack.c.bf16 %v2281, %v2278
    %v2307 = vpack.c.bf16 %v2289, %v2286
    %v2308 = vld [vmem:[#allocation10] sm:$0xff]
    %v2309 = vld [vmem:[#allocation10 + $0x8] sm:$0xff]
    %v2310 = vld [vmem:[#allocation10 + $0x10] sm:$0xff]
    %v2311 = vld [vmem:[#allocation10 + $0x18] sm:$0xff]
    %v2312 = vld [vmem:[#allocation10 + $0x20] sm:$0xff]
    %v2313 = vld [vmem:[#allocation10 + $0x28] sm:$0xff]
    %v2314 = vld [vmem:[#allocation10 + $0x30] sm:$0xff]
    %v2315 = vld [vmem:[#allocation10 + $0x38] sm:$0xff]
    %v2316 = vld [vmem:[#allocation10 + $0x40] sm:$0xff]
    %v2317 = vld [vmem:[#allocation10 + $0x48] sm:$0xff]
    %v2318 = vld [vmem:[#allocation10 + $0x50] sm:$0xff]
    %v2319 = vld [vmem:[#allocation10 + $0x58] sm:$0xff]
    %v2320 = vld [vmem:[#allocation10 + $0x60] sm:$0xff]
    %v2321 = vld [vmem:[#allocation10 + $0x68] sm:$0xff]
    %v2322 = vld [vmem:[#allocation10 + $0x70] sm:$0xff]
    %v2323 = vld [vmem:[#allocation10 + $0x78] sm:$0xff]
    %v2324 = vld [vmem:[#allocation5 + $0x4] sm:$0xf]
    %v2325 = vld [vmem:[#allocation5 + $0xc] sm:$0xf]
    %v2326 = vld [vmem:[#allocation5 + $0x14] sm:$0xf]
    %v2327 = vld [vmem:[#allocation5 + $0x1c] sm:$0xf]
    %v2328 = vld [vmem:[#allocation5 + $0x24] sm:$0xf]
    %v2329 = vld [vmem:[#allocation5 + $0x2c] sm:$0xf]
    %v2330 = vld [vmem:[#allocation5 + $0x34] sm:$0xf]
    %v2331 = vld [vmem:[#allocation5 + $0x3c] sm:$0xf]
    %v2332 = vld [vmem:[#allocation5 + $0x44] sm:$0xf]
    %v2333 = vld [vmem:[#allocation5 + $0x4c] sm:$0xf]
    %v2334 = vld [vmem:[#allocation5 + $0x54] sm:$0xf]
    %v2335 = vld [vmem:[#allocation5 + $0x5c] sm:$0xf]
    %v2336 = vld [vmem:[#allocation5 + $0x64] sm:$0xf]
    %v2337 = vld [vmem:[#allocation5 + $0x6c] sm:$0xf]
    %v2338 = vld [vmem:[#allocation5 + $0x74] sm:$0xf]
    %v2339 = vld [vmem:[#allocation5 + $0x7c] sm:$0xf]
    %v2340 = vld [vmem:[#allocation5 + $0x84] sm:$0xf]
    %v2341 = vld [vmem:[#allocation5 + $0x8c] sm:$0xf]
    %v2342 = vld [vmem:[#allocation5 + $0x94] sm:$0xf]
    %v2343 = vld [vmem:[#allocation5 + $0x9c] sm:$0xf]
    %v2344 = vld [vmem:[#allocation5 + $0xa4] sm:$0xf]
    %v2345 = vld [vmem:[#allocation5 + $0xac] sm:$0xf]
    %v2346 = vld [vmem:[#allocation5 + $0xb4] sm:$0xf]
    %v2347 = vld [vmem:[#allocation5 + $0xbc] sm:$0xf]
    %v2348 = vld [vmem:[#allocation5 + $0xc4] sm:$0xf]
    %v2349 = vld [vmem:[#allocation5 + $0xcc] sm:$0xf]
    %v2350 = vld [vmem:[#allocation5 + $0xd4] sm:$0xf]
    %v2351 = vld [vmem:[#allocation5 + $0xdc] sm:$0xf]
    %v2352 = vld [vmem:[#allocation5 + $0xe4] sm:$0xf]
    %v2353 = vld [vmem:[#allocation5 + $0xec] sm:$0xf]
    %v2354 = vld [vmem:[#allocation5 + $0xf4] sm:$0xf]
    %v2355 = vld [vmem:[#allocation5 + $0xfc] sm:$0xf]
    %v2356 = vld [vmem:[%s2 + $0x1] sm:$0x1]
    %v2358 = vlaneseq
    %v2359 = vshrl.u32 %v2358, 7
    %v2360 = vsub.s32 0, %v2359
    %v2361 = vrot.slane %v2356, %v2360
    %v2395 = vunpack.c.l.b16 %v2324
    %v2396 = vunpack.c.l.b16 %v2325
    %v2397 = vunpack.c.l.b16 %v2326
    %v2398 = vunpack.c.l.b16 %v2327
    %v2399 = vunpack.c.l.b16 %v2328
    %v2400 = vunpack.c.l.b16 %v2329
    %v2401 = vunpack.c.l.b16 %v2330
    %v2402 = vunpack.c.l.b16 %v2331
    %v2403 = vunpack.c.l.b16 %v2332
    %v2404 = vunpack.c.l.b16 %v2333
    %v2405 = vunpack.c.l.b16 %v2334
    %v2406 = vunpack.c.l.b16 %v2335
    %v2407 = vunpack.c.l.b16 %v2336
    %v2408 = vunpack.c.l.b16 %v2337
    %v2409 = vunpack.c.l.b16 %v2338
    %v2410 = vunpack.c.l.b16 %v2339
    %v2411 = vunpack.c.l.b16 %v2340
    %v2412 = vunpack.c.l.b16 %v2341
    %v2413 = vunpack.c.l.b16 %v2342
    %v2414 = vunpack.c.l.b16 %v2343
    %v2415 = vunpack.c.l.b16 %v2344
    %v2416 = vunpack.c.l.b16 %v2345
    %v2417 = vunpack.c.l.b16 %v2346
    %v2418 = vunpack.c.l.b16 %v2347
    %v2419 = vunpack.c.l.b16 %v2348
    %v2420 = vunpack.c.l.b16 %v2349
    %v2421 = vunpack.c.l.b16 %v2350
    %v2422 = vunpack.c.l.b16 %v2351
    %v2423 = vunpack.c.l.b16 %v2352
    %v2424 = vunpack.c.l.b16 %v2353
    %v2425 = vunpack.c.l.b16 %v2354
    %v2426 = vunpack.c.l.b16 %v2355
    %v2427 = vpack.c.b16 %v2396, %v2395
    %v2428 = vpack.c.b16 %v2398, %v2397
    %v2429 = vpack.c.b16 %v2400, %v2399
    %v2430 = vpack.c.b16 %v2402, %v2401
    %v2431 = vpack.c.b16 %v2404, %v2403
    %v2432 = vpack.c.b16 %v2406, %v2405
    %v2433 = vpack.c.b16 %v2408, %v2407
    %v2434 = vpack.c.b16 %v2410, %v2409
    %v2435 = vpack.c.b16 %v2412, %v2411
    %v2436 = vpack.c.b16 %v2414, %v2413
    %v2437 = vpack.c.b16 %v2416, %v2415
    %v2438 = vpack.c.b16 %v2418, %v2417
    %v2439 = vpack.c.b16 %v2420, %v2419
    %v2440 = vpack.c.b16 %v2422, %v2421
    %v2441 = vpack.c.b16 %v2424, %v2423
    %v2442 = vpack.c.b16 %v2426, %v2425
    %2459 = vmatprep.subr.bf16.mxu0 0
    %2460 = vmatpush1.bf16.msra.mxu0 %v2427
    %2461 = vmatprep.subr.bf16.mxu0 0
    %2462 = vmatpush1.bf16.msra.mxu0 %v2428
    %2463 = vmatprep.subr.bf16.mxu0 0
    %2464 = vmatpush1.bf16.msra.mxu0 %v2429
    %2465 = vmatprep.subr.bf16.mxu0 0
    %2466 = vmatpush1.bf16.msra.mxu0 %v2430
    %2467 = vmatprep.subr.bf16.mxu0 0
    %2468 = vmatpush1.bf16.msra.mxu0 %v2431
    %2469 = vmatprep.subr.bf16.mxu0 0
    %2470 = vmatpush1.bf16.msra.mxu0 %v2432
    %2471 = vmatprep.subr.bf16.mxu0 0
    %2472 = vmatpush1.bf16.msra.mxu0 %v2433
    %2473 = vmatprep.subr.bf16.mxu0 0
    %2474 = vmatpush1.bf16.msra.mxu0 %v2434
    %2475 = vmatprep.subr.bf16.mxu0 0
    %2476 = vmatpush1.bf16.msra.mxu0 %v2435
    %2477 = vmatprep.subr.bf16.mxu0 0
    %2478 = vmatpush1.bf16.msra.mxu0 %v2436
    %2479 = vmatprep.subr.bf16.mxu0 0
    %2480 = vmatpush1.bf16.msra.mxu0 %v2437
    %2481 = vmatprep.subr.bf16.mxu0 0
    %2482 = vmatpush1.bf16.msra.mxu0 %v2438
    %2483 = vmatprep.subr.bf16.mxu0 0
    %2484 = vmatpush1.bf16.msra.mxu0 %v2439
    %2485 = vmatprep.subr.bf16.mxu0 0
    %2486 = vmatpush1.bf16.msra.mxu0 %v2440
    %2487 = vmatprep.subr.bf16.mxu0 0
    %2488 = vmatpush1.bf16.msra.mxu0 %v2441
    %2489 = vmatprep.subr.bf16.mxu0 0
    %2490 = vmatpush1.bf16.msra.mxu0 %v2442
    %2491 = vmatprep.mubr.bf16.mxu0 %v270
    %2492 = vmatmul.mubr.bf16.gmra.mrb[0].mxu0 %v269
    %v2493 = vpop.f32.mrb[0].mxu0
    %v2494 = vadd.f32 %v2361, %v2493
    %v2495 = vpop.f32.mrb[0].mxu0
    %v2496 = vpop.f32.mrb[0].mxu0
    %v2497 = vadd.f32 %v2361, %v2496
    %v2498 = vpop.f32.mrb[0].mxu0
    %2499 = vmatprep.mubr.bf16.mxu0 %v272
    %2500 = vmatmul.mubr.bf16.gmra.mrb[0].mxu0 %v271
    %v2501 = vpop.f32.mrb[0].mxu0
    %v2502 = vadd.f32 %v2361, %v2501
    %v2503 = vpop.f32.mrb[0].mxu0
    %v2504 = vpop.f32.mrb[0].mxu0
    %v2505 = vadd.f32 %v2361, %v2504
    %v2506 = vpop.f32.mrb[0].mxu0
    %2507 = vmatprep.mubr.bf16.mxu0 %v274
    %2508 = vmatmul.mubr.bf16.gmra.mrb[0].mxu0 %v273
    %v2509 = vpop.f32.mrb[0].mxu0
    %v2510 = vadd.f32 %v2361, %v2509
    %v2511 = vpop.f32.mrb[0].mxu0
    %v2512 = vpop.f32.mrb[0].mxu0
    %v2513 = vadd.f32 %v2361, %v2512
    %v2514 = vpop.f32.mrb[0].mxu0
    %2515 = vmatprep.mubr.bf16.mxu0 %v276
    %2516 = vmatmul.mubr.bf16.gmra.mrb[0].mxu0 %v275
    %v2517 = vpop.f32.mrb[0].mxu0
    %v2518 = vadd.f32 %v2361, %v2517
    %v2519 = vpop.f32.mrb[0].mxu0
    %v2520 = vpop.f32.mrb[0].mxu0
    %v2521 = vadd.f32 %v2361, %v2520
    %v2522 = vpop.f32.mrb[0].mxu0
    %2523 = vmatprep.mubr.bf16.mxu0 %v278
    %2524 = vmatmul.mubr.bf16.gmra.mrb[0].mxu0 %v277
    %v2525 = vpop.f32.mrb[0].mxu0
    %v2526 = vadd.f32 %v2361, %v2525
    %v2527 = vpop.f32.mrb[0].mxu0
    %v2528 = vpop.f32.mrb[0].mxu0
    %v2529 = vadd.f32 %v2361, %v2528
    %v2530 = vpop.f32.mrb[0].mxu0
    %2531 = vmatprep.mubr.bf16.mxu0 %v280
    %2532 = vmatmul.mubr.bf16.gmra.mrb[0].mxu0 %v279
    %v2533 = vpop.f32.mrb[0].mxu0
    %v2534 = vadd.f32 %v2361, %v2533
    %v2535 = vpop.f32.mrb[0].mxu0
    %v2536 = vpop.f32.mrb[0].mxu0
    %v2537 = vadd.f32 %v2361, %v2536
    %v2538 = vpop.f32.mrb[0].mxu0
    %2539 = vmatprep.mubr.bf16.mxu0 %v282
    %2540 = vmatmul.mubr.bf16.gmra.mrb[0].mxu0 %v281
    %v2541 = vpop.f32.mrb[0].mxu0
    %v2542 = vadd.f32 %v2361, %v2541
    %v2543 = vpop.f32.mrb[0].mxu0
    %v2544 = vpop.f32.mrb[0].mxu0
    %v2545 = vadd.f32 %v2361, %v2544
    %v2546 = vpop.f32.mrb[0].mxu0
    %2547 = vmatprep.mubr.bf16.mxu0 %v284
    %2548 = vmatmul.mubr.bf16.gmra.mrb[0].mxu0 %v283
    %v2549 = vpop.f32.mrb[0].mxu0
    %v2550 = vadd.f32 %v2361, %v2549
    %v2551 = vpop.f32.mrb[0].mxu0
    %v2552 = vpop.f32.mrb[0].mxu0
    %v2553 = vadd.f32 %v2361, %v2552
    %v2554 = vpop.f32.mrb[0].mxu0
    %2555 = vmatprep.mubr.bf16.mxu0 %v286
    %2556 = vmatmul.mubr.bf16.gmra.mrb[0].mxu0 %v285
    %v2557 = vpop.f32.mrb[0].mxu0
    %v2558 = vadd.f32 %v2361, %v2557
    %v2559 = vpop.f32.mrb[0].mxu0
    %v2560 = vpop.f32.mrb[0].mxu0
    %v2561 = vadd.f32 %v2361, %v2560
    %v2562 = vpop.f32.mrb[0].mxu0
    %2563 = vmatprep.mubr.bf16.mxu0 %v288
    %2564 = vmatmul.mubr.bf16.gmra.mrb[0].mxu0 %v287
    %v2565 = vpop.f32.mrb[0].mxu0
    %v2566 = vadd.f32 %v2361, %v2565
    %v2567 = vpop.f32.mrb[0].mxu0
    %v2568 = vpop.f32.mrb[0].mxu0
    %v2569 = vadd.f32 %v2361, %v2568
    %v2570 = vpop.f32.mrb[0].mxu0
    %2571 = vmatprep.mubr.bf16.mxu0 %v290
    %2572 = vmatmul.mubr.bf16.gmra.mrb[0].mxu0 %v289
    %v2573 = vpop.f32.mrb[0].mxu0
    %v2574 = vadd.f32 %v2361, %v2573
    %v2575 = vpop.f32.mrb[0].mxu0
    %v2576 = vpop.f32.mrb[0].mxu0
    %v2577 = vadd.f32 %v2361, %v2576
    %v2578 = vpop.f32.mrb[0].mxu0
    %2579 = vmatprep.mubr.bf16.mxu0 %v292
    %2580 = vmatmul.mubr.bf16.gmra.mrb[0].mxu0 %v291
    %v2581 = vpop.f32.mrb[0].mxu0
    %v2582 = vadd.f32 %v2361, %v2581
    %v2583 = vpop.f32.mrb[0].mxu0
    %v2584 = vpop.f32.mrb[0].mxu0
    %v2585 = vadd.f32 %v2361, %v2584
    %v2586 = vpop.f32.mrb[0].mxu0
    %2587 = vmatprep.mubr.bf16.mxu0 %v294
    %2588 = vmatmul.mubr.bf16.gmra.mrb[0].mxu0 %v293
    %v2589 = vpop.f32.mrb[0].mxu0
    %v2590 = vadd.f32 %v2361, %v2589
    %v2591 = vpop.f32.mrb[0].mxu0
    %v2592 = vpop.f32.mrb[0].mxu0
    %v2593 = vadd.f32 %v2361, %v2592
    %v2594 = vpop.f32.mrb[0].mxu0
    %2595 = vmatprep.mubr.bf16.mxu0 %v296
    %2596 = vmatmul.mubr.bf16.gmra.mrb[0].mxu0 %v295
    %v2597 = vpop.f32.mrb[0].mxu0
    %v2598 = vadd.f32 %v2361, %v2597
    %v2599 = vpop.f32.mrb[0].mxu0
    %v2600 = vpop.f32.mrb[0].mxu0
    %v2601 = vadd.f32 %v2361, %v2600
    %v2602 = vpop.f32.mrb[0].mxu0
    %2603 = vmatprep.mubr.bf16.mxu0 %v298
    %2604 = vmatmul.mubr.bf16.gmra.mrb[0].mxu0 %v297
    %v2605 = vpop.f32.mrb[0].mxu0
    %v2606 = vadd.f32 %v2361, %v2605
    %v2607 = vpop.f32.mrb[0].mxu0
    %v2608 = vpop.f32.mrb[0].mxu0
    %v2609 = vadd.f32 %v2361, %v2608
    %v2610 = vpop.f32.mrb[0].mxu0
    %2611 = vmatprep.mubr.bf16.mxu0 %v300
    %2612 = vmatmul.mubr.bf16.gmra.mrb[0].mxu0 %v299
    %v2613 = vpop.f32.mrb[0].mxu0
    %v2614 = vadd.f32 %v2361, %v2613
    %v2615 = vpop.f32.mrb[0].mxu0
    %v2616 = vpop.f32.mrb[0].mxu0
    %v2617 = vadd.f32 %v2361, %v2616
    %v2618 = vpop.f32.mrb[0].mxu0
    %2619 = vdwg.mxu0
    %v2620 = vmul.f32 %v2494, 0.088388346
    %v2621 = vmul.f32 %v2497, 0.088388346
    %v2622 = vmul.f32 %v2502, 0.088388346
    %v2623 = vmul.f32 %v2505, 0.088388346
    %v2624 = vmul.f32 %v2510, 0.088388346
    %v2625 = vmul.f32 %v2513, 0.088388346
    %v2626 = vmul.f32 %v2518, 0.088388346
    %v2627 = vmul.f32 %v2521, 0.088388346
    %v2628 = vmul.f32 %v2526, 0.088388346
    %v2629 = vmul.f32 %v2529, 0.088388346
    %v2630 = vmul.f32 %v2534, 0.088388346
    %v2631 = vmul.f32 %v2537, 0.088388346
    %v2632 = vmul.f32 %v2542, 0.088388346
    %v2633 = vmul.f32 %v2545, 0.088388346
    %v2634 = vmul.f32 %v2550, 0.088388346
    %v2635 = vmul.f32 %v2553, 0.088388346
    %v2636 = vmul.f32 %v2558, 0.088388346
    %v2637 = vmul.f32 %v2561, 0.088388346
    %v2638 = vmul.f32 %v2566, 0.088388346
    %v2639 = vmul.f32 %v2569, 0.088388346
    %v2640 = vmul.f32 %v2574, 0.088388346
    %v2641 = vmul.f32 %v2577, 0.088388346
    %v2642 = vmul.f32 %v2582, 0.088388346
    %v2643 = vmul.f32 %v2585, 0.088388346
    %v2644 = vmul.f32 %v2590, 0.088388346
    %v2645 = vmul.f32 %v2593, 0.088388346
    %v2646 = vmul.f32 %v2598, 0.088388346
    %v2647 = vmul.f32 %v2601, 0.088388346
    %v2648 = vmul.f32 %v2606, 0.088388346
    %v2649 = vmul.f32 %v2609, 0.088388346
    %v2650 = vmul.f32 %v2614, 0.088388346
    %v2651 = vmul.f32 %v2617, 0.088388346
    %v2652 = vpack.c.bf16 %v2621, %v2620
    %v2653 = vpack.c.bf16 %v2623, %v2622
    %v2654 = vpack.c.bf16 %v2625, %v2624
    %v2655 = vpack.c.bf16 %v2627, %v2626
    %v2656 = vpack.c.bf16 %v2629, %v2628
    %v2657 = vpack.c.bf16 %v2631, %v2630
    %v2658 = vpack.c.bf16 %v2633, %v2632
    %v2659 = vpack.c.bf16 %v2635, %v2634
    %v2660 = vpack.c.bf16 %v2637, %v2636
    %v2661 = vpack.c.bf16 %v2639, %v2638
    %v2662 = vpack.c.bf16 %v2641, %v2640
    %v2663 = vpack.c.bf16 %v2643, %v2642
    %v2664 = vpack.c.bf16 %v2645, %v2644
    %v2665 = vpack.c.bf16 %v2647, %v2646
    %v2666 = vpack.c.bf16 %v2649, %v2648
    %v2667 = vpack.c.bf16 %v2651, %v2650
    %2668 = vmatprep.subr.bf16.mxu0 0
    %2669 = vmatpush1.bf16.xpose.msra.mxu0 %v590
    %2670 = vmatprep.subr.bf16.mxu0 0
    %2671 = vmatpush1.bf16.xpose.msra.mxu0 %v591
    %2672 = vmatprep.subr.bf16.mxu0 0
    %2673 = vmatpush1.bf16.xpose.msra.mxu0 %v592
    %2674 = vmatprep.subr.bf16.mxu0 0
    %2675 = vmatpush1.bf16.xpose.msra.mxu0 %v593
    %2676 = vmatprep.subr.bf16.mxu0 0
    %2677 = vmatpush1.bf16.xpose.msra.mxu0 %v594
    %2678 = vmatprep.subr.bf16.mxu0 0
    %2679 = vmatpush1.bf16.xpose.msra.mxu0 %v595
    %2680 = vmatprep.subr.bf16.mxu0 0
    %2681 = vmatpush1.bf16.xpose.msra.mxu0 %v596
    %2682 = vmatprep.subr.bf16.mxu0 0
    %2683 = vmatpush1.bf16.xpose.msra.mxu0 %v597
    %2684 = vmatprep.subr.bf16.mxu0 0
    %2685 = vmatpush1.bf16.xpose.msra.mxu0 %v598
    %2686 = vmatprep.subr.bf16.mxu0 0
    %2687 = vmatpush1.bf16.xpose.msra.mxu0 %v599
    %2688 = vmatprep.subr.bf16.mxu0 0
    %2689 = vmatpush1.bf16.xpose.msra.mxu0 %v600
    %2690 = vmatprep.subr.bf16.mxu0 0
    %2691 = vmatpush1.bf16.xpose.msra.mxu0 %v601
    %2692 = vmatprep.subr.bf16.mxu0 0
    %2693 = vmatpush1.bf16.xpose.msra.mxu0 %v602
    %2694 = vmatprep.subr.bf16.mxu0 0
    %2695 = vmatpush1.bf16.xpose.msra.mxu0 %v603
    %2696 = vmatprep.subr.bf16.mxu0 0
    %2697 = vmatpush1.bf16.xpose.msra.mxu0 %v604
    %2698 = vmatprep.subr.bf16.mxu0 0
    %2699 = vmatpush1.bf16.xpose.msra.mxu0 %v605
    %2700 = vmatprep.mubr.bf16.mxu0 0
    %2701 = vmatmul.mubr.bf16.gmra.mrb[0].mxu0 %v2652
    %v2702 = vpop.f32.mrb[0].mxu0
    %v2703 = vadd.f32 0.0, %v2702
    %v2704 = vpop.f32.mrb[0].mxu0
    %v2705 = vadd.f32 0.0, %v2704
    %v2706 = vpop.f32.mrb[0].mxu0
    %v2707 = vadd.f32 0.0, %v2706
    %v2708 = vpop.f32.mrb[0].mxu0
    %v2709 = vadd.f32 0.0, %v2708
    %2710 = vmatprep.mubr.bf16.mxu0 0
    %2711 = vmatmul.mubr.bf16.gmra.mrb[0].mxu0 %v2653
    %v2712 = vpop.f32.mrb[0].mxu0
    %v2713 = vadd.f32 0.0, %v2712
    %v2714 = vpop.f32.mrb[0].mxu0
    %v2715 = vadd.f32 0.0, %v2714
    %v2716 = vpop.f32.mrb[0].mxu0
    %v2717 = vadd.f32 0.0, %v2716
    %v2718 = vpop.f32.mrb[0].mxu0
    %v2719 = vadd.f32 0.0, %v2718
    %2720 = vmatprep.mubr.bf16.mxu0 0
    %2721 = vmatmul.mubr.bf16.gmra.mrb[0].mxu0 %v2654
    %v2722 = vpop.f32.mrb[0].mxu0
    %v2723 = vadd.f32 0.0, %v2722
    %v2724 = vpop.f32.mrb[0].mxu0
    %v2725 = vadd.f32 0.0, %v2724
    %v2726 = vpop.f32.mrb[0].mxu0
    %v2727 = vadd.f32 0.0, %v2726
    %v2728 = vpop.f32.mrb[0].mxu0
    %v2729 = vadd.f32 0.0, %v2728
    %2730 = vmatprep.mubr.bf16.mxu0 0
    %2731 = vmatmul.mubr.bf16.gmra.mrb[0].mxu0 %v2655
    %v2732 = vpop.f32.mrb[0].mxu0
    %v2733 = vadd.f32 0.0, %v2732
    %v2734 = vpop.f32.mrb[0].mxu0
    %v2735 = vadd.f32 0.0, %v2734
    %v2736 = vpop.f32.mrb[0].mxu0
    %v2737 = vadd.f32 0.0, %v2736
    %v2738 = vpop.f32.mrb[0].mxu0
    %v2739 = vadd.f32 0.0, %v2738
    %2740 = vmatprep.mubr.bf16.mxu0 0
    %2741 = vmatmul.mubr.bf16.gmra.mrb[0].mxu0 %v2656
    %v2742 = vpop.f32.mrb[0].mxu0
    %v2743 = vadd.f32 0.0, %v2742
    %v2744 = vpop.f32.mrb[0].mxu0
    %v2745 = vadd.f32 0.0, %v2744
    %v2746 = vpop.f32.mrb[0].mxu0
    %v2747 = vadd.f32 0.0, %v2746
    %v2748 = vpop.f32.mrb[0].mxu0
    %v2749 = vadd.f32 0.0, %v2748
    %2750 = vmatprep.mubr.bf16.mxu0 0
    %2751 = vmatmul.mubr.bf16.gmra.mrb[0].mxu0 %v2657
    %v2752 = vpop.f32.mrb[0].mxu0
    %v2753 = vadd.f32 0.0, %v2752
    %v2754 = vpop.f32.mrb[0].mxu0
    %v2755 = vadd.f32 0.0, %v2754
    %v2756 = vpop.f32.mrb[0].mxu0
    %v2757 = vadd.f32 0.0, %v2756
    %v2758 = vpop.f32.mrb[0].mxu0
    %v2759 = vadd.f32 0.0, %v2758
    %2760 = vmatprep.mubr.bf16.mxu0 0
    %2761 = vmatmul.mubr.bf16.gmra.mrb[0].mxu0 %v2658
    %v2762 = vpop.f32.mrb[0].mxu0
    %v2763 = vadd.f32 0.0, %v2762
    %v2764 = vpop.f32.mrb[0].mxu0
    %v2765 = vadd.f32 0.0, %v2764
    %v2766 = vpop.f32.mrb[0].mxu0
    %v2767 = vadd.f32 0.0, %v2766
    %v2768 = vpop.f32.mrb[0].mxu0
    %v2769 = vadd.f32 0.0, %v2768
    %2770 = vmatprep.mubr.bf16.mxu0 0
    %2771 = vmatmul.mubr.bf16.gmra.mrb[0].mxu0 %v2659
    %v2772 = vpop.f32.mrb[0].mxu0
    %v2773 = vadd.f32 0.0, %v2772
    %v2774 = vpop.f32.mrb[0].mxu0
    %v2775 = vadd.f32 0.0, %v2774
    %v2776 = vpop.f32.mrb[0].mxu0
    %v2777 = vadd.f32 0.0, %v2776
    %v2778 = vpop.f32.mrb[0].mxu0
    %v2779 = vadd.f32 0.0, %v2778
    %2780 = vmatprep.mubr.bf16.mxu0 0
    %2781 = vmatmul.mubr.bf16.gmra.mrb[0].mxu0 %v2660
    %v2782 = vpop.f32.mrb[0].mxu0
    %v2783 = vadd.f32 0.0, %v2782
    %v2784 = vpop.f32.mrb[0].mxu0
    %v2785 = vadd.f32 0.0, %v2784
    %v2786 = vpop.f32.mrb[0].mxu0
    %v2787 = vadd.f32 0.0, %v2786
    %v2788 = vpop.f32.mrb[0].mxu0
    %v2789 = vadd.f32 0.0, %v2788
    %2790 = vmatprep.mubr.bf16.mxu0 0
    %2791 = vmatmul.mubr.bf16.gmra.mrb[0].mxu0 %v2661
    %v2792 = vpop.f32.mrb[0].mxu0
    %v2793 = vadd.f32 0.0, %v2792
    %v2794 = vpop.f32.mrb[0].mxu0
    %v2795 = vadd.f32 0.0, %v2794
    %v2796 = vpop.f32.mrb[0].mxu0
    %v2797 = vadd.f32 0.0, %v2796
    %v2798 = vpop.f32.mrb[0].mxu0
    %v2799 = vadd.f32 0.0, %v2798
    %2800 = vmatprep.mubr.bf16.mxu0 0
    %2801 = vmatmul.mubr.bf16.gmra.mrb[0].mxu0 %v2662
    %v2802 = vpop.f32.mrb[0].mxu0
    %v2803 = vadd.f32 0.0, %v2802
    %v2804 = vpop.f32.mrb[0].mxu0
    %v2805 = vadd.f32 0.0, %v2804
    %v2806 = vpop.f32.mrb[0].mxu0
    %v2807 = vadd.f32 0.0, %v2806
    %v2808 = vpop.f32.mrb[0].mxu0
    %v2809 = vadd.f32 0.0, %v2808
    %2810 = vmatprep.mubr.bf16.mxu0 0
    %2811 = vmatmul.mubr.bf16.gmra.mrb[0].mxu0 %v2663
    %v2812 = vpop.f32.mrb[0].mxu0
    %v2813 = vadd.f32 0.0, %v2812
    %v2814 = vpop.f32.mrb[0].mxu0
    %v2815 = vadd.f32 0.0, %v2814
    %v2816 = vpop.f32.mrb[0].mxu0
    %v2817 = vadd.f32 0.0, %v2816
    %v2818 = vpop.f32.mrb[0].mxu0
    %v2819 = vadd.f32 0.0, %v2818
    %2820 = vmatprep.mubr.bf16.mxu0 0
    %2821 = vmatmul.mubr.bf16.gmra.mrb[0].mxu0 %v2664
    %v2822 = vpop.f32.mrb[0].mxu0
    %v2823 = vadd.f32 0.0, %v2822
    %v2824 = vpop.f32.mrb[0].mxu0
    %v2825 = vadd.f32 0.0, %v2824
    %v2826 = vpop.f32.mrb[0].mxu0
    %v2827 = vadd.f32 0.0, %v2826
    %v2828 = vpop.f32.mrb[0].mxu0
    %v2829 = vadd.f32 0.0, %v2828
    %2830 = vmatprep.mubr.bf16.mxu0 0
    %2831 = vmatmul.mubr.bf16.gmra.mrb[0].mxu0 %v2665
    %v2832 = vpop.f32.mrb[0].mxu0
    %v2833 = vadd.f32 0.0, %v2832
    %v2834 = vpop.f32.mrb[0].mxu0
    %v2835 = vadd.f32 0.0, %v2834
    %v2836 = vpop.f32.mrb[0].mxu0
    %v2837 = vadd.f32 0.0, %v2836
    %v2838 = vpop.f32.mrb[0].mxu0
    %v2839 = vadd.f32 0.0, %v2838
    %2840 = vmatprep.mubr.bf16.mxu0 0
    %2841 = vmatmul.mubr.bf16.gmra.mrb[0].mxu0 %v2666
    %v2842 = vpop.f32.mrb[0].mxu0
    %v2843 = vadd.f32 0.0, %v2842
    %v2844 = vpop.f32.mrb[0].mxu0
    %v2845 = vadd.f32 0.0, %v2844
    %v2846 = vpop.f32.mrb[0].mxu0
    %v2847 = vadd.f32 0.0, %v2846
    %v2848 = vpop.f32.mrb[0].mxu0
    %v2849 = vadd.f32 0.0, %v2848
    %2850 = vmatprep.mubr.bf16.mxu0 0
    %2851 = vmatmul.mubr.bf16.gmra.mrb[0].mxu0 %v2667
    %v2852 = vpop.f32.mrb[0].mxu0
    %v2853 = vadd.f32 0.0, %v2852
    %v2854 = vpop.f32.mrb[0].mxu0
    %v2855 = vadd.f32 0.0, %v2854
    %v2856 = vpop.f32.mrb[0].mxu0
    %v2857 = vadd.f32 0.0, %v2856
    %v2858 = vpop.f32.mrb[0].mxu0
    %v2859 = vadd.f32 0.0, %v2858
    %2860 = vdwg.mxu0
    %v2861 = vsel %vm954, %v2703, -1e+30
    %v2862 = vsel %vm955, %v2705, -1e+30
    %v2863 = vsel %vm956, %v2707, -1e+30
    %v2864 = vsel %vm957, %v2709, -1e+30
    %v2865 = vsel %vm958, %v2713, -1e+30
    %v2866 = vsel %vm959, %v2715, -1e+30
    %v2867 = vsel %vm960, %v2717, -1e+30
    %v2868 = vsel %vm961, %v2719, -1e+30
    %v2869 = vsel %vm962, %v2723, -1e+30
    %v2870 = vsel %vm963, %v2725, -1e+30
    %v2871 = vsel %vm964, %v2727, -1e+30
    %v2872 = vsel %vm965, %v2729, -1e+30
    %v2873 = vsel %vm966, %v2733, -1e+30
    %v2874 = vsel %vm967, %v2735, -1e+30
    %v2875 = vsel %vm968, %v2737, -1e+30
    %v2876 = vsel %vm969, %v2739, -1e+30
    %v2877 = vsel %vm970, %v2743, -1e+30
    %v2878 = vsel %vm971, %v2745, -1e+30
    %v2879 = vsel %vm972, %v2747, -1e+30
    %v2880 = vsel %vm973, %v2749, -1e+30
    %v2881 = vsel %vm974, %v2753, -1e+30
    %v2882 = vsel %vm975, %v2755, -1e+30
    %v2883 = vsel %vm976, %v2757, -1e+30
    %v2884 = vsel %vm977, %v2759, -1e+30
    %v2885 = vsel %vm978, %v2763, -1e+30
    %v2886 = vsel %vm979, %v2765, -1e+30
    %v2887 = vsel %vm980, %v2767, -1e+30
    %v2888 = vsel %vm981, %v2769, -1e+30
    %v2889 = vsel %vm982, %v2773, -1e+30
    %v2890 = vsel %vm983, %v2775, -1e+30
    %v2891 = vsel %vm984, %v2777, -1e+30
    %v2892 = vsel %vm985, %v2779, -1e+30
    %v2893 = vsel %vm986, %v2783, -1e+30
    %v2894 = vsel %vm987, %v2785, -1e+30
    %v2895 = vsel %vm988, %v2787, -1e+30
    %v2896 = vsel %vm989, %v2789, -1e+30
    %v2897 = vsel %vm990, %v2793, -1e+30
    %v2898 = vsel %vm991, %v2795, -1e+30
    %v2899 = vsel %vm992, %v2797, -1e+30
    %v2900 = vsel %vm993, %v2799, -1e+30
    %v2901 = vsel %vm994, %v2803, -1e+30
    %v2902 = vsel %vm995, %v2805, -1e+30
    %v2903 = vsel %vm996, %v2807, -1e+30
    %v2904 = vsel %vm997, %v2809, -1e+30
    %v2905 = vsel %vm998, %v2813, -1e+30
    %v2906 = vsel %vm999, %v2815, -1e+30
    %v2907 = vsel %vm1000, %v2817, -1e+30
    %v2908 = vsel %vm1001, %v2819, -1e+30
    %v2909 = vsel %vm1002, %v2823, -1e+30
    %v2910 = vsel %vm1003, %v2825, -1e+30
    %v2911 = vsel %vm1004, %v2827, -1e+30
    %v2912 = vsel %vm1005, %v2829, -1e+30
    %v2913 = vsel %vm1006, %v2833, -1e+30
    %v2914 = vsel %vm1007, %v2835, -1e+30
    %v2915 = vsel %vm1008, %v2837, -1e+30
    %v2916 = vsel %vm1009, %v2839, -1e+30
    %v2917 = vsel %vm1010, %v2843, -1e+30
    %v2918 = vsel %vm1011, %v2845, -1e+30
    %v2919 = vsel %vm1012, %v2847, -1e+30
    %v2920 = vsel %vm1013, %v2849, -1e+30
    %v2921 = vsel %vm1014, %v2853, -1e+30
    %v2922 = vsel %vm1015, %v2855, -1e+30
    %v2923 = vsel %vm1016, %v2857, -1e+30
    %v2924 = vsel %vm1017, %v2859, -1e+30
    %v2925 = vmax.f32 %v2861, %v2862
    %2926 = vmax.xlane.f32.xlu0 %v2925
    %v2927 = vpop.xlane.xlu0 %2926
    %v2928 = vmax.f32 %v2863, %v2864
    %2929 = vmax.xlane.f32.xlu0 %v2928
    %v2930 = vpop.xlane.xlu0 %2929
    %v2931 = vmax.f32 %v2865, %v2866
    %2932 = vmax.xlane.f32.xlu0 %v2931
    %v2933 = vpop.xlane.xlu0 %2932
    %v2934 = vmax.f32 %v2867, %v2868
    %2935 = vmax.xlane.f32.xlu0 %v2934
    %v2936 = vpop.xlane.xlu0 %2935
    %v2937 = vmax.f32 %v2869, %v2870
    %2938 = vmax.xlane.f32.xlu0 %v2937
    %v2939 = vpop.xlane.xlu0 %2938
    %v2940 = vmax.f32 %v2871, %v2872
    %2941 = vmax.xlane.f32.xlu0 %v2940
    %v2942 = vpop.xlane.xlu0 %2941
    %v2943 = vmax.f32 %v2873, %v2874
    %2944 = vmax.xlane.f32.xlu0 %v2943
    %v2945 = vpop.xlane.xlu0 %2944
    %v2946 = vmax.f32 %v2875, %v2876
    %2947 = vmax.xlane.f32.xlu0 %v2946
    %v2948 = vpop.xlane.xlu0 %2947
    %v2949 = vmax.f32 %v2877, %v2878
    %2950 = vmax.xlane.f32.xlu0 %v2949
    %v2951 = vpop.xlane.xlu0 %2950
    %v2952 = vmax.f32 %v2879, %v2880
    %2953 = vmax.xlane.f32.xlu0 %v2952
    %v2954 = vpop.xlane.xlu0 %2953
    %v2955 = vmax.f32 %v2881, %v2882
    %2956 = vmax.xlane.f32.xlu0 %v2955
    %v2957 = vpop.xlane.xlu0 %2956
    %v2958 = vmax.f32 %v2883, %v2884
    %2959 = vmax.xlane.f32.xlu0 %v2958
    %v2960 = vpop.xlane.xlu0 %2959
    %v2961 = vmax.f32 %v2885, %v2886
    %2962 = vmax.xlane.f32.xlu0 %v2961
    %v2963 = vpop.xlane.xlu0 %2962
    %v2964 = vmax.f32 %v2887, %v2888
    %2965 = vmax.xlane.f32.xlu0 %v2964
    %v2966 = vpop.xlane.xlu0 %2965
    %v2967 = vmax.f32 %v2889, %v2890
    %2968 = vmax.xlane.f32.xlu0 %v2967
    %v2969 = vpop.xlane.xlu0 %2968
    %v2970 = vmax.f32 %v2891, %v2892
    %2971 = vmax.xlane.f32.xlu0 %v2970
    %v2972 = vpop.xlane.xlu0 %2971
    %v2973 = vmax.f32 %v2893, %v2894
    %2974 = vmax.xlane.f32.xlu0 %v2973
    %v2975 = vpop.xlane.xlu0 %2974
    %v2976 = vmax.f32 %v2895, %v2896
    %2977 = vmax.xlane.f32.xlu0 %v2976
    %v2978 = vpop.xlane.xlu0 %2977
    %v2979 = vmax.f32 %v2897, %v2898
    %2980 = vmax.xlane.f32.xlu0 %v2979
    %v2981 = vpop.xlane.xlu0 %2980
    %v2982 = vmax.f32 %v2899, %v2900
    %2983 = vmax.xlane.f32.xlu0 %v2982
    %v2984 = vpop.xlane.xlu0 %2983
    %v2985 = vmax.f32 %v2901, %v2902
    %2986 = vmax.xlane.f32.xlu0 %v2985
    %v2987 = vpop.xlane.xlu0 %2986
    %v2988 = vmax.f32 %v2903, %v2904
    %2989 = vmax.xlane.f32.xlu0 %v2988
    %v2990 = vpop.xlane.xlu0 %2989
    %v2991 = vmax.f32 %v2905, %v2906
    %2992 = vmax.xlane.f32.xlu0 %v2991
    %v2993 = vpop.xlane.xlu0 %2992
    %v2994 = vmax.f32 %v2907, %v2908
    %2995 = vmax.xlane.f32.xlu0 %v2994
    %v2996 = vpop.xlane.xlu0 %2995
    %v2997 = vmax.f32 %v2909, %v2910
    %2998 = vmax.xlane.f32.xlu0 %v2997
    %v2999 = vpop.xlane.xlu0 %2998
    %v3000 = vmax.f32 %v2911, %v2912
    %3001 = vmax.xlane.f32.xlu0 %v3000
    %v3002 = vpop.xlane.xlu0 %3001
    %v3003 = vmax.f32 %v2913, %v2914
    %3004 = vmax.xlane.f32.xlu0 %v3003
    %v3005 = vpop.xlane.xlu0 %3004
    %v3006 = vmax.f32 %v2915, %v2916
    %3007 = vmax.xlane.f32.xlu0 %v3006
    %v3008 = vpop.xlane.xlu0 %3007
    %v3009 = vmax.f32 %v2917, %v2918
    %3010 = vmax.xlane.f32.xlu0 %v3009
    %v3011 = vpop.xlane.xlu0 %3010
    %v3012 = vmax.f32 %v2919, %v2920
    %3013 = vmax.xlane.f32.xlu0 %v3012
    %v3014 = vpop.xlane.xlu0 %3013
    %v3015 = vmax.f32 %v2921, %v2922
    %3016 = vmax.xlane.f32.xlu0 %v3015
    %v3017 = vpop.xlane.xlu0 %3016
    %v3018 = vmax.f32 %v2923, %v2924
    %3019 = vmax.xlane.f32.xlu0 %v3018
    %v3020 = vpop.xlane.xlu0 %3019
    %v3021 = vsub.f32 %v2861, %v2927
    %v3022 = vsub.f32 %v2862, %v2927
    %v3023 = vsub.f32 %v2863, %v2930
    %v3024 = vsub.f32 %v2864, %v2930
    %v3025 = vsub.f32 %v2865, %v2933
    %v3026 = vsub.f32 %v2866, %v2933
    %v3027 = vsub.f32 %v2867, %v2936
    %v3028 = vsub.f32 %v2868, %v2936
    %v3029 = vsub.f32 %v2869, %v2939
    %v3030 = vsub.f32 %v2870, %v2939
    %v3031 = vsub.f32 %v2871, %v2942
    %v3032 = vsub.f32 %v2872, %v2942
    %v3033 = vsub.f32 %v2873, %v2945
    %v3034 = vsub.f32 %v2874, %v2945
    %v3035 = vsub.f32 %v2875, %v2948
    %v3036 = vsub.f32 %v2876, %v2948
    %v3037 = vsub.f32 %v2877, %v2951
    %v3038 = vsub.f32 %v2878, %v2951
    %v3039 = vsub.f32 %v2879, %v2954
    %v3040 = vsub.f32 %v2880, %v2954
    %v3041 = vsub.f32 %v2881, %v2957
    %v3042 = vsub.f32 %v2882, %v2957
    %v3043 = vsub.f32 %v2883, %v2960
    %v3044 = vsub.f32 %v2884, %v2960
    %v3045 = vsub.f32 %v2885, %v2963
    %v3046 = vsub.f32 %v2886, %v2963
    %v3047 = vsub.f32 %v2887, %v2966
    %v3048 = vsub.f32 %v2888, %v2966
    %v3049 = vsub.f32 %v2889, %v2969
    %v3050 = vsub.f32 %v2890, %v2969
    %v3051 = vsub.f32 %v2891, %v2972
    %v3052 = vsub.f32 %v2892, %v2972
    %v3053 = vsub.f32 %v2893, %v2975
    %v3054 = vsub.f32 %v2894, %v2975
    %v3055 = vsub.f32 %v2895, %v2978
    %v3056 = vsub.f32 %v2896, %v2978
    %v3057 = vsub.f32 %v2897, %v2981
    %v3058 = vsub.f32 %v2898, %v2981
    %v3059 = vsub.f32 %v2899, %v2984
    %v3060 = vsub.f32 %v2900, %v2984
    %v3061 = vsub.f32 %v2901, %v2987
    %v3062 = vsub.f32 %v2902, %v2987
    %v3063 = vsub.f32 %v2903, %v2990
    %v3064 = vsub.f32 %v2904, %v2990
    %v3065 = vsub.f32 %v2905, %v2993
    %v3066 = vsub.f32 %v2906, %v2993
    %v3067 = vsub.f32 %v2907, %v2996
    %v3068 = vsub.f32 %v2908, %v2996
    %v3069 = vsub.f32 %v2909, %v2999
    %v3070 = vsub.f32 %v2910, %v2999
    %v3071 = vsub.f32 %v2911, %v3002
    %v3072 = vsub.f32 %v2912, %v3002
    %v3073 = vsub.f32 %v2913, %v3005
    %v3074 = vsub.f32 %v2914, %v3005
    %v3075 = vsub.f32 %v2915, %v3008
    %v3076 = vsub.f32 %v2916, %v3008
    %v3077 = vsub.f32 %v2917, %v3011
    %v3078 = vsub.f32 %v2918, %v3011
    %v3079 = vsub.f32 %v2919, %v3014
    %v3080 = vsub.f32 %v2920, %v3014
    %v3081 = vsub.f32 %v2921, %v3017
    %v3082 = vsub.f32 %v2922, %v3017
    %v3083 = vsub.f32 %v2923, %v3020
    %v3084 = vsub.f32 %v2924, %v3020
    %v3085 = vmul.f32 %v3021, 1.442695
    %v3086 = vpow.pop %v3085
    %v3087 = vmul.f32 %v3022, 1.442695
    %v3088 = vpow.pop %v3087
    %v3089 = vmul.f32 %v3023, 1.442695
    %v3090 = vpow.pop %v3089
    %v3091 = vmul.f32 %v3024, 1.442695
    %v3092 = vpow.pop %v3091
    %v3093 = vmul.f32 %v3025, 1.442695
    %v3094 = vpow.pop %v3093
    %v3095 = vmul.f32 %v3026, 1.442695
    %v3096 = vpow.pop %v3095
    %v3097 = vmul.f32 %v3027, 1.442695
    %v3098 = vpow.pop %v3097
    %v3099 = vmul.f32 %v3028, 1.442695
    %v3100 = vpow.pop %v3099
    %v3101 = vmul.f32 %v3029, 1.442695
    %v3102 = vpow.pop %v3101
    %v3103 = vmul.f32 %v3030, 1.442695
    %v3104 = vpow.pop %v3103
    %v3105 = vmul.f32 %v3031, 1.442695
    %v3106 = vpow.pop %v3105
    %v3107 = vmul.f32 %v3032, 1.442695
    %v3108 = vpow.pop %v3107
    %v3109 = vmul.f32 %v3033, 1.442695
    %v3110 = vpow.pop %v3109
    %v3111 = vmul.f32 %v3034, 1.442695
    %v3112 = vpow.pop %v3111
    %v3113 = vmul.f32 %v3035, 1.442695
    %v3114 = vpow.pop %v3113
    %v3115 = vmul.f32 %v3036, 1.442695
    %v3116 = vpow.pop %v3115
    %v3117 = vmul.f32 %v3037, 1.442695
    %v3118 = vpow.pop %v3117
    %v3119 = vmul.f32 %v3038, 1.442695
    %v3120 = vpow.pop %v3119
    %v3121 = vmul.f32 %v3039, 1.442695
    %v3122 = vpow.pop %v3121
    %v3123 = vmul.f32 %v3040, 1.442695
    %v3124 = vpow.pop %v3123
    %v3125 = vmul.f32 %v3041, 1.442695
    %v3126 = vpow.pop %v3125
    %v3127 = vmul.f32 %v3042, 1.442695
    %v3128 = vpow.pop %v3127
    %v3129 = vmul.f32 %v3043, 1.442695
    %v3130 = vpow.pop %v3129
    %v3131 = vmul.f32 %v3044, 1.442695
    %v3132 = vpow.pop %v3131
    %v3133 = vmul.f32 %v3045, 1.442695
    %v3134 = vpow.pop %v3133
    %v3135 = vmul.f32 %v3046, 1.442695
    %v3136 = vpow.pop %v3135
    %v3137 = vmul.f32 %v3047, 1.442695
    %v3138 = vpow.pop %v3137
    %v3139 = vmul.f32 %v3048, 1.442695
    %v3140 = vpow.pop %v3139
    %v3141 = vmul.f32 %v3049, 1.442695
    %v3142 = vpow.pop %v3141
    %v3143 = vmul.f32 %v3050, 1.442695
    %v3144 = vpow.pop %v3143
    %v3145 = vmul.f32 %v3051, 1.442695
    %v3146 = vpow.pop %v3145
    %v3147 = vmul.f32 %v3052, 1.442695
    %v3148 = vpow.pop %v3147
    %v3149 = vmul.f32 %v3053, 1.442695
    %v3150 = vpow.pop %v3149
    %v3151 = vmul.f32 %v3054, 1.442695
    %v3152 = vpow.pop %v3151
    %v3153 = vmul.f32 %v3055, 1.442695
    %v3154 = vpow.pop %v3153
    %v3155 = vmul.f32 %v3056, 1.442695
    %v3156 = vpow.pop %v3155
    %v3157 = vmul.f32 %v3057, 1.442695
    %v3158 = vpow.pop %v3157
    %v3159 = vmul.f32 %v3058, 1.442695
    %v3160 = vpow.pop %v3159
    %v3161 = vmul.f32 %v3059, 1.442695
    %v3162 = vpow.pop %v3161
    %v3163 = vmul.f32 %v3060, 1.442695
    %v3164 = vpow.pop %v3163
    %v3165 = vmul.f32 %v3061, 1.442695
    %v3166 = vpow.pop %v3165
    %v3167 = vmul.f32 %v3062, 1.442695
    %v3168 = vpow.pop %v3167
    %v3169 = vmul.f32 %v3063, 1.442695
    %v3170 = vpow.pop %v3169
    %v3171 = vmul.f32 %v3064, 1.442695
    %v3172 = vpow.pop %v3171
    %v3173 = vmul.f32 %v3065, 1.442695
    %v3174 = vpow.pop %v3173
    %v3175 = vmul.f32 %v3066, 1.442695
    %v3176 = vpow.pop %v3175
    %v3177 = vmul.f32 %v3067, 1.442695
    %v3178 = vpow.pop %v3177
    %v3179 = vmul.f32 %v3068, 1.442695
    %v3180 = vpow.pop %v3179
    %v3181 = vmul.f32 %v3069, 1.442695
    %v3182 = vpow.pop %v3181
    %v3183 = vmul.f32 %v3070, 1.442695
    %v3184 = vpow.pop %v3183
    %v3185 = vmul.f32 %v3071, 1.442695
    %v3186 = vpow.pop %v3185
    %v3187 = vmul.f32 %v3072, 1.442695
    %v3188 = vpow.pop %v3187
    %v3189 = vmul.f32 %v3073, 1.442695
    %v3190 = vpow.pop %v3189
    %v3191 = vmul.f32 %v3074, 1.442695
    %v3192 = vpow.pop %v3191
    %v3193 = vmul.f32 %v3075, 1.442695
    %v3194 = vpow.pop %v3193
    %v3195 = vmul.f32 %v3076, 1.442695
    %v3196 = vpow.pop %v3195
    %v3197 = vmul.f32 %v3077, 1.442695
    %v3198 = vpow.pop %v3197
    %v3199 = vmul.f32 %v3078, 1.442695
    %v3200 = vpow.pop %v3199
    %v3201 = vmul.f32 %v3079, 1.442695
    %v3202 = vpow.pop %v3201
    %v3203 = vmul.f32 %v3080, 1.442695
    %v3204 = vpow.pop %v3203
    %v3205 = vmul.f32 %v3081, 1.442695
    %v3206 = vpow.pop %v3205
    %v3207 = vmul.f32 %v3082, 1.442695
    %v3208 = vpow.pop %v3207
    %v3209 = vmul.f32 %v3083, 1.442695
    %v3210 = vpow.pop %v3209
    %v3211 = vmul.f32 %v3084, 1.442695
    %v3212 = vpow.pop %v3211
    %v3213 = vadd.f32 %v3086, %v3088
    %3214 = vadd.xlane.f32.xlu0 %v3213
    %v3215 = vpop.xlane.xlu0 %3214
    %v3216 = vadd.f32 %v3090, %v3092
    %3217 = vadd.xlane.f32.xlu0 %v3216
    %v3218 = vpop.xlane.xlu0 %3217
    %v3219 = vadd.f32 %v3094, %v3096
    %3220 = vadd.xlane.f32.xlu0 %v3219
    %v3221 = vpop.xlane.xlu0 %3220
    %v3222 = vadd.f32 %v3098, %v3100
    %3223 = vadd.xlane.f32.xlu0 %v3222
    %v3224 = vpop.xlane.xlu0 %3223
    %v3225 = vadd.f32 %v3102, %v3104
    %3226 = vadd.xlane.f32.xlu0 %v3225
    %v3227 = vpop.xlane.xlu0 %3226
    %v3228 = vadd.f32 %v3106, %v3108
    %3229 = vadd.xlane.f32.xlu0 %v3228
    %v3230 = vpop.xlane.xlu0 %3229
    %v3231 = vadd.f32 %v3110, %v3112
    %3232 = vadd.xlane.f32.xlu0 %v3231
    %v3233 = vpop.xlane.xlu0 %3232
    %v3234 = vadd.f32 %v3114, %v3116
    %3235 = vadd.xlane.f32.xlu0 %v3234
    %v3236 = vpop.xlane.xlu0 %3235
    %v3237 = vadd.f32 %v3118, %v3120
    %3238 = vadd.xlane.f32.xlu0 %v3237
    %v3239 = vpop.xlane.xlu0 %3238
    %v3240 = vadd.f32 %v3122, %v3124
    %3241 = vadd.xlane.f32.xlu0 %v3240
    %v3242 = vpop.xlane.xlu0 %3241
    %v3243 = vadd.f32 %v3126, %v3128
    %3244 = vadd.xlane.f32.xlu0 %v3243
    %v3245 = vpop.xlane.xlu0 %3244
    %v3246 = vadd.f32 %v3130, %v3132
    %3247 = vadd.xlane.f32.xlu0 %v3246
    %v3248 = vpop.xlane.xlu0 %3247
    %v3249 = vadd.f32 %v3134, %v3136
    %3250 = vadd.xlane.f32.xlu0 %v3249
    %v3251 = vpop.xlane.xlu0 %3250
    %v3252 = vadd.f32 %v3138, %v3140
    %3253 = vadd.xlane.f32.xlu0 %v3252
    %v3254 = vpop.xlane.xlu0 %3253
    %v3255 = vadd.f32 %v3142, %v3144
    %3256 = vadd.xlane.f32.xlu0 %v3255
    %v3257 = vpop.xlane.xlu0 %3256
    %v3258 = vadd.f32 %v3146, %v3148
    %3259 = vadd.xlane.f32.xlu0 %v3258
    %v3260 = vpop.xlane.xlu0 %3259
    %v3261 = vadd.f32 %v3150, %v3152
    %3262 = vadd.xlane.f32.xlu0 %v3261
    %v3263 = vpop.xlane.xlu0 %3262
    %v3264 = vadd.f32 %v3154, %v3156
    %3265 = vadd.xlane.f32.xlu0 %v3264
    %v3266 = vpop.xlane.xlu0 %3265
    %v3267 = vadd.f32 %v3158, %v3160
    %3268 = vadd.xlane.f32.xlu0 %v3267
    %v3269 = vpop.xlane.xlu0 %3268
    %v3270 = vadd.f32 %v3162, %v3164
    %3271 = vadd.xlane.f32.xlu0 %v3270
    %v3272 = vpop.xlane.xlu0 %3271
    %v3273 = vadd.f32 %v3166, %v3168
    %3274 = vadd.xlane.f32.xlu0 %v3273
    %v3275 = vpop.xlane.xlu0 %3274
    %v3276 = vadd.f32 %v3170, %v3172
    %3277 = vadd.xlane.f32.xlu0 %v3276
    %v3278 = vpop.xlane.xlu0 %3277
    %v3279 = vadd.f32 %v3174, %v3176
    %3280 = vadd.xlane.f32.xlu0 %v3279
    %v3281 = vpop.xlane.xlu0 %3280
    %v3282 = vadd.f32 %v3178, %v3180
    %3283 = vadd.xlane.f32.xlu0 %v3282
    %v3284 = vpop.xlane.xlu0 %3283
    %v3285 = vadd.f32 %v3182, %v3184
    %3286 = vadd.xlane.f32.xlu0 %v3285
    %v3287 = vpop.xlane.xlu0 %3286
    %v3288 = vadd.f32 %v3186, %v3188
    %3289 = vadd.xlane.f32.xlu0 %v3288
    %v3290 = vpop.xlane.xlu0 %3289
    %v3291 = vadd.f32 %v3190, %v3192
    %3292 = vadd.xlane.f32.xlu0 %v3291
    %v3293 = vpop.xlane.xlu0 %3292
    %v3294 = vadd.f32 %v3194, %v3196
    %3295 = vadd.xlane.f32.xlu0 %v3294
    %v3296 = vpop.xlane.xlu0 %3295
    %v3297 = vadd.f32 %v3198, %v3200
    %3298 = vadd.xlane.f32.xlu0 %v3297
    %v3299 = vpop.xlane.xlu0 %3298
    %v3300 = vadd.f32 %v3202, %v3204
    %3301 = vadd.xlane.f32.xlu0 %v3300
    %v3302 = vpop.xlane.xlu0 %3301
    %v3303 = vadd.f32 %v3206, %v3208
    %3304 = vadd.xlane.f32.xlu0 %v3303
    %v3305 = vpop.xlane.xlu0 %3304
    %v3306 = vadd.f32 %v3210, %v3212
    %3307 = vadd.xlane.f32.xlu0 %v3306
    %v3308 = vpop.xlane.xlu0 %3307
    %v3309 = vrcp.pop %v3215
    %v3310 = vrcp.pop %v3218
    %v3311 = vrcp.pop %v3221
    %v3312 = vrcp.pop %v3224
    %v3313 = vrcp.pop %v3227
    %v3314 = vrcp.pop %v3230
    %v3315 = vrcp.pop %v3233
    %v3316 = vrcp.pop %v3236
    %v3317 = vrcp.pop %v3239
    %v3318 = vrcp.pop %v3242
    %v3319 = vrcp.pop %v3245
    %v3320 = vrcp.pop %v3248
    %v3321 = vrcp.pop %v3251
    %v3322 = vrcp.pop %v3254
    %v3323 = vrcp.pop %v3257
    %v3324 = vrcp.pop %v3260
    %v3325 = vrcp.pop %v3263
    %v3326 = vrcp.pop %v3266
    %v3327 = vrcp.pop %v3269
    %v3328 = vrcp.pop %v3272
    %v3329 = vrcp.pop %v3275
    %v3330 = vrcp.pop %v3278
    %v3331 = vrcp.pop %v3281
    %v3332 = vrcp.pop %v3284
    %v3333 = vrcp.pop %v3287
    %v3334 = vrcp.pop %v3290
    %v3335 = vrcp.pop %v3293
    %v3336 = vrcp.pop %v3296
    %v3337 = vrcp.pop %v3299
    %v3338 = vrcp.pop %v3302
    %v3339 = vrcp.pop %v3305
    %v3340 = vrcp.pop %v3308
    %v3341 = vmul.f32 %v3086, %v3309
    %v3342 = vmul.f32 %v3088, %v3309
    %v3343 = vmul.f32 %v3090, %v3310
    %v3344 = vmul.f32 %v3092, %v3310
    %v3345 = vmul.f32 %v3094, %v3311
    %v3346 = vmul.f32 %v3096, %v3311
    %v3347 = vmul.f32 %v3098, %v3312
    %v3348 = vmul.f32 %v3100, %v3312
    %v3349 = vmul.f32 %v3102, %v3313
    %v3350 = vmul.f32 %v3104, %v3313
    %v3351 = vmul.f32 %v3106, %v3314
    %v3352 = vmul.f32 %v3108, %v3314
    %v3353 = vmul.f32 %v3110, %v3315
    %v3354 = vmul.f32 %v3112, %v3315
    %v3355 = vmul.f32 %v3114, %v3316
    %v3356 = vmul.f32 %v3116, %v3316
    %v3357 = vmul.f32 %v3118, %v3317
    %v3358 = vmul.f32 %v3120, %v3317
    %v3359 = vmul.f32 %v3122, %v3318
    %v3360 = vmul.f32 %v3124, %v3318
    %v3361 = vmul.f32 %v3126, %v3319
    %v3362 = vmul.f32 %v3128, %v3319
    %v3363 = vmul.f32 %v3130, %v3320
    %v3364 = vmul.f32 %v3132, %v3320
    %v3365 = vmul.f32 %v3134, %v3321
    %v3366 = vmul.f32 %v3136, %v3321
    %v3367 = vmul.f32 %v3138, %v3322
    %v3368 = vmul.f32 %v3140, %v3322
    %v3369 = vmul.f32 %v3142, %v3323
    %v3370 = vmul.f32 %v3144, %v3323
    %v3371 = vmul.f32 %v3146, %v3324
    %v3372 = vmul.f32 %v3148, %v3324
    %v3373 = vmul.f32 %v3150, %v3325
    %v3374 = vmul.f32 %v3152, %v3325
    %v3375 = vmul.f32 %v3154, %v3326
    %v3376 = vmul.f32 %v3156, %v3326
    %v3377 = vmul.f32 %v3158, %v3327
    %v3378 = vmul.f32 %v3160, %v3327
    %v3379 = vmul.f32 %v3162, %v3328
    %v3380 = vmul.f32 %v3164, %v3328
    %v3381 = vmul.f32 %v3166, %v3329
    %v3382 = vmul.f32 %v3168, %v3329
    %v3383 = vmul.f32 %v3170, %v3330
    %v3384 = vmul.f32 %v3172, %v3330
    %v3385 = vmul.f32 %v3174, %v3331
    %v3386 = vmul.f32 %v3176, %v3331
    %v3387 = vmul.f32 %v3178, %v3332
    %v3388 = vmul.f32 %v3180, %v3332
    %v3389 = vmul.f32 %v3182, %v3333
    %v3390 = vmul.f32 %v3184, %v3333
    %v3391 = vmul.f32 %v3186, %v3334
    %v3392 = vmul.f32 %v3188, %v3334
    %v3393 = vmul.f32 %v3190, %v3335
    %v3394 = vmul.f32 %v3192, %v3335
    %v3395 = vmul.f32 %v3194, %v3336
    %v3396 = vmul.f32 %v3196, %v3336
    %v3397 = vmul.f32 %v3198, %v3337
    %v3398 = vmul.f32 %v3200, %v3337
    %v3399 = vmul.f32 %v3202, %v3338
    %v3400 = vmul.f32 %v3204, %v3338
    %v3401 = vmul.f32 %v3206, %v3339
    %v3402 = vmul.f32 %v3208, %v3339
    %v3403 = vmul.f32 %v3210, %v3340
    %v3404 = vmul.f32 %v3212, %v3340
    %v3405 = vpack.c.bf16 %v3343, %v3341
    %v3406 = vpack.c.bf16 %v3344, %v3342
    %v3407 = vpack.c.bf16 %v3347, %v3345
    %v3408 = vpack.c.bf16 %v3348, %v3346
    %v3409 = vpack.c.bf16 %v3351, %v3349
    %v3410 = vpack.c.bf16 %v3352, %v3350
    %v3411 = vpack.c.bf16 %v3355, %v3353
    %v3412 = vpack.c.bf16 %v3356, %v3354
    %v3413 = vpack.c.bf16 %v3359, %v3357
    %v3414 = vpack.c.bf16 %v3360, %v3358
    %v3415 = vpack.c.bf16 %v3363, %v3361
    %v3416 = vpack.c.bf16 %v3364, %v3362
    %v3417 = vpack.c.bf16 %v3367, %v3365
    %v3418 = vpack.c.bf16 %v3368, %v3366
    %v3419 = vpack.c.bf16 %v3371, %v3369
    %v3420 = vpack.c.bf16 %v3372, %v3370
    %v3421 = vpack.c.bf16 %v3375, %v3373
    %v3422 = vpack.c.bf16 %v3376, %v3374
    %v3423 = vpack.c.bf16 %v3379, %v3377
    %v3424 = vpack.c.bf16 %v3380, %v3378
    %v3425 = vpack.c.bf16 %v3383, %v3381
    %v3426 = vpack.c.bf16 %v3384, %v3382
    %v3427 = vpack.c.bf16 %v3387, %v3385
    %v3428 = vpack.c.bf16 %v3388, %v3386
    %v3429 = vpack.c.bf16 %v3391, %v3389
    %v3430 = vpack.c.bf16 %v3392, %v3390
    %v3431 = vpack.c.bf16 %v3395, %v3393
    %v3432 = vpack.c.bf16 %v3396, %v3394
    %v3433 = vpack.c.bf16 %v3399, %v3397
    %v3434 = vpack.c.bf16 %v3400, %v3398
    %v3435 = vpack.c.bf16 %v3403, %v3401
    %v3436 = vpack.c.bf16 %v3404, %v3402
    %3437 = vmatprep.subr.bf16.mxu0 0
    %3438 = vmatpush1.bf16.msra.mxu0 %v902
    %3439 = vmatprep.subr.bf16.mxu0 0
    %3440 = vmatpush1.bf16.msra.mxu0 %v903
    %3441 = vmatprep.subr.bf16.mxu0 0
    %3442 = vmatpush1.bf16.msra.mxu0 %v904
    %3443 = vmatprep.subr.bf16.mxu0 0
    %3444 = vmatpush1.bf16.msra.mxu0 %v905
    %3445 = vmatprep.subr.bf16.mxu0 0
    %3446 = vmatpush1.bf16.msra.mxu0 %v906
    %3447 = vmatprep.subr.bf16.mxu0 0
    %3448 = vmatpush1.bf16.msra.mxu0 %v907
    %3449 = vmatprep.subr.bf16.mxu0 0
    %3450 = vmatpush1.bf16.msra.mxu0 %v908
    %3451 = vmatprep.subr.bf16.mxu0 0
    %3452 = vmatpush1.bf16.msra.mxu0 %v909
    %3453 = vmatprep.subr.bf16.mxu0 0
    %3454 = vmatpush1.bf16.msra.mxu0 %v910
    %3455 = vmatprep.subr.bf16.mxu0 0
    %3456 = vmatpush1.bf16.msra.mxu0 %v911
    %3457 = vmatprep.subr.bf16.mxu0 0
    %3458 = vmatpush1.bf16.msra.mxu0 %v912
    %3459 = vmatprep.subr.bf16.mxu0 0
    %3460 = vmatpush1.bf16.msra.mxu0 %v913
    %3461 = vmatprep.subr.bf16.mxu0 0
    %3462 = vmatpush1.bf16.msra.mxu0 %v914
    %3463 = vmatprep.subr.bf16.mxu0 0
    %3464 = vmatpush1.bf16.msra.mxu0 %v915
    %3465 = vmatprep.subr.bf16.mxu0 0
    %3466 = vmatpush1.bf16.msra.mxu0 %v916
    %3467 = vmatprep.subr.bf16.mxu0 0
    %3468 = vmatpush1.bf16.msra.mxu0 %v917
    %3469 = vmatprep.mubr.bf16.mxu0 %v3406
    %3470 = vmatmul.mubr.bf16.gmra.mrb[0].mxu0 %v3405
    %v3471 = vpop.f32.mrb[0].mxu0
    %v3472 = vadd.f32 0.0, %v3471
    %v3473 = vpop.f32.mrb[0].mxu0
    %v3474 = vpop.f32.mrb[0].mxu0
    %v3475 = vadd.f32 0.0, %v3474
    %v3476 = vpop.f32.mrb[0].mxu0
    %3477 = vmatprep.mubr.bf16.mxu0 %v3408
    %3478 = vmatmul.mubr.bf16.gmra.mrb[0].mxu0 %v3407
    %v3479 = vpop.f32.mrb[0].mxu0
    %v3480 = vadd.f32 0.0, %v3479
    %v3481 = vpop.f32.mrb[0].mxu0
    %v3482 = vpop.f32.mrb[0].mxu0
    %v3483 = vadd.f32 0.0, %v3482
    %v3484 = vpop.f32.mrb[0].mxu0
    %3485 = vmatprep.mubr.bf16.mxu0 %v3410
    %3486 = vmatmul.mubr.bf16.gmra.mrb[0].mxu0 %v3409
    %v3487 = vpop.f32.mrb[0].mxu0
    %v3488 = vadd.f32 0.0, %v3487
    %v3489 = vpop.f32.mrb[0].mxu0
    %v3490 = vpop.f32.mrb[0].mxu0
    %v3491 = vadd.f32 0.0, %v3490
    %v3492 = vpop.f32.mrb[0].mxu0
    %3493 = vmatprep.mubr.bf16.mxu0 %v3412
    %3494 = vmatmul.mubr.bf16.gmra.mrb[0].mxu0 %v3411
    %v3495 = vpop.f32.mrb[0].mxu0
    %v3496 = vadd.f32 0.0, %v3495
    %v3497 = vpop.f32.mrb[0].mxu0
    %v3498 = vpop.f32.mrb[0].mxu0
    %v3499 = vadd.f32 0.0, %v3498
    %v3500 = vpop.f32.mrb[0].mxu0
    %3501 = vmatprep.mubr.bf16.mxu0 %v3414
    %3502 = vmatmul.mubr.bf16.gmra.mrb[0].mxu0 %v3413
    %v3503 = vpop.f32.mrb[0].mxu0
    %v3504 = vadd.f32 0.0, %v3503
    %v3505 = vpop.f32.mrb[0].mxu0
    %v3506 = vpop.f32.mrb[0].mxu0
    %v3507 = vadd.f32 0.0, %v3506
    %v3508 = vpop.f32.mrb[0].mxu0
    %3509 = vmatprep.mubr.bf16.mxu0 %v3416
    %3510 = vmatmul.mubr.bf16.gmra.mrb[0].mxu0 %v3415
    %v3511 = vpop.f32.mrb[0].mxu0
    %v3512 = vadd.f32 0.0, %v3511
    %v3513 = vpop.f32.mrb[0].mxu0
    %v3514 = vpop.f32.mrb[0].mxu0
    %v3515 = vadd.f32 0.0, %v3514
    %v3516 = vpop.f32.mrb[0].mxu0
    %3517 = vmatprep.mubr.bf16.mxu0 %v3418
    %3518 = vmatmul.mubr.bf16.gmra.mrb[0].mxu0 %v3417
    %v3519 = vpop.f32.mrb[0].mxu0
    %v3520 = vadd.f32 0.0, %v3519
    %v3521 = vpop.f32.mrb[0].mxu0
    %v3522 = vpop.f32.mrb[0].mxu0
    %v3523 = vadd.f32 0.0, %v3522
    %v3524 = vpop.f32.mrb[0].mxu0
    %3525 = vmatprep.mubr.bf16.mxu0 %v3420
    %3526 = vmatmul.mubr.bf16.gmra.mrb[0].mxu0 %v3419
    %v3527 = vpop.f32.mrb[0].mxu0
    %v3528 = vadd.f32 0.0, %v3527
    %v3529 = vpop.f32.mrb[0].mxu0
    %v3530 = vpop.f32.mrb[0].mxu0
    %v3531 = vadd.f32 0.0, %v3530
    %v3532 = vpop.f32.mrb[0].mxu0
    %3533 = vmatprep.mubr.bf16.mxu0 %v3422
    %3534 = vmatmul.mubr.bf16.gmra.mrb[0].mxu0 %v3421
    %v3535 = vpop.f32.mrb[0].mxu0
    %v3536 = vadd.f32 0.0, %v3535
    %v3537 = vpop.f32.mrb[0].mxu0
    %v3538 = vpop.f32.mrb[0].mxu0
    %v3539 = vadd.f32 0.0, %v3538
    %v3540 = vpop.f32.mrb[0].mxu0
    %3541 = vmatprep.mubr.bf16.mxu0 %v3424
    %3542 = vmatmul.mubr.bf16.gmra.mrb[0].mxu0 %v3423
    %v3543 = vpop.f32.mrb[0].mxu0
    %v3544 = vadd.f32 0.0, %v3543
    %v3545 = vpop.f32.mrb[0].mxu0
    %v3546 = vpop.f32.mrb[0].mxu0
    %v3547 = vadd.f32 0.0, %v3546
    %v3548 = vpop.f32.mrb[0].mxu0
    %3549 = vmatprep.mubr.bf16.mxu0 %v3426
    %3550 = vmatmul.mubr.bf16.gmra.mrb[0].mxu0 %v3425
    %v3551 = vpop.f32.mrb[0].mxu0
    %v3552 = vadd.f32 0.0, %v3551
    %v3553 = vpop.f32.mrb[0].mxu0
    %v3554 = vpop.f32.mrb[0].mxu0
    %v3555 = vadd.f32 0.0, %v3554
    %v3556 = vpop.f32.mrb[0].mxu0
    %3557 = vmatprep.mubr.bf16.mxu0 %v3428
    %3558 = vmatmul.mubr.bf16.gmra.mrb[0].mxu0 %v3427
    %v3559 = vpop.f32.mrb[0].mxu0
    %v3560 = vadd.f32 0.0, %v3559
    %v3561 = vpop.f32.mrb[0].mxu0
    %v3562 = vpop.f32.mrb[0].mxu0
    %v3563 = vadd.f32 0.0, %v3562
    %v3564 = vpop.f32.mrb[0].mxu0
    %3565 = vmatprep.mubr.bf16.mxu0 %v3430
    %3566 = vmatmul.mubr.bf16.gmra.mrb[0].mxu0 %v3429
    %v3567 = vpop.f32.mrb[0].mxu0
    %v3568 = vadd.f32 0.0, %v3567
    %v3569 = vpop.f32.mrb[0].mxu0
    %v3570 = vpop.f32.mrb[0].mxu0
    %v3571 = vadd.f32 0.0, %v3570
    %v3572 = vpop.f32.mrb[0].mxu0
    %3573 = vmatprep.mubr.bf16.mxu0 %v3432
    %3574 = vmatmul.mubr.bf16.gmra.mrb[0].mxu0 %v3431
    %v3575 = vpop.f32.mrb[0].mxu0
    %v3576 = vadd.f32 0.0, %v3575
    %v3577 = vpop.f32.mrb[0].mxu0
    %v3578 = vpop.f32.mrb[0].mxu0
    %v3579 = vadd.f32 0.0, %v3578
    %v3580 = vpop.f32.mrb[0].mxu0
    %3581 = vmatprep.mubr.bf16.mxu0 %v3434
    %3582 = vmatmul.mubr.bf16.gmra.mrb[0].mxu0 %v3433
    %v3583 = vpop.f32.mrb[0].mxu0
    %v3584 = vadd.f32 0.0, %v3583
    %v3585 = vpop.f32.mrb[0].mxu0
    %v3586 = vpop.f32.mrb[0].mxu0
    %v3587 = vadd.f32 0.0, %v3586
    %v3588 = vpop.f32.mrb[0].mxu0
    %3589 = vmatprep.mubr.bf16.mxu0 %v3436
    %3590 = vmatmul.mubr.bf16.gmra.mrb[0].mxu0 %v3435
    %v3591 = vpop.f32.mrb[0].mxu0
    %v3592 = vadd.f32 0.0, %v3591
    %v3593 = vpop.f32.mrb[0].mxu0
    %v3594 = vpop.f32.mrb[0].mxu0
    %v3595 = vadd.f32 0.0, %v3594
    %v3596 = vpop.f32.mrb[0].mxu0
    %3597 = vdwg.mxu0
    %v3598 = vpack.c.bf16 %v3475, %v3472
    %v3599 = vpack.c.bf16 %v3483, %v3480
    %v3600 = vpack.c.bf16 %v3491, %v3488
    %v3601 = vpack.c.bf16 %v3499, %v3496
    %v3602 = vpack.c.bf16 %v3507, %v3504
    %v3603 = vpack.c.bf16 %v3515, %v3512
    %v3604 = vpack.c.bf16 %v3523, %v3520
    %v3605 = vpack.c.bf16 %v3531, %v3528
    %v3606 = vpack.c.bf16 %v3539, %v3536
    %v3607 = vpack.c.bf16 %v3547, %v3544
    %v3608 = vpack.c.bf16 %v3555, %v3552
    %v3609 = vpack.c.bf16 %v3563, %v3560
    %v3610 = vpack.c.bf16 %v3571, %v3568
    %v3611 = vpack.c.bf16 %v3579, %v3576
    %v3612 = vpack.c.bf16 %v3587, %v3584
    %v3613 = vpack.c.bf16 %v3595, %v3592
    %v3614 = vld [vmem:[#allocation10 + $0x80] sm:$0xff]
    %v3615 = vld [vmem:[#allocation10 + $0x88] sm:$0xff]
    %v3616 = vld [vmem:[#allocation10 + $0x90] sm:$0xff]
    %v3617 = vld [vmem:[#allocation10 + $0x98] sm:$0xff]
    %v3618 = vld [vmem:[#allocation10 + $0xa0] sm:$0xff]
    %v3619 = vld [vmem:[#allocation10 + $0xa8] sm:$0xff]
    %v3620 = vld [vmem:[#allocation10 + $0xb0] sm:$0xff]
    %v3621 = vld [vmem:[#allocation10 + $0xb8] sm:$0xff]
    %v3622 = vld [vmem:[#allocation10 + $0xc0] sm:$0xff]
    %v3623 = vld [vmem:[#allocation10 + $0xc8] sm:$0xff]
    %v3624 = vld [vmem:[#allocation10 + $0xd0] sm:$0xff]
    %v3625 = vld [vmem:[#allocation10 + $0xd8] sm:$0xff]
    %v3626 = vld [vmem:[#allocation10 + $0xe0] sm:$0xff]
    %v3627 = vld [vmem:[#allocation10 + $0xe8] sm:$0xff]
    %v3628 = vld [vmem:[#allocation10 + $0xf0] sm:$0xff]
    %v3629 = vld [vmem:[#allocation10 + $0xf8] sm:$0xff]
    %v3646 = vunpack.c.l.b16 %v3614
    %v3647 = vunpack.c.h.b16 %v3614
    %v3648 = vunpack.c.l.b16 %v3615
    %v3649 = vunpack.c.h.b16 %v3615
    %v3650 = vunpack.c.l.b16 %v3616
    %v3651 = vunpack.c.h.b16 %v3616
    %v3652 = vunpack.c.l.b16 %v3617
    %v3653 = vunpack.c.h.b16 %v3617
    %v3654 = vunpack.c.l.b16 %v3618
    %v3655 = vunpack.c.h.b16 %v3618
    %v3656 = vunpack.c.l.b16 %v3619
    %v3657 = vunpack.c.h.b16 %v3619
    %v3658 = vunpack.c.l.b16 %v3620
    %v3659 = vunpack.c.h.b16 %v3620
    %v3660 = vunpack.c.l.b16 %v3621
    %v3661 = vunpack.c.h.b16 %v3621
    %v3662 = vunpack.c.l.b16 %v3622
    %v3663 = vunpack.c.h.b16 %v3622
    %v3664 = vunpack.c.l.b16 %v3623
    %v3665 = vunpack.c.h.b16 %v3623
    %v3666 = vunpack.c.l.b16 %v3624
    %v3667 = vunpack.c.h.b16 %v3624
    %v3668 = vunpack.c.l.b16 %v3625
    %v3669 = vunpack.c.h.b16 %v3625
    %v3670 = vunpack.c.l.b16 %v3626
    %v3671 = vunpack.c.h.b16 %v3626
    %v3672 = vunpack.c.l.b16 %v3627
    %v3673 = vunpack.c.h.b16 %v3627
    %v3674 = vunpack.c.l.b16 %v3628
    %v3675 = vunpack.c.h.b16 %v3628
    %v3676 = vunpack.c.l.b16 %v3629
    %v3677 = vunpack.c.h.b16 %v3629
    %v3678 = vpack.c.b16 %v3648, %v3646
    %v3679 = vpack.c.b16 %v3649, %v3647
    %v3680 = vpack.c.b16 %v3652, %v3650
    %v3681 = vpack.c.b16 %v3653, %v3651
    %v3682 = vpack.c.b16 %v3656, %v3654
    %v3683 = vpack.c.b16 %v3657, %v3655
    %v3684 = vpack.c.b16 %v3660, %v3658
    %v3685 = vpack.c.b16 %v3661, %v3659
    %v3686 = vpack.c.b16 %v3664, %v3662
    %v3687 = vpack.c.b16 %v3665, %v3663
    %v3688 = vpack.c.b16 %v3668, %v3666
    %v3689 = vpack.c.b16 %v3669, %v3667
    %v3690 = vpack.c.b16 %v3672, %v3670
    %v3691 = vpack.c.b16 %v3673, %v3671
    %v3692 = vpack.c.b16 %v3676, %v3674
    %v3693 = vpack.c.b16 %v3677, %v3675
    %3710 = vmatprep.subr.bf16.mxu0 %v3679
    %3711 = vmatpush1.bf16.msra.mxu0 %v3678
    %3712 = vmatprep.subr.bf16.mxu0 %v3681
    %3713 = vmatpush1.bf16.msra.mxu0 %v3680
    %3714 = vmatprep.subr.bf16.mxu0 %v3683
    %3715 = vmatpush1.bf16.msra.mxu0 %v3682
    %3716 = vmatprep.subr.bf16.mxu0 %v3685
    %3717 = vmatpush1.bf16.msra.mxu0 %v3684
    %3718 = vmatprep.subr.bf16.mxu0 %v3687
    %3719 = vmatpush1.bf16.msra.mxu0 %v3686
    %3720 = vmatprep.subr.bf16.mxu0 %v3689
    %3721 = vmatpush1.bf16.msra.mxu0 %v3688
    %3722 = vmatprep.subr.bf16.mxu0 %v3691
    %3723 = vmatpush1.bf16.msra.mxu0 %v3690
    %3724 = vmatprep.subr.bf16.mxu0 %v3693
    %3725 = vmatpush1.bf16.msra.mxu0 %v3692
    %3726 = vmatprep.subr.bf16.mxu0 0
    %3727 = vmatpush1.bf16.msra.mxu0 0
    %3728 = vmatprep.subr.bf16.mxu0 0
    %3729 = vmatpush1.bf16.msra.mxu0 0
    %3730 = vmatprep.subr.bf16.mxu0 0
    %3731 = vmatpush1.bf16.msra.mxu0 0
    %3732 = vmatprep.subr.bf16.mxu0 0
    %3733 = vmatpush1.bf16.msra.mxu0 0
    %3734 = vmatprep.subr.bf16.mxu0 0
    %3735 = vmatpush1.bf16.msra.mxu0 0
    %3736 = vmatprep.subr.bf16.mxu0 0
    %3737 = vmatpush1.bf16.msra.mxu0 0
    %3738 = vmatprep.subr.bf16.mxu0 0
    %3739 = vmatpush1.bf16.msra.mxu0 0
    %3740 = vmatprep.subr.bf16.mxu0 0
    %3741 = vmatpush1.bf16.msra.mxu0 0
    %3742 = vmatprep.mubr.bf16.mxu0 0
    %3743 = vmatmul.mubr.bf16.gmra.mrb[0].mxu0 %v3598
    %v3744 = vpop.f32.mrb[0].mxu0
    %v3745 = vadd.f32 0.0, %v3744
    %v3746 = vpop.f32.mrb[0].mxu0
    %v3747 = vadd.f32 0.0, %v3746
    %v3748 = vpop.f32.mrb[0].mxu0
    %v3749 = vadd.f32 0.0, %v3748
    %v3750 = vpop.f32.mrb[0].mxu0
    %v3751 = vadd.f32 0.0, %v3750
    %3752 = vmatprep.mubr.bf16.mxu0 0
    %3753 = vmatmul.mubr.bf16.gmra.mrb[0].mxu0 %v3599
    %v3754 = vpop.f32.mrb[0].mxu0
    %v3755 = vadd.f32 0.0, %v3754
    %v3756 = vpop.f32.mrb[0].mxu0
    %v3757 = vadd.f32 0.0, %v3756
    %v3758 = vpop.f32.mrb[0].mxu0
    %v3759 = vadd.f32 0.0, %v3758
    %v3760 = vpop.f32.mrb[0].mxu0
    %v3761 = vadd.f32 0.0, %v3760
    %3762 = vmatprep.mubr.bf16.mxu0 0
    %3763 = vmatmul.mubr.bf16.gmra.mrb[0].mxu0 %v3600
    %v3764 = vpop.f32.mrb[0].mxu0
    %v3765 = vadd.f32 0.0, %v3764
    %v3766 = vpop.f32.mrb[0].mxu0
    %v3767 = vadd.f32 0.0, %v3766
    %v3768 = vpop.f32.mrb[0].mxu0
    %v3769 = vadd.f32 0.0, %v3768
    %v3770 = vpop.f32.mrb[0].mxu0
    %v3771 = vadd.f32 0.0, %v3770
    %3772 = vmatprep.mubr.bf16.mxu0 0
    %3773 = vmatmul.mubr.bf16.gmra.mrb[0].mxu0 %v3601
    %v3774 = vpop.f32.mrb[0].mxu0
    %v3775 = vadd.f32 0.0, %v3774
    %v3776 = vpop.f32.mrb[0].mxu0
    %v3777 = vadd.f32 0.0, %v3776
    %v3778 = vpop.f32.mrb[0].mxu0
    %v3779 = vadd.f32 0.0, %v3778
    %v3780 = vpop.f32.mrb[0].mxu0
    %v3781 = vadd.f32 0.0, %v3780
    %3782 = vmatprep.mubr.bf16.mxu0 0
    %3783 = vmatmul.mubr.bf16.gmra.mrb[0].mxu0 %v3602
    %v3784 = vpop.f32.mrb[0].mxu0
    %v3785 = vadd.f32 0.0, %v3784
    %v3786 = vpop.f32.mrb[0].mxu0
    %v3787 = vadd.f32 0.0, %v3786
    %v3788 = vpop.f32.mrb[0].mxu0
    %v3789 = vadd.f32 0.0, %v3788
    %v3790 = vpop.f32.mrb[0].mxu0
    %v3791 = vadd.f32 0.0, %v3790
    %3792 = vmatprep.mubr.bf16.mxu0 0
    %3793 = vmatmul.mubr.bf16.gmra.mrb[0].mxu0 %v3603
    %v3794 = vpop.f32.mrb[0].mxu0
    %v3795 = vadd.f32 0.0, %v3794
    %v3796 = vpop.f32.mrb[0].mxu0
    %v3797 = vadd.f32 0.0, %v3796
    %v3798 = vpop.f32.mrb[0].mxu0
    %v3799 = vadd.f32 0.0, %v3798
    %v3800 = vpop.f32.mrb[0].mxu0
    %v3801 = vadd.f32 0.0, %v3800
    %3802 = vmatprep.mubr.bf16.mxu0 0
    %3803 = vmatmul.mubr.bf16.gmra.mrb[0].mxu0 %v3604
    %v3804 = vpop.f32.mrb[0].mxu0
    %v3805 = vadd.f32 0.0, %v3804
    %v3806 = vpop.f32.mrb[0].mxu0
    %v3807 = vadd.f32 0.0, %v3806
    %v3808 = vpop.f32.mrb[0].mxu0
    %v3809 = vadd.f32 0.0, %v3808
    %v3810 = vpop.f32.mrb[0].mxu0
    %v3811 = vadd.f32 0.0, %v3810
    %3812 = vmatprep.mubr.bf16.mxu0 0
    %3813 = vmatmul.mubr.bf16.gmra.mrb[0].mxu0 %v3605
    %v3814 = vpop.f32.mrb[0].mxu0
    %v3815 = vadd.f32 0.0, %v3814
    %v3816 = vpop.f32.mrb[0].mxu0
    %v3817 = vadd.f32 0.0, %v3816
    %v3818 = vpop.f32.mrb[0].mxu0
    %v3819 = vadd.f32 0.0, %v3818
    %v3820 = vpop.f32.mrb[0].mxu0
    %v3821 = vadd.f32 0.0, %v3820
    %3822 = vmatprep.mubr.bf16.mxu0 0
    %3823 = vmatmul.mubr.bf16.gmra.mrb[0].mxu0 %v3606
    %v3824 = vpop.f32.mrb[0].mxu0
    %v3825 = vadd.f32 0.0, %v3824
    %v3826 = vpop.f32.mrb[0].mxu0
    %v3827 = vadd.f32 0.0, %v3826
    %v3828 = vpop.f32.mrb[0].mxu0
    %v3829 = vadd.f32 0.0, %v3828
    %v3830 = vpop.f32.mrb[0].mxu0
    %v3831 = vadd.f32 0.0, %v3830
    %3832 = vmatprep.mubr.bf16.mxu0 0
    %3833 = vmatmul.mubr.bf16.gmra.mrb[0].mxu0 %v3607
    %v3834 = vpop.f32.mrb[0].mxu0
    %v3835 = vadd.f32 0.0, %v3834
    %v3836 = vpop.f32.mrb[0].mxu0
    %v3837 = vadd.f32 0.0, %v3836
    %v3838 = vpop.f32.mrb[0].mxu0
    %v3839 = vadd.f32 0.0, %v3838
    %v3840 = vpop.f32.mrb[0].mxu0
    %v3841 = vadd.f32 0.0, %v3840
    %3842 = vmatprep.mubr.bf16.mxu0 0
    %3843 = vmatmul.mubr.bf16.gmra.mrb[0].mxu0 %v3608
    %v3844 = vpop.f32.mrb[0].mxu0
    %v3845 = vadd.f32 0.0, %v3844
    %v3846 = vpop.f32.mrb[0].mxu0
    %v3847 = vadd.f32 0.0, %v3846
    %v3848 = vpop.f32.mrb[0].mxu0
    %v3849 = vadd.f32 0.0, %v3848
    %v3850 = vpop.f32.mrb[0].mxu0
    %v3851 = vadd.f32 0.0, %v3850
    %3852 = vmatprep.mubr.bf16.mxu0 0
    %3853 = vmatmul.mubr.bf16.gmra.mrb[0].mxu0 %v3609
    %v3854 = vpop.f32.mrb[0].mxu0
    %v3855 = vadd.f32 0.0, %v3854
    %v3856 = vpop.f32.mrb[0].mxu0
    %v3857 = vadd.f32 0.0, %v3856
    %v3858 = vpop.f32.mrb[0].mxu0
    %v3859 = vadd.f32 0.0, %v3858
    %v3860 = vpop.f32.mrb[0].mxu0
    %v3861 = vadd.f32 0.0, %v3860
    %3862 = vmatprep.mubr.bf16.mxu0 0
    %3863 = vmatmul.mubr.bf16.gmra.mrb[0].mxu0 %v3610
    %v3864 = vpop.f32.mrb[0].mxu0
    %v3865 = vadd.f32 0.0, %v3864
    %v3866 = vpop.f32.mrb[0].mxu0
    %v3867 = vadd.f32 0.0, %v3866
    %v3868 = vpop.f32.mrb[0].mxu0
    %v3869 = vadd.f32 0.0, %v3868
    %v3870 = vpop.f32.mrb[0].mxu0
    %v3871 = vadd.f32 0.0, %v3870
    %3872 = vmatprep.mubr.bf16.mxu0 0
    %3873 = vmatmul.mubr.bf16.gmra.mrb[0].mxu0 %v3611
    %v3874 = vpop.f32.mrb[0].mxu0
    %v3875 = vadd.f32 0.0, %v3874
    %v3876 = vpop.f32.mrb[0].mxu0
    %v3877 = vadd.f32 0.0, %v3876
    %v3878 = vpop.f32.mrb[0].mxu0
    %v3879 = vadd.f32 0.0, %v3878
    %v3880 = vpop.f32.mrb[0].mxu0
    %v3881 = vadd.f32 0.0, %v3880
    %3882 = vmatprep.mubr.bf16.mxu0 0
    %3883 = vmatmul.mubr.bf16.gmra.mrb[0].mxu0 %v3612
    %v3884 = vpop.f32.mrb[0].mxu0
    %v3885 = vadd.f32 0.0, %v3884
    %v3886 = vpop.f32.mrb[0].mxu0
    %v3887 = vadd.f32 0.0, %v3886
    %v3888 = vpop.f32.mrb[0].mxu0
    %v3889 = vadd.f32 0.0, %v3888
    %v3890 = vpop.f32.mrb[0].mxu0
    %v3891 = vadd.f32 0.0, %v3890
    %3892 = vmatprep.mubr.bf16.mxu0 0
    %3893 = vmatmul.mubr.bf16.gmra.mrb[0].mxu0 %v3613
    %v3894 = vpop.f32.mrb[0].mxu0
    %v3895 = vadd.f32 0.0, %v3894
    %v3896 = vpop.f32.mrb[0].mxu0
    %v3897 = vadd.f32 0.0, %v3896
    %v3898 = vpop.f32.mrb[0].mxu0
    %v3899 = vadd.f32 0.0, %v3898
    %v3900 = vpop.f32.mrb[0].mxu0
    %v3901 = vadd.f32 0.0, %v3900
    %3902 = vdwg.mxu0
    %v3919 = vunpack.c.l.b16 %v2308
    %v3920 = vunpack.c.h.b16 %v2308
    %v3921 = vunpack.c.l.b16 %v2309
    %v3922 = vunpack.c.h.b16 %v2309
    %v3923 = vunpack.c.l.b16 %v2310
    %v3924 = vunpack.c.h.b16 %v2310
    %v3925 = vunpack.c.l.b16 %v2311
    %v3926 = vunpack.c.h.b16 %v2311
    %v3927 = vunpack.c.l.b16 %v2312
    %v3928 = vunpack.c.h.b16 %v2312
    %v3929 = vunpack.c.l.b16 %v2313
    %v3930 = vunpack.c.h.b16 %v2313
    %v3931 = vunpack.c.l.b16 %v2314
    %v3932 = vunpack.c.h.b16 %v2314
    %v3933 = vunpack.c.l.b16 %v2315
    %v3934 = vunpack.c.h.b16 %v2315
    %v3935 = vunpack.c.l.b16 %v2316
    %v3936 = vunpack.c.h.b16 %v2316
    %v3937 = vunpack.c.l.b16 %v2317
    %v3938 = vunpack.c.h.b16 %v2317
    %v3939 = vunpack.c.l.b16 %v2318
    %v3940 = vunpack.c.h.b16 %v2318
    %v3941 = vunpack.c.l.b16 %v2319
    %v3942 = vunpack.c.h.b16 %v2319
    %v3943 = vunpack.c.l.b16 %v2320
    %v3944 = vunpack.c.h.b16 %v2320
    %v3945 = vunpack.c.l.b16 %v2321
    %v3946 = vunpack.c.h.b16 %v2321
    %v3947 = vunpack.c.l.b16 %v2322
    %v3948 = vunpack.c.h.b16 %v2322
    %v3949 = vunpack.c.l.b16 %v2323
    %v3950 = vunpack.c.h.b16 %v2323
    %v3951 = vpack.c.b16 %v3921, %v3919
    %v3952 = vpack.c.b16 %v3922, %v3920
    %v3953 = vpack.c.b16 %v3925, %v3923
    %v3954 = vpack.c.b16 %v3926, %v3924
    %v3955 = vpack.c.b16 %v3929, %v3927
    %v3956 = vpack.c.b16 %v3930, %v3928
    %v3957 = vpack.c.b16 %v3933, %v3931
    %v3958 = vpack.c.b16 %v3934, %v3932
    %v3959 = vpack.c.b16 %v3937, %v3935
    %v3960 = vpack.c.b16 %v3938, %v3936
    %v3961 = vpack.c.b16 %v3941, %v3939
    %v3962 = vpack.c.b16 %v3942, %v3940
    %v3963 = vpack.c.b16 %v3945, %v3943
    %v3964 = vpack.c.b16 %v3946, %v3944
    %v3965 = vpack.c.b16 %v3949, %v3947
    %v3966 = vpack.c.b16 %v3950, %v3948
    %3983 = vmatprep.subr.bf16.mxu0 %v3952
    %3984 = vmatpush1.bf16.msra.mxu0 %v3951
    %3985 = vmatprep.subr.bf16.mxu0 %v3954
    %3986 = vmatpush1.bf16.msra.mxu0 %v3953
    %3987 = vmatprep.subr.bf16.mxu0 %v3956
    %3988 = vmatpush1.bf16.msra.mxu0 %v3955
    %3989 = vmatprep.subr.bf16.mxu0 %v3958
    %3990 = vmatpush1.bf16.msra.mxu0 %v3957
    %3991 = vmatprep.subr.bf16.mxu0 %v3960
    %3992 = vmatpush1.bf16.msra.mxu0 %v3959
    %3993 = vmatprep.subr.bf16.mxu0 %v3962
    %3994 = vmatpush1.bf16.msra.mxu0 %v3961
    %3995 = vmatprep.subr.bf16.mxu0 %v3964
    %3996 = vmatpush1.bf16.msra.mxu0 %v3963
    %3997 = vmatprep.subr.bf16.mxu0 %v3966
    %3998 = vmatpush1.bf16.msra.mxu0 %v3965
    %3999 = vmatprep.subr.bf16.mxu0 0
    %4000 = vmatpush1.bf16.msra.mxu0 0
    %4001 = vmatprep.subr.bf16.mxu0 0
    %4002 = vmatpush1.bf16.msra.mxu0 0
    %4003 = vmatprep.subr.bf16.mxu0 0
    %4004 = vmatpush1.bf16.msra.mxu0 0
    %4005 = vmatprep.subr.bf16.mxu0 0
    %4006 = vmatpush1.bf16.msra.mxu0 0
    %4007 = vmatprep.subr.bf16.mxu0 0
    %4008 = vmatpush1.bf16.msra.mxu0 0
    %4009 = vmatprep.subr.bf16.mxu0 0
    %4010 = vmatpush1.bf16.msra.mxu0 0
    %4011 = vmatprep.subr.bf16.mxu0 0
    %4012 = vmatpush1.bf16.msra.mxu0 0
    %4013 = vmatprep.subr.bf16.mxu0 0
    %4014 = vmatpush1.bf16.msra.mxu0 0
    %4015 = vmatprep.mubr.bf16.mxu0 0
    %4016 = vmatmul.mubr.bf16.gmra.mrb[0].mxu0 %v2292
    %v4017 = vpop.f32.mrb[0].mxu0
    %v4018 = vadd.f32 %v3745, %v4017
    %v4019 = vpop.f32.mrb[0].mxu0
    %v4020 = vadd.f32 %v3747, %v4019
    %v4021 = vpop.f32.mrb[0].mxu0
    %v4022 = vadd.f32 %v3749, %v4021
    %v4023 = vpop.f32.mrb[0].mxu0
    %v4024 = vadd.f32 %v3751, %v4023
    %4025 = vmatprep.mubr.bf16.mxu0 0
    %4026 = vmatmul.mubr.bf16.gmra.mrb[0].mxu0 %v2293
    %v4027 = vpop.f32.mrb[0].mxu0
    %v4028 = vadd.f32 %v3755, %v4027
    %v4029 = vpop.f32.mrb[0].mxu0
    %v4030 = vadd.f32 %v3757, %v4029
    %v4031 = vpop.f32.mrb[0].mxu0
    %v4032 = vadd.f32 %v3759, %v4031
    %v4033 = vpop.f32.mrb[0].mxu0
    %v4034 = vadd.f32 %v3761, %v4033
    %4035 = vmatprep.mubr.bf16.mxu0 0
    %4036 = vmatmul.mubr.bf16.gmra.mrb[0].mxu0 %v2294
    %v4037 = vpop.f32.mrb[0].mxu0
    %v4038 = vadd.f32 %v3765, %v4037
    %v4039 = vpop.f32.mrb[0].mxu0
    %v4040 = vadd.f32 %v3767, %v4039
    %v4041 = vpop.f32.mrb[0].mxu0
    %v4042 = vadd.f32 %v3769, %v4041
    %v4043 = vpop.f32.mrb[0].mxu0
    %v4044 = vadd.f32 %v3771, %v4043
    %4045 = vmatprep.mubr.bf16.mxu0 0
    %4046 = vmatmul.mubr.bf16.gmra.mrb[0].mxu0 %v2295
    %v4047 = vpop.f32.mrb[0].mxu0
    %v4048 = vadd.f32 %v3775, %v4047
    %v4049 = vpop.f32.mrb[0].mxu0
    %v4050 = vadd.f32 %v3777, %v4049
    %v4051 = vpop.f32.mrb[0].mxu0
    %v4052 = vadd.f32 %v3779, %v4051
    %v4053 = vpop.f32.mrb[0].mxu0
    %v4054 = vadd.f32 %v3781, %v4053
    %4055 = vmatprep.mubr.bf16.mxu0 0
    %4056 = vmatmul.mubr.bf16.gmra.mrb[0].mxu0 %v2296
    %v4057 = vpop.f32.mrb[0].mxu0
    %v4058 = vadd.f32 %v3785, %v4057
    %v4059 = vpop.f32.mrb[0].mxu0
    %v4060 = vadd.f32 %v3787, %v4059
    %v4061 = vpop.f32.mrb[0].mxu0
    %v4062 = vadd.f32 %v3789, %v4061
    %v4063 = vpop.f32.mrb[0].mxu0
    %v4064 = vadd.f32 %v3791, %v4063
    %4065 = vmatprep.mubr.bf16.mxu0 0
    %4066 = vmatmul.mubr.bf16.gmra.mrb[0].mxu0 %v2297
    %v4067 = vpop.f32.mrb[0].mxu0
    %v4068 = vadd.f32 %v3795, %v4067
    %v4069 = vpop.f32.mrb[0].mxu0
    %v4070 = vadd.f32 %v3797, %v4069
    %v4071 = vpop.f32.mrb[0].mxu0
    %v4072 = vadd.f32 %v3799, %v4071
    %v4073 = vpop.f32.mrb[0].mxu0
    %v4074 = vadd.f32 %v3801, %v4073
    %4075 = vmatprep.mubr.bf16.mxu0 0
    %4076 = vmatmul.mubr.bf16.gmra.mrb[0].mxu0 %v2298
    %v4077 = vpop.f32.mrb[0].mxu0
    %v4078 = vadd.f32 %v3805, %v4077
    %v4079 = vpop.f32.mrb[0].mxu0
    %v4080 = vadd.f32 %v3807, %v4079
    %v4081 = vpop.f32.mrb[0].mxu0
    %v4082 = vadd.f32 %v3809, %v4081
    %v4083 = vpop.f32.mrb[0].mxu0
    %v4084 = vadd.f32 %v3811, %v4083
    %4085 = vmatprep.mubr.bf16.mxu0 0
    %4086 = vmatmul.mubr.bf16.gmra.mrb[0].mxu0 %v2299
    %v4087 = vpop.f32.mrb[0].mxu0
    %v4088 = vadd.f32 %v3815, %v4087
    %v4089 = vpop.f32.mrb[0].mxu0
    %v4090 = vadd.f32 %v3817, %v4089
    %v4091 = vpop.f32.mrb[0].mxu0
    %v4092 = vadd.f32 %v3819, %v4091
    %v4093 = vpop.f32.mrb[0].mxu0
    %v4094 = vadd.f32 %v3821, %v4093
    %4095 = vmatprep.mubr.bf16.mxu0 0
    %4096 = vmatmul.mubr.bf16.gmra.mrb[0].mxu0 %v2300
    %v4097 = vpop.f32.mrb[0].mxu0
    %v4098 = vadd.f32 %v3825, %v4097
    %v4099 = vpop.f32.mrb[0].mxu0
    %v4100 = vadd.f32 %v3827, %v4099
    %v4101 = vpop.f32.mrb[0].mxu0
    %v4102 = vadd.f32 %v3829, %v4101
    %v4103 = vpop.f32.mrb[0].mxu0
    %v4104 = vadd.f32 %v3831, %v4103
    %4105 = vmatprep.mubr.bf16.mxu0 0
    %4106 = vmatmul.mubr.bf16.gmra.mrb[0].mxu0 %v2301
    %v4107 = vpop.f32.mrb[0].mxu0
    %v4108 = vadd.f32 %v3835, %v4107
    %v4109 = vpop.f32.mrb[0].mxu0
    %v4110 = vadd.f32 %v3837, %v4109
    %v4111 = vpop.f32.mrb[0].mxu0
    %v4112 = vadd.f32 %v3839, %v4111
    %v4113 = vpop.f32.mrb[0].mxu0
    %v4114 = vadd.f32 %v3841, %v4113
    %4115 = vmatprep.mubr.bf16.mxu0 0
    %4116 = vmatmul.mubr.bf16.gmra.mrb[0].mxu0 %v2302
    %v4117 = vpop.f32.mrb[0].mxu0
    %v4118 = vadd.f32 %v3845, %v4117
    %v4119 = vpop.f32.mrb[0].mxu0
    %v4120 = vadd.f32 %v3847, %v4119
    %v4121 = vpop.f32.mrb[0].mxu0
    %v4122 = vadd.f32 %v3849, %v4121
    %v4123 = vpop.f32.mrb[0].mxu0
    %v4124 = vadd.f32 %v3851, %v4123
    %4125 = vmatprep.mubr.bf16.mxu0 0
    %4126 = vmatmul.mubr.bf16.gmra.mrb[0].mxu0 %v2303
    %v4127 = vpop.f32.mrb[0].mxu0
    %v4128 = vadd.f32 %v3855, %v4127
    %v4129 = vpop.f32.mrb[0].mxu0
    %v4130 = vadd.f32 %v3857, %v4129
    %v4131 = vpop.f32.mrb[0].mxu0
    %v4132 = vadd.f32 %v3859, %v4131
    %v4133 = vpop.f32.mrb[0].mxu0
    %v4134 = vadd.f32 %v3861, %v4133
    %4135 = vmatprep.mubr.bf16.mxu0 0
    %4136 = vmatmul.mubr.bf16.gmra.mrb[0].mxu0 %v2304
    %v4137 = vpop.f32.mrb[0].mxu0
    %v4138 = vadd.f32 %v3865, %v4137
    %v4139 = vpop.f32.mrb[0].mxu0
    %v4140 = vadd.f32 %v3867, %v4139
    %v4141 = vpop.f32.mrb[0].mxu0
    %v4142 = vadd.f32 %v3869, %v4141
    %v4143 = vpop.f32.mrb[0].mxu0
    %v4144 = vadd.f32 %v3871, %v4143
    %4145 = vmatprep.mubr.bf16.mxu0 0
    %4146 = vmatmul.mubr.bf16.gmra.mrb[0].mxu0 %v2305
    %v4147 = vpop.f32.mrb[0].mxu0
    %v4148 = vadd.f32 %v3875, %v4147
    %v4149 = vpop.f32.mrb[0].mxu0
    %v4150 = vadd.f32 %v3877, %v4149
    %v4151 = vpop.f32.mrb[0].mxu0
    %v4152 = vadd.f32 %v3879, %v4151
    %v4153 = vpop.f32.mrb[0].mxu0
    %v4154 = vadd.f32 %v3881, %v4153
    %4155 = vmatprep.mubr.bf16.mxu0 0
    %4156 = vmatmul.mubr.bf16.gmra.mrb[0].mxu0 %v2306
    %v4157 = vpop.f32.mrb[0].mxu0
    %v4158 = vadd.f32 %v3885, %v4157
    %v4159 = vpop.f32.mrb[0].mxu0
    %v4160 = vadd.f32 %v3887, %v4159
    %v4161 = vpop.f32.mrb[0].mxu0
    %v4162 = vadd.f32 %v3889, %v4161
    %v4163 = vpop.f32.mrb[0].mxu0
    %v4164 = vadd.f32 %v3891, %v4163
    %4165 = vmatprep.mubr.bf16.mxu0 0
    %4166 = vmatmul.mubr.bf16.gmra.mrb[0].mxu0 %v2307
    %v4167 = vpop.f32.mrb[0].mxu0
    %v4168 = vadd.f32 %v3895, %v4167
    %v4169 = vpop.f32.mrb[0].mxu0
    %v4170 = vadd.f32 %v3897, %v4169
    %v4171 = vpop.f32.mrb[0].mxu0
    %v4172 = vadd.f32 %v3899, %v4171
    %v4173 = vpop.f32.mrb[0].mxu0
    %v4174 = vadd.f32 %v3901, %v4173
    %4175 = vdwg.mxu0
    %v4176 = vld [vmem:[%s8] sm:$0x3]
    %v4178 = vlaneseq
    %v4179 = vshrl.u32 %v4178, 7
    %v4180 = vsub.s32 0, %v4179
    %v4181 = vrot.slane %v4176, %v4180
    %v4182 = vlaneseq
    %v4183 = vshrl.u32 %v4182, 7
    %v4184 = vsub.s32 1, %v4183
    %v4185 = vrot.slane %v4176, %v4184
    %v4188 = vadd.f32 %v4018, %v4181
    %v4189 = vadd.f32 %v4020, %v4185
    %v4190 = vadd.f32 %v4022, %v4181
    %v4191 = vadd.f32 %v4024, %v4185
    %v4192 = vadd.f32 %v4028, %v4181
    %v4193 = vadd.f32 %v4030, %v4185
    %v4194 = vadd.f32 %v4032, %v4181
    %v4195 = vadd.f32 %v4034, %v4185
    %v4196 = vadd.f32 %v4038, %v4181
    %v4197 = vadd.f32 %v4040, %v4185
    %v4198 = vadd.f32 %v4042, %v4181
    %v4199 = vadd.f32 %v4044, %v4185
    %v4200 = vadd.f32 %v4048, %v4181
    %v4201 = vadd.f32 %v4050, %v4185
    %v4202 = vadd.f32 %v4052, %v4181
    %v4203 = vadd.f32 %v4054, %v4185
    %v4204 = vadd.f32 %v4058, %v4181
    %v4205 = vadd.f32 %v4060, %v4185
    %v4206 = vadd.f32 %v4062, %v4181
    %v4207 = vadd.f32 %v4064, %v4185
    %v4208 = vadd.f32 %v4068, %v4181
    %v4209 = vadd.f32 %v4070, %v4185
    %v4210 = vadd.f32 %v4072, %v4181
    %v4211 = vadd.f32 %v4074, %v4185
    %v4212 = vadd.f32 %v4078, %v4181
    %v4213 = vadd.f32 %v4080, %v4185
    %v4214 = vadd.f32 %v4082, %v4181
    %v4215 = vadd.f32 %v4084, %v4185
    %v4216 = vadd.f32 %v4088, %v4181
    %v4217 = vadd.f32 %v4090, %v4185
    %v4218 = vadd.f32 %v4092, %v4181
    %v4219 = vadd.f32 %v4094, %v4185
    %v4220 = vadd.f32 %v4098, %v4181
    %v4221 = vadd.f32 %v4100, %v4185
    %v4222 = vadd.f32 %v4102, %v4181
    %v4223 = vadd.f32 %v4104, %v4185
    %v4224 = vadd.f32 %v4108, %v4181
    %v4225 = vadd.f32 %v4110, %v4185
    %v4226 = vadd.f32 %v4112, %v4181
    %v4227 = vadd.f32 %v4114, %v4185
    %v4228 = vadd.f32 %v4118, %v4181
    %v4229 = vadd.f32 %v4120, %v4185
    %v4230 = vadd.f32 %v4122, %v4181
    %v4231 = vadd.f32 %v4124, %v4185
    %v4232 = vadd.f32 %v4128, %v4181
    %v4233 = vadd.f32 %v4130, %v4185
    %v4234 = vadd.f32 %v4132, %v4181
    %v4235 = vadd.f32 %v4134, %v4185
    %v4236 = vadd.f32 %v4138, %v4181
    %v4237 = vadd.f32 %v4140, %v4185
    %v4238 = vadd.f32 %v4142, %v4181
    %v4239 = vadd.f32 %v4144, %v4185
    %v4240 = vadd.f32 %v4148, %v4181
    %v4241 = vadd.f32 %v4150, %v4185
    %v4242 = vadd.f32 %v4152, %v4181
    %v4243 = vadd.f32 %v4154, %v4185
    %v4244 = vadd.f32 %v4158, %v4181
    %v4245 = vadd.f32 %v4160, %v4185
    %v4246 = vadd.f32 %v4162, %v4181
    %v4247 = vadd.f32 %v4164, %v4185
    %v4248 = vadd.f32 %v4168, %v4181
    %v4249 = vadd.f32 %v4170, %v4185
    %v4250 = vadd.f32 %v4172, %v4181
    %v4251 = vadd.f32 %v4174, %v4185
    %4252 = vst [vmem:[#allocation11] sm:$0xff] %v4188
    %4253 = vst [vmem:[#allocation11 + $0x8] sm:$0xff] %v4189
    %4254 = vst [vmem:[#allocation11 + $0x10] sm:$0xff] %v4190
    %4255 = vst [vmem:[#allocation11 + $0x18] sm:$0xff] %v4191
    %4256 = vst [vmem:[#allocation11 + $0x20] sm:$0xff] %v4192
    %4257 = vst [vmem:[#allocation11 + $0x28] sm:$0xff] %v4193
    %4258 = vst [vmem:[#allocation11 + $0x30] sm:$0xff] %v4194
    %4259 = vst [vmem:[#allocation11 + $0x38] sm:$0xff] %v4195
    %4260 = vst [vmem:[#allocation11 + $0x40] sm:$0xff] %v4196
    %4261 = vst [vmem:[#allocation11 + $0x48] sm:$0xff] %v4197
    %4262 = vst [vmem:[#allocation11 + $0x50] sm:$0xff] %v4198
    %4263 = vst [vmem:[#allocation11 + $0x58] sm:$0xff] %v4199
    %4264 = vst [vmem:[#allocation11 + $0x60] sm:$0xff] %v4200
    %4265 = vst [vmem:[#allocation11 + $0x68] sm:$0xff] %v4201
    %4266 = vst [vmem:[#allocation11 + $0x70] sm:$0xff] %v4202
    %4267 = vst [vmem:[#allocation11 + $0x78] sm:$0xff] %v4203
    %4268 = vst [vmem:[#allocation11 + $0x80] sm:$0xff] %v4204
    %4269 = vst [vmem:[#allocation11 + $0x88] sm:$0xff] %v4205
    %4270 = vst [vmem:[#allocation11 + $0x90] sm:$0xff] %v4206
    %4271 = vst [vmem:[#allocation11 + $0x98] sm:$0xff] %v4207
    %4272 = vst [vmem:[#allocation11 + $0xa0] sm:$0xff] %v4208
    %4273 = vst [vmem:[#allocation11 + $0xa8] sm:$0xff] %v4209
    %4274 = vst [vmem:[#allocation11 + $0xb0] sm:$0xff] %v4210
    %4275 = vst [vmem:[#allocation11 + $0xb8] sm:$0xff] %v4211
    %4276 = vst [vmem:[#allocation11 + $0xc0] sm:$0xff] %v4212
    %4277 = vst [vmem:[#allocation11 + $0xc8] sm:$0xff] %v4213
    %4278 = vst [vmem:[#allocation11 + $0xd0] sm:$0xff] %v4214
    %4279 = vst [vmem:[#allocation11 + $0xd8] sm:$0xff] %v4215
    %4280 = vst [vmem:[#allocation11 + $0xe0] sm:$0xff] %v4216
    %4281 = vst [vmem:[#allocation11 + $0xe8] sm:$0xff] %v4217
    %4282 = vst [vmem:[#allocation11 + $0xf0] sm:$0xff] %v4218
    %4283 = vst [vmem:[#allocation11 + $0xf8] sm:$0xff] %v4219
    %4284 = vst [vmem:[#allocation11 + $0x100] sm:$0xff] %v4220
    %4285 = vst [vmem:[#allocation11 + $0x108] sm:$0xff] %v4221
    %4286 = vst [vmem:[#allocation11 + $0x110] sm:$0xff] %v4222
    %4287 = vst [vmem:[#allocation11 + $0x118] sm:$0xff] %v4223
    %4288 = vst [vmem:[#allocation11 + $0x120] sm:$0xff] %v4224
    %4289 = vst [vmem:[#allocation11 + $0x128] sm:$0xff] %v4225
    %4290 = vst [vmem:[#allocation11 + $0x130] sm:$0xff] %v4226
    %4291 = vst [vmem:[#allocation11 + $0x138] sm:$0xff] %v4227
    %4292 = vst [vmem:[#allocation11 + $0x140] sm:$0xff] %v4228
    %4293 = vst [vmem:[#allocation11 + $0x148] sm:$0xff] %v4229
    %4294 = vst [vmem:[#allocation11 + $0x150] sm:$0xff] %v4230
    %4295 = vst [vmem:[#allocation11 + $0x158] sm:$0xff] %v4231
    %4296 = vst [vmem:[#allocation11 + $0x160] sm:$0xff] %v4232
    %4297 = vst [vmem:[#allocation11 + $0x168] sm:$0xff] %v4233
    %4298 = vst [vmem:[#allocation11 + $0x170] sm:$0xff] %v4234
    %4299 = vst [vmem:[#allocation11 + $0x178] sm:$0xff] %v4235
    %4300 = vst [vmem:[#allocation11 + $0x180] sm:$0xff] %v4236
    %4301 = vst [vmem:[#allocation11 + $0x188] sm:$0xff] %v4237
    %4302 = vst [vmem:[#allocation11 + $0x190] sm:$0xff] %v4238
    %4303 = vst [vmem:[#allocation11 + $0x198] sm:$0xff] %v4239
    %4304 = vst [vmem:[#allocation11 + $0x1a0] sm:$0xff] %v4240
    %4305 = vst [vmem:[#allocation11 + $0x1a8] sm:$0xff] %v4241
    %4306 = vst [vmem:[#allocation11 + $0x1b0] sm:$0xff] %v4242
    %4307 = vst [vmem:[#allocation11 + $0x1b8] sm:$0xff] %v4243
    %4308 = vst [vmem:[#allocation11 + $0x1c0] sm:$0xff] %v4244
    %4309 = vst [vmem:[#allocation11 + $0x1c8] sm:$0xff] %v4245
    %4310 = vst [vmem:[#allocation11 + $0x1d0] sm:$0xff] %v4246
    %4311 = vst [vmem:[#allocation11 + $0x1d8] sm:$0xff] %v4247
    %4312 = vst [vmem:[#allocation11 + $0x1e0] sm:$0xff] %v4248
    %4313 = vst [vmem:[#allocation11 + $0x1e8] sm:$0xff] %v4249
    %4314 = vst [vmem:[#allocation11 + $0x1f0] sm:$0xff] %v4250
    %4315 = vst [vmem:[#allocation11 + $0x1f8] sm:$0xff] %v4251
    // Predicated region
    $region58: #{tpu_custom_call.1} parent=1 // pred_check
      _
    $region59: #{tpu_custom_call.1} parent=1 // pred_check_branch
      %4317 = sbr.rel (0) target = $region61
    $region60: #{tpu_custom_call.1} parent=1 // pred_region
      %s4319 = ssub.s32 8192, 8192
      %4320 = vsyncadd [#allocation4], %s4319
      %s4321 = sshll.u32 [#allocation11], 4
      %s4322 = int_to_ptr.vmem [resolvable:$true] %s4321
      %4327 = dma.vmem_to_hbm [thread:$0]  %s4322, 8192, %s9, [#allocation4], 256, 256, 16
    $region61: #{tpu_custom_call.1} parent=1 // pred_fallthru
      _
    // Predicated region
    $region62: #{tpu_custom_call.1} parent=1 // pred_check
      _
    $region63: #{tpu_custom_call.1} parent=1 // pred_check_branch
      %4329 = sbr.rel (0) target = $region65
    $region64: #{tpu_custom_call.1} parent=1 // pred_region
      %4330 = dma.done [#allocation4], 8192
    $region65: #{tpu_custom_call.1} parent=1 // pred_fallthru
      _
    %4331 = vsyncpa [#allocation3], 1
    %4332 = vsyncpa [#allocation6], 1
    %4333 = vsyncpa [#allocation9], 1
    %4334 = vsyncpa [#allocation4], 1

</llo_original>
